<compile_context>
chip_gen: v7x
topology: tpu7x:2x2x1
jax: 0.10.0
libtpu: 0.0.40
codegen_flags: <defaults>
</compile_context>

<pallas_src>
import jax
import jax.numpy as jnp
from jax.experimental import pallas as pl
from jax.experimental.pallas import tpu as pltpu

# Layer widths (Linear -> ReLU -> BatchNorm1d blocks)
SHARED_DIMS = [60, 128, 256, 128, 64, 32]   # 5 blocks (shared_features)
HEAD_DIMS = [32, 128, 64, 16, 1]            # 4 blocks (classification_head)
N_SHARED = len(SHARED_DIMS) - 1
N_HEAD = len(HEAD_DIMS) - 1
N_BLOCKS = N_SHARED + N_HEAD                # 9
FPAD = 256                                  # padded feature width (2 * 128 lanes)
BN_EPS = 1e-5


def _siamese_kernel(xy_ref, w_ref, p_ref, out_ref):
    """xy_ref:[2B,FPAD] f32, w_ref:[9,FPAD,FPAD] bf16, p_ref:[9,3,FPAD] f32,
    out_ref:[B,FPAD] f32 (only column 0 is meaningful)."""
    two_b, _ = xy_ref.shape
    b = two_b // 2

    def block(h, idx, n_branches):
        w = w_ref[idx]                       # [FPAD, FPAD] bf16
        p = p_ref[idx]                       # [3, FPAD]    f32
        bias, gamma, beta = p[0:1, :], p[1:2, :], p[2:3, :]

        # Linear on the MXU (bf16 operands, f32 accumulate) + bias + ReLU.
        h = jnp.dot(h.astype(w.dtype), w, preferred_element_type=jnp.float32)
        h = jnp.maximum(h + bias, 0.0)

        # Train-mode BatchNorm1d, folded math; stats per branch half.
        def bn(hh):
            mu = jnp.mean(hh, axis=0, keepdims=True)
            var = jnp.mean(hh * hh, axis=0, keepdims=True) - mu * mu
            var = jnp.maximum(var, 0.0)      # guard tiny negative from folding
            scale = gamma * jax.lax.rsqrt(var + BN_EPS)
            shift = beta - mu * scale
            return hh * scale + shift

        if n_branches == 1:
            return bn(h)
        # Stacked shared trunk: per-branch statistics (rows [0:B] and [B:2B]).
        return jnp.concatenate([bn(h[:b, :]), bn(h[b:, :])], axis=0)

    # shared_features on the stacked [2B, FPAD] activation (weights pushed once)
    h = xy_ref[...]
    for i in range(N_SHARED):
        h = block(h, i, 2)

    # fuse branches + classification_head
    z = h[:b, :] * h[b:, :]
    for j in range(N_HEAD):
        z = block(z, N_SHARED + j, 1)

    out_ref[...] = z


def init_params(key):
    """Deterministic synthetic parameters (shapes match the torch module)."""
    params = []
    dims_pairs = list(zip(SHARED_DIMS[:-1], SHARED_DIMS[1:])) + \
                 list(zip(HEAD_DIMS[:-1], HEAD_DIMS[1:]))
    for (din, dout) in dims_pairs:
        key, kw, kb, kg, kbt = jax.random.split(key, 5)
        scale = 1.0 / jnp.sqrt(jnp.float32(din))
        w = jax.random.uniform(kw, (din, dout), jnp.float32, -scale, scale)
        b = jax.random.uniform(kb, (dout,), jnp.float32, -scale, scale)
        gamma = 1.0 + 0.1 * jax.random.normal(kg, (dout,), jnp.float32)
        beta = 0.1 * jax.random.normal(kbt, (dout,), jnp.float32)
        params.append((w, b, gamma, beta))
    return params


def pack_params(params):
    """Pack per-layer params into two zero-padded slabs (one DMA each)."""
    w_slab = jnp.zeros((N_BLOCKS, FPAD, FPAD), jnp.float32)
    p_slab = jnp.zeros((N_BLOCKS, 3, FPAD), jnp.float32)
    for i, (w, b, g, bt) in enumerate(params):
        din, dout = w.shape
        w_slab = w_slab.at[i, :din, :dout].set(w)
        p_slab = p_slab.at[i, 0, :dout].set(b)
        p_slab = p_slab.at[i, 1, :dout].set(g)
        p_slab = p_slab.at[i, 2, :dout].set(bt)
    # bf16 weights: one MXU pass per push, half the weight DMA/VMEM bytes.
    return w_slab.astype(jnp.bfloat16), p_slab


@jax.jit
def siamese_forward(x, y, w_slab, p_slab):
    batch = x.shape[0]
    x2 = x.reshape(batch, -1).astype(jnp.float32)   # flatten(start_dim=1)
    y2 = y.reshape(batch, -1).astype(jnp.float32)
    assert x2.shape[1] == SHARED_DIMS[0], "flattened feature dim must be 60"

    # Stack branches and zero-pad features to the lane-dense padded width.
    xy = jnp.concatenate([x2, y2], axis=0)                       # [2B, 60]
    xy = jnp.pad(xy, ((0, 0), (0, FPAD - xy.shape[1])))          # [2B, 256]

    vmem = pl.BlockSpec(memory_space=pltpu.MemorySpace.VMEM)
    out = pl.pallas_call(
        _siamese_kernel,
        out_shape=jax.ShapeDtypeStruct((batch, FPAD), jnp.float32),
        in_specs=[vmem, vmem, vmem],
        out_specs=vmem,
    )(xy, w_slab, p_slab)
    return out[:, :1]                                            # [B, 1]


def _reference_forward(x, y, params):
    """Pure-JAX reference mirroring the kernel's math (bf16 MXU operands,
    f32 BN/ReLU, classic BN variance formula)."""
    def block(h, w, b, g, bt):
        h = jnp.dot(h.astype(jnp.bfloat16), w.astype(jnp.bfloat16),
                    preferred_element_type=jnp.float32) + b
        h = jnp.maximum(h, 0.0)
        mu = jnp.mean(h, axis=0, keepdims=True)
        var = jnp.mean((h - mu) ** 2, axis=0, keepdims=True)
        return (h - mu) * jax.lax.rsqrt(var + BN_EPS) * g + bt

    B = x.shape[0]
    xv = x.reshape(B, -1).astype(jnp.float32)
    yv = y.reshape(B, -1).astype(jnp.float32)
    for i in range(N_SHARED):
        xv = block(xv, *params[i])
    for i in range(N_SHARED):
        yv = block(yv, *params[i])
    z = xv * yv
    for j in range(N_HEAD):
        z = block(z, *params[N_SHARED + j])
    return z


if __name__ == "__main__":
    key = jax.random.PRNGKey(0)
    k_params, kx, ky = jax.random.split(key, 3)

    params = init_params(k_params)
    w_slab, p_slab = pack_params(params)

    # Small inputs; flatten(start_dim=1) -> [B, 60] as the module requires.
    B = 8
    x = jax.random.normal(kx, (B, 4, 15), jnp.float32)
    y = jax.random.normal(ky, (B, 4, 15), jnp.float32)

    out = jax.block_until_ready(siamese_forward(x, y, w_slab, p_slab))
    ref = _reference_forward(x, y, params)

    assert out.shape == (B, 1)
    assert jnp.allclose(out, ref, atol=2e-3, rtol=2e-3), "mismatch vs reference"

    print("KERNEL_OK")
</pallas_src>

<mosaic_0001>
module attributes {stable_mosaic.version = 11 : i64} {
  func.func @_siamese_kernel(%arg0: memref<16x256xf32, #tpu.memory_space<vmem>>, %arg1: memref<9x256x256xbf16, #tpu.memory_space<vmem>>, %arg2: memref<9x3x256xf32, #tpu.memory_space<vmem>>, %arg3: memref<8x256xf32, #tpu.memory_space<vmem>>) attributes {dimension_semantics = [], scalar_prefetch = 0 : i64, scratch_operands = 0 : i64, tpu.core_type = #tpu.core_type<tc>} {
    %c0 = arith.constant 0 : index
    %c0_0 = arith.constant 0 : index
    %0 = vector.load %arg0[%c0, %c0_0] : memref<16x256xf32, #tpu.memory_space<vmem>>, vector<16x256xf32>
    %c0_1 = arith.constant 0 : index
    %c0_2 = arith.constant 0 : index
    %c0_3 = arith.constant 0 : index
    %1 = vector.load %arg1[%c0_1, %c0_2, %c0_3] : memref<9x256x256xbf16, #tpu.memory_space<vmem>>, vector<1x256x256xbf16>
    %2 = vector.shape_cast %1 : vector<1x256x256xbf16> to vector<256x256xbf16>
    %c0_4 = arith.constant 0 : index
    %c0_5 = arith.constant 0 : index
    %c0_6 = arith.constant 0 : index
    %3 = vector.load %arg2[%c0_4, %c0_5, %c0_6] : memref<9x3x256xf32, #tpu.memory_space<vmem>>, vector<1x3x256xf32>
    %4 = vector.shape_cast %3 : vector<1x3x256xf32> to vector<3x256xf32>
    %5 = vector.extract_strided_slice %4 {offsets = [0, 0], sizes = [1, 256], strides = [1, 1]} : vector<3x256xf32> to vector<1x256xf32>
    %6 = vector.extract_strided_slice %4 {offsets = [1, 0], sizes = [1, 256], strides = [1, 1]} : vector<3x256xf32> to vector<1x256xf32>
    %7 = vector.extract_strided_slice %4 {offsets = [2, 0], sizes = [1, 256], strides = [1, 1]} : vector<3x256xf32> to vector<1x256xf32>
    %8 = arith.truncf %0 : vector<16x256xf32> to vector<16x256xbf16>
    %cst = arith.constant dense<0.000000e+00> : vector<16x256xf32>
    %9 = tpu.matmul %8, %2, %cst {dimension_numbers = #tpu.dot_dimension_numbers<[1], [0], [0], [1], [0, 0, 1, 1], [], []>} : vector<16x256xbf16>, vector<256x256xbf16>, vector<16x256xf32> -> vector<16x256xf32>
    %10 = vector.broadcast %5 : vector<1x256xf32> to vector<16x256xf32>
    %11 = arith.addf %9, %10 : vector<16x256xf32>
    %cst_7 = arith.constant 0.000000e+00 : f32
    %12 = vector.broadcast %cst_7 : f32 to vector<16x256xf32>
    %13 = arith.maximumf %11, %12 : vector<16x256xf32>
    %14 = vector.extract_strided_slice %13 {offsets = [0, 0], sizes = [8, 256], strides = [1, 1]} : vector<16x256xf32> to vector<8x256xf32>
    %cst_8 = arith.constant dense<0.000000e+00> : vector<256xf32>
    %15 = vector.multi_reduction <add>, %14, %cst_8 [0] : vector<8x256xf32> to vector<256xf32>
    %16 = vector.shape_cast %15 : vector<256xf32> to vector<1x256xf32>
    %cst_9 = arith.constant 8.000000e+00 : f32
    %17 = vector.broadcast %cst_9 : f32 to vector<1x256xf32>
    %18 = arith.divf %16, %17 : vector<1x256xf32>
    %19 = arith.mulf %14, %14 : vector<8x256xf32>
    %cst_10 = arith.constant dense<0.000000e+00> : vector<256xf32>
    %20 = vector.multi_reduction <add>, %19, %cst_10 [0] : vector<8x256xf32> to vector<256xf32>
    %21 = vector.shape_cast %20 : vector<256xf32> to vector<1x256xf32>
    %cst_11 = arith.constant 8.000000e+00 : f32
    %22 = vector.broadcast %cst_11 : f32 to vector<1x256xf32>
    %23 = arith.divf %21, %22 : vector<1x256xf32>
    %24 = arith.mulf %18, %18 : vector<1x256xf32>
    %25 = arith.subf %23, %24 : vector<1x256xf32>
    %cst_12 = arith.constant 0.000000e+00 : f32
    %26 = vector.broadcast %cst_12 : f32 to vector<1x256xf32>
    %27 = arith.maximumf %25, %26 : vector<1x256xf32>
    %cst_13 = arith.constant 9.99999974E-6 : f32
    %28 = vector.broadcast %cst_13 : f32 to vector<1x256xf32>
    %29 = arith.addf %27, %28 : vector<1x256xf32>
    %30 = math.rsqrt %29 : vector<1x256xf32>
    %31 = arith.mulf %6, %30 : vector<1x256xf32>
    %32 = arith.mulf %18, %31 : vector<1x256xf32>
    %33 = arith.subf %7, %32 : vector<1x256xf32>
    %34 = vector.broadcast %31 : vector<1x256xf32> to vector<8x256xf32>
    %35 = arith.mulf %14, %34 : vector<8x256xf32>
    %36 = vector.broadcast %33 : vector<1x256xf32> to vector<8x256xf32>
    %37 = arith.addf %35, %36 : vector<8x256xf32>
    %38 = vector.extract_strided_slice %13 {offsets = [8, 0], sizes = [8, 256], strides = [1, 1]} : vector<16x256xf32> to vector<8x256xf32>
    %cst_14 = arith.constant dense<0.000000e+00> : vector<256xf32>
    %39 = vector.multi_reduction <add>, %38, %cst_14 [0] : vector<8x256xf32> to vector<256xf32>
    %40 = vector.shape_cast %39 : vector<256xf32> to vector<1x256xf32>
    %cst_15 = arith.constant 8.000000e+00 : f32
    %41 = vector.broadcast %cst_15 : f32 to vector<1x256xf32>
    %42 = arith.divf %40, %41 : vector<1x256xf32>
    %43 = arith.mulf %38, %38 : vector<8x256xf32>
    %cst_16 = arith.constant dense<0.000000e+00> : vector<256xf32>
    %44 = vector.multi_reduction <add>, %43, %cst_16 [0] : vector<8x256xf32> to vector<256xf32>
    %45 = vector.shape_cast %44 : vector<256xf32> to vector<1x256xf32>
    %cst_17 = arith.constant 8.000000e+00 : f32
    %46 = vector.broadcast %cst_17 : f32 to vector<1x256xf32>
    %47 = arith.divf %45, %46 : vector<1x256xf32>
    %48 = arith.mulf %42, %42 : vector<1x256xf32>
    %49 = arith.subf %47, %48 : vector<1x256xf32>
    %cst_18 = arith.constant 0.000000e+00 : f32
    %50 = vector.broadcast %cst_18 : f32 to vector<1x256xf32>
    %51 = arith.maximumf %49, %50 : vector<1x256xf32>
    %cst_19 = arith.constant 9.99999974E-6 : f32
    %52 = vector.broadcast %cst_19 : f32 to vector<1x256xf32>
    %53 = arith.addf %51, %52 : vector<1x256xf32>
    %54 = math.rsqrt %53 : vector<1x256xf32>
    %55 = arith.mulf %6, %54 : vector<1x256xf32>
    %56 = arith.mulf %42, %55 : vector<1x256xf32>
    %57 = arith.subf %7, %56 : vector<1x256xf32>
    %58 = vector.broadcast %55 : vector<1x256xf32> to vector<8x256xf32>
    %59 = arith.mulf %38, %58 : vector<8x256xf32>
    %60 = vector.broadcast %57 : vector<1x256xf32> to vector<8x256xf32>
    %61 = arith.addf %59, %60 : vector<8x256xf32>
    %62 = tpu.concatenate %37, %61 in 0 : vector<8x256xf32>, vector<8x256xf32> -> vector<16x256xf32>
    %c1 = arith.constant 1 : index
    %c0_20 = arith.constant 0 : index
    %c0_21 = arith.constant 0 : index
    %63 = vector.load %arg1[%c1, %c0_20, %c0_21] : memref<9x256x256xbf16, #tpu.memory_space<vmem>>, vector<1x256x256xbf16>
    %64 = vector.shape_cast %63 : vector<1x256x256xbf16> to vector<256x256xbf16>
    %c1_22 = arith.constant 1 : index
    %c0_23 = arith.constant 0 : index
    %c0_24 = arith.constant 0 : index
    %65 = vector.load %arg2[%c1_22, %c0_23, %c0_24] : memref<9x3x256xf32, #tpu.memory_space<vmem>>, vector<1x3x256xf32>
    %66 = vector.shape_cast %65 : vector<1x3x256xf32> to vector<3x256xf32>
    %67 = vector.extract_strided_slice %66 {offsets = [0, 0], sizes = [1, 256], strides = [1, 1]} : vector<3x256xf32> to vector<1x256xf32>
    %68 = vector.extract_strided_slice %66 {offsets = [1, 0], sizes = [1, 256], strides = [1, 1]} : vector<3x256xf32> to vector<1x256xf32>
    %69 = vector.extract_strided_slice %66 {offsets = [2, 0], sizes = [1, 256], strides = [1, 1]} : vector<3x256xf32> to vector<1x256xf32>
    %70 = arith.truncf %62 : vector<16x256xf32> to vector<16x256xbf16>
    %cst_25 = arith.constant dense<0.000000e+00> : vector<16x256xf32>
    %71 = tpu.matmul %70, %64, %cst_25 {dimension_numbers = #tpu.dot_dimension_numbers<[1], [0], [0], [1], [0, 0, 1, 1], [], []>} : vector<16x256xbf16>, vector<256x256xbf16>, vector<16x256xf32> -> vector<16x256xf32>
    %72 = vector.broadcast %67 : vector<1x256xf32> to vector<16x256xf32>
    %73 = arith.addf %71, %72 : vector<16x256xf32>
    %cst_26 = arith.constant 0.000000e+00 : f32
    %74 = vector.broadcast %cst_26 : f32 to vector<16x256xf32>
    %75 = arith.maximumf %73, %74 : vector<16x256xf32>
    %76 = vector.extract_strided_slice %75 {offsets = [0, 0], sizes = [8, 256], strides = [1, 1]} : vector<16x256xf32> to vector<8x256xf32>
    %cst_27 = arith.constant dense<0.000000e+00> : vector<256xf32>
    %77 = vector.multi_reduction <add>, %76, %cst_27 [0] : vector<8x256xf32> to vector<256xf32>
    %78 = vector.shape_cast %77 : vector<256xf32> to vector<1x256xf32>
    %cst_28 = arith.constant 8.000000e+00 : f32
    %79 = vector.broadcast %cst_28 : f32 to vector<1x256xf32>
    %80 = arith.divf %78, %79 : vector<1x256xf32>
    %81 = arith.mulf %76, %76 : vector<8x256xf32>
    %cst_29 = arith.constant dense<0.000000e+00> : vector<256xf32>
    %82 = vector.multi_reduction <add>, %81, %cst_29 [0] : vector<8x256xf32> to vector<256xf32>
    %83 = vector.shape_cast %82 : vector<256xf32> to vector<1x256xf32>
    %cst_30 = arith.constant 8.000000e+00 : f32
    %84 = vector.broadcast %cst_30 : f32 to vector<1x256xf32>
    %85 = arith.divf %83, %84 : vector<1x256xf32>
    %86 = arith.mulf %80, %80 : vector<1x256xf32>
    %87 = arith.subf %85, %86 : vector<1x256xf32>
    %cst_31 = arith.constant 0.000000e+00 : f32
    %88 = vector.broadcast %cst_31 : f32 to vector<1x256xf32>
    %89 = arith.maximumf %87, %88 : vector<1x256xf32>
    %cst_32 = arith.constant 9.99999974E-6 : f32
    %90 = vector.broadcast %cst_32 : f32 to vector<1x256xf32>
    %91 = arith.addf %89, %90 : vector<1x256xf32>
    %92 = math.rsqrt %91 : vector<1x256xf32>
    %93 = arith.mulf %68, %92 : vector<1x256xf32>
    %94 = arith.mulf %80, %93 : vector<1x256xf32>
    %95 = arith.subf %69, %94 : vector<1x256xf32>
    %96 = vector.broadcast %93 : vector<1x256xf32> to vector<8x256xf32>
    %97 = arith.mulf %76, %96 : vector<8x256xf32>
    %98 = vector.broadcast %95 : vector<1x256xf32> to vector<8x256xf32>
    %99 = arith.addf %97, %98 : vector<8x256xf32>
    %100 = vector.extract_strided_slice %75 {offsets = [8, 0], sizes = [8, 256], strides = [1, 1]} : vector<16x256xf32> to vector<8x256xf32>
    %cst_33 = arith.constant dense<0.000000e+00> : vector<256xf32>
    %101 = vector.multi_reduction <add>, %100, %cst_33 [0] : vector<8x256xf32> to vector<256xf32>
    %102 = vector.shape_cast %101 : vector<256xf32> to vector<1x256xf32>
    %cst_34 = arith.constant 8.000000e+00 : f32
    %103 = vector.broadcast %cst_34 : f32 to vector<1x256xf32>
    %104 = arith.divf %102, %103 : vector<1x256xf32>
    %105 = arith.mulf %100, %100 : vector<8x256xf32>
    %cst_35 = arith.constant dense<0.000000e+00> : vector<256xf32>
    %106 = vector.multi_reduction <add>, %105, %cst_35 [0] : vector<8x256xf32> to vector<256xf32>
    %107 = vector.shape_cast %106 : vector<256xf32> to vector<1x256xf32>
    %cst_36 = arith.constant 8.000000e+00 : f32
    %108 = vector.broadcast %cst_36 : f32 to vector<1x256xf32>
    %109 = arith.divf %107, %108 : vector<1x256xf32>
    %110 = arith.mulf %104, %104 : vector<1x256xf32>
    %111 = arith.subf %109, %110 : vector<1x256xf32>
    %cst_37 = arith.constant 0.000000e+00 : f32
    %112 = vector.broadcast %cst_37 : f32 to vector<1x256xf32>
    %113 = arith.maximumf %111, %112 : vector<1x256xf32>
    %cst_38 = arith.constant 9.99999974E-6 : f32
    %114 = vector.broadcast %cst_38 : f32 to vector<1x256xf32>
    %115 = arith.addf %113, %114 : vector<1x256xf32>
    %116 = math.rsqrt %115 : vector<1x256xf32>
    %117 = arith.mulf %68, %116 : vector<1x256xf32>
    %118 = arith.mulf %104, %117 : vector<1x256xf32>
    %119 = arith.subf %69, %118 : vector<1x256xf32>
    %120 = vector.broadcast %117 : vector<1x256xf32> to vector<8x256xf32>
    %121 = arith.mulf %100, %120 : vector<8x256xf32>
    %122 = vector.broadcast %119 : vector<1x256xf32> to vector<8x256xf32>
    %123 = arith.addf %121, %122 : vector<8x256xf32>
    %124 = tpu.concatenate %99, %123 in 0 : vector<8x256xf32>, vector<8x256xf32> -> vector<16x256xf32>
    %c2 = arith.constant 2 : index
    %c0_39 = arith.constant 0 : index
    %c0_40 = arith.constant 0 : index
    %125 = vector.load %arg1[%c2, %c0_39, %c0_40] : memref<9x256x256xbf16, #tpu.memory_space<vmem>>, vector<1x256x256xbf16>
    %126 = vector.shape_cast %125 : vector<1x256x256xbf16> to vector<256x256xbf16>
    %c2_41 = arith.constant 2 : index
    %c0_42 = arith.constant 0 : index
    %c0_43 = arith.constant 0 : index
    %127 = vector.load %arg2[%c2_41, %c0_42, %c0_43] : memref<9x3x256xf32, #tpu.memory_space<vmem>>, vector<1x3x256xf32>
    %128 = vector.shape_cast %127 : vector<1x3x256xf32> to vector<3x256xf32>
    %129 = vector.extract_strided_slice %128 {offsets = [0, 0], sizes = [1, 256], strides = [1, 1]} : vector<3x256xf32> to vector<1x256xf32>
    %130 = vector.extract_strided_slice %128 {offsets = [1, 0], sizes = [1, 256], strides = [1, 1]} : vector<3x256xf32> to vector<1x256xf32>
    %131 = vector.extract_strided_slice %128 {offsets = [2, 0], sizes = [1, 256], strides = [1, 1]} : vector<3x256xf32> to vector<1x256xf32>
    %132 = arith.truncf %124 : vector<16x256xf32> to vector<16x256xbf16>
    %cst_44 = arith.constant dense<0.000000e+00> : vector<16x256xf32>
    %133 = tpu.matmul %132, %126, %cst_44 {dimension_numbers = #tpu.dot_dimension_numbers<[1], [0], [0], [1], [0, 0, 1, 1], [], []>} : vector<16x256xbf16>, vector<256x256xbf16>, vector<16x256xf32> -> vector<16x256xf32>
    %134 = vector.broadcast %129 : vector<1x256xf32> to vector<16x256xf32>
    %135 = arith.addf %133, %134 : vector<16x256xf32>
    %cst_45 = arith.constant 0.000000e+00 : f32
    %136 = vector.broadcast %cst_45 : f32 to vector<16x256xf32>
    %137 = arith.maximumf %135, %136 : vector<16x256xf32>
    %138 = vector.extract_strided_slice %137 {offsets = [0, 0], sizes = [8, 256], strides = [1, 1]} : vector<16x256xf32> to vector<8x256xf32>
    %cst_46 = arith.constant dense<0.000000e+00> : vector<256xf32>
    %139 = vector.multi_reduction <add>, %138, %cst_46 [0] : vector<8x256xf32> to vector<256xf32>
    %140 = vector.shape_cast %139 : vector<256xf32> to vector<1x256xf32>
    %cst_47 = arith.constant 8.000000e+00 : f32
    %141 = vector.broadcast %cst_47 : f32 to vector<1x256xf32>
    %142 = arith.divf %140, %141 : vector<1x256xf32>
    %143 = arith.mulf %138, %138 : vector<8x256xf32>
    %cst_48 = arith.constant dense<0.000000e+00> : vector<256xf32>
    %144 = vector.multi_reduction <add>, %143, %cst_48 [0] : vector<8x256xf32> to vector<256xf32>
    %145 = vector.shape_cast %144 : vector<256xf32> to vector<1x256xf32>
    %cst_49 = arith.constant 8.000000e+00 : f32
    %146 = vector.broadcast %cst_49 : f32 to vector<1x256xf32>
    %147 = arith.divf %145, %146 : vector<1x256xf32>
    %148 = arith.mulf %142, %142 : vector<1x256xf32>
    %149 = arith.subf %147, %148 : vector<1x256xf32>
    %cst_50 = arith.constant 0.000000e+00 : f32
    %150 = vector.broadcast %cst_50 : f32 to vector<1x256xf32>
    %151 = arith.maximumf %149, %150 : vector<1x256xf32>
    %cst_51 = arith.constant 9.99999974E-6 : f32
    %152 = vector.broadcast %cst_51 : f32 to vector<1x256xf32>
    %153 = arith.addf %151, %152 : vector<1x256xf32>
    %154 = math.rsqrt %153 : vector<1x256xf32>
    %155 = arith.mulf %130, %154 : vector<1x256xf32>
    %156 = arith.mulf %142, %155 : vector<1x256xf32>
    %157 = arith.subf %131, %156 : vector<1x256xf32>
    %158 = vector.broadcast %155 : vector<1x256xf32> to vector<8x256xf32>
    %159 = arith.mulf %138, %158 : vector<8x256xf32>
    %160 = vector.broadcast %157 : vector<1x256xf32> to vector<8x256xf32>
    %161 = arith.addf %159, %160 : vector<8x256xf32>
    %162 = vector.extract_strided_slice %137 {offsets = [8, 0], sizes = [8, 256], strides = [1, 1]} : vector<16x256xf32> to vector<8x256xf32>
    %cst_52 = arith.constant dense<0.000000e+00> : vector<256xf32>
    %163 = vector.multi_reduction <add>, %162, %cst_52 [0] : vector<8x256xf32> to vector<256xf32>
    %164 = vector.shape_cast %163 : vector<256xf32> to vector<1x256xf32>
    %cst_53 = arith.constant 8.000000e+00 : f32
    %165 = vector.broadcast %cst_53 : f32 to vector<1x256xf32>
    %166 = arith.divf %164, %165 : vector<1x256xf32>
    %167 = arith.mulf %162, %162 : vector<8x256xf32>
    %cst_54 = arith.constant dense<0.000000e+00> : vector<256xf32>
    %168 = vector.multi_reduction <add>, %167, %cst_54 [0] : vector<8x256xf32> to vector<256xf32>
    %169 = vector.shape_cast %168 : vector<256xf32> to vector<1x256xf32>
    %cst_55 = arith.constant 8.000000e+00 : f32
    %170 = vector.broadcast %cst_55 : f32 to vector<1x256xf32>
    %171 = arith.divf %169, %170 : vector<1x256xf32>
    %172 = arith.mulf %166, %166 : vector<1x256xf32>
    %173 = arith.subf %171, %172 : vector<1x256xf32>
    %cst_56 = arith.constant 0.000000e+00 : f32
    %174 = vector.broadcast %cst_56 : f32 to vector<1x256xf32>
    %175 = arith.maximumf %173, %174 : vector<1x256xf32>
    %cst_57 = arith.constant 9.99999974E-6 : f32
    %176 = vector.broadcast %cst_57 : f32 to vector<1x256xf32>
    %177 = arith.addf %175, %176 : vector<1x256xf32>
    %178 = math.rsqrt %177 : vector<1x256xf32>
    %179 = arith.mulf %130, %178 : vector<1x256xf32>
    %180 = arith.mulf %166, %179 : vector<1x256xf32>
    %181 = arith.subf %131, %180 : vector<1x256xf32>
    %182 = vector.broadcast %179 : vector<1x256xf32> to vector<8x256xf32>
    %183 = arith.mulf %162, %182 : vector<8x256xf32>
    %184 = vector.broadcast %181 : vector<1x256xf32> to vector<8x256xf32>
    %185 = arith.addf %183, %184 : vector<8x256xf32>
    %186 = tpu.concatenate %161, %185 in 0 : vector<8x256xf32>, vector<8x256xf32> -> vector<16x256xf32>
    %c3 = arith.constant 3 : index
    %c0_58 = arith.constant 0 : index
    %c0_59 = arith.constant 0 : index
    %187 = vector.load %arg1[%c3, %c0_58, %c0_59] : memref<9x256x256xbf16, #tpu.memory_space<vmem>>, vector<1x256x256xbf16>
    %188 = vector.shape_cast %187 : vector<1x256x256xbf16> to vector<256x256xbf16>
    %c3_60 = arith.constant 3 : index
    %c0_61 = arith.constant 0 : index
    %c0_62 = arith.constant 0 : index
    %189 = vector.load %arg2[%c3_60, %c0_61, %c0_62] : memref<9x3x256xf32, #tpu.memory_space<vmem>>, vector<1x3x256xf32>
    %190 = vector.shape_cast %189 : vector<1x3x256xf32> to vector<3x256xf32>
    %191 = vector.extract_strided_slice %190 {offsets = [0, 0], sizes = [1, 256], strides = [1, 1]} : vector<3x256xf32> to vector<1x256xf32>
    %192 = vector.extract_strided_slice %190 {offsets = [1, 0], sizes = [1, 256], strides = [1, 1]} : vector<3x256xf32> to vector<1x256xf32>
    %193 = vector.extract_strided_slice %190 {offsets = [2, 0], sizes = [1, 256], strides = [1, 1]} : vector<3x256xf32> to vector<1x256xf32>
    %194 = arith.truncf %186 : vector<16x256xf32> to vector<16x256xbf16>
    %cst_63 = arith.constant dense<0.000000e+00> : vector<16x256xf32>
    %195 = tpu.matmul %194, %188, %cst_63 {dimension_numbers = #tpu.dot_dimension_numbers<[1], [0], [0], [1], [0, 0, 1, 1], [], []>} : vector<16x256xbf16>, vector<256x256xbf16>, vector<16x256xf32> -> vector<16x256xf32>
    %196 = vector.broadcast %191 : vector<1x256xf32> to vector<16x256xf32>
    %197 = arith.addf %195, %196 : vector<16x256xf32>
    %cst_64 = arith.constant 0.000000e+00 : f32
    %198 = vector.broadcast %cst_64 : f32 to vector<16x256xf32>
    %199 = arith.maximumf %197, %198 : vector<16x256xf32>
    %200 = vector.extract_strided_slice %199 {offsets = [0, 0], sizes = [8, 256], strides = [1, 1]} : vector<16x256xf32> to vector<8x256xf32>
    %cst_65 = arith.constant dense<0.000000e+00> : vector<256xf32>
    %201 = vector.multi_reduction <add>, %200, %cst_65 [0] : vector<8x256xf32> to vector<256xf32>
    %202 = vector.shape_cast %201 : vector<256xf32> to vector<1x256xf32>
    %cst_66 = arith.constant 8.000000e+00 : f32
    %203 = vector.broadcast %cst_66 : f32 to vector<1x256xf32>
    %204 = arith.divf %202, %203 : vector<1x256xf32>
    %205 = arith.mulf %200, %200 : vector<8x256xf32>
    %cst_67 = arith.constant dense<0.000000e+00> : vector<256xf32>
    %206 = vector.multi_reduction <add>, %205, %cst_67 [0] : vector<8x256xf32> to vector<256xf32>
    %207 = vector.shape_cast %206 : vector<256xf32> to vector<1x256xf32>
    %cst_68 = arith.constant 8.000000e+00 : f32
    %208 = vector.broadcast %cst_68 : f32 to vector<1x256xf32>
    %209 = arith.divf %207, %208 : vector<1x256xf32>
    %210 = arith.mulf %204, %204 : vector<1x256xf32>
    %211 = arith.subf %209, %210 : vector<1x256xf32>
    %cst_69 = arith.constant 0.000000e+00 : f32
    %212 = vector.broadcast %cst_69 : f32 to vector<1x256xf32>
    %213 = arith.maximumf %211, %212 : vector<1x256xf32>
    %cst_70 = arith.constant 9.99999974E-6 : f32
    %214 = vector.broadcast %cst_70 : f32 to vector<1x256xf32>
    %215 = arith.addf %213, %214 : vector<1x256xf32>
    %216 = math.rsqrt %215 : vector<1x256xf32>
    %217 = arith.mulf %192, %216 : vector<1x256xf32>
    %218 = arith.mulf %204, %217 : vector<1x256xf32>
    %219 = arith.subf %193, %218 : vector<1x256xf32>
    %220 = vector.broadcast %217 : vector<1x256xf32> to vector<8x256xf32>
    %221 = arith.mulf %200, %220 : vector<8x256xf32>
    %222 = vector.broadcast %219 : vector<1x256xf32> to vector<8x256xf32>
    %223 = arith.addf %221, %222 : vector<8x256xf32>
    %224 = vector.extract_strided_slice %199 {offsets = [8, 0], sizes = [8, 256], strides = [1, 1]} : vector<16x256xf32> to vector<8x256xf32>
    %cst_71 = arith.constant dense<0.000000e+00> : vector<256xf32>
    %225 = vector.multi_reduction <add>, %224, %cst_71 [0] : vector<8x256xf32> to vector<256xf32>
    %226 = vector.shape_cast %225 : vector<256xf32> to vector<1x256xf32>
    %cst_72 = arith.constant 8.000000e+00 : f32
    %227 = vector.broadcast %cst_72 : f32 to vector<1x256xf32>
    %228 = arith.divf %226, %227 : vector<1x256xf32>
    %229 = arith.mulf %224, %224 : vector<8x256xf32>
    %cst_73 = arith.constant dense<0.000000e+00> : vector<256xf32>
    %230 = vector.multi_reduction <add>, %229, %cst_73 [0] : vector<8x256xf32> to vector<256xf32>
    %231 = vector.shape_cast %230 : vector<256xf32> to vector<1x256xf32>
    %cst_74 = arith.constant 8.000000e+00 : f32
    %232 = vector.broadcast %cst_74 : f32 to vector<1x256xf32>
    %233 = arith.divf %231, %232 : vector<1x256xf32>
    %234 = arith.mulf %228, %228 : vector<1x256xf32>
    %235 = arith.subf %233, %234 : vector<1x256xf32>
    %cst_75 = arith.constant 0.000000e+00 : f32
    %236 = vector.broadcast %cst_75 : f32 to vector<1x256xf32>
    %237 = arith.maximumf %235, %236 : vector<1x256xf32>
    %cst_76 = arith.constant 9.99999974E-6 : f32
    %238 = vector.broadcast %cst_76 : f32 to vector<1x256xf32>
    %239 = arith.addf %237, %238 : vector<1x256xf32>
    %240 = math.rsqrt %239 : vector<1x256xf32>
    %241 = arith.mulf %192, %240 : vector<1x256xf32>
    %242 = arith.mulf %228, %241 : vector<1x256xf32>
    %243 = arith.subf %193, %242 : vector<1x256xf32>
    %244 = vector.broadcast %241 : vector<1x256xf32> to vector<8x256xf32>
    %245 = arith.mulf %224, %244 : vector<8x256xf32>
    %246 = vector.broadcast %243 : vector<1x256xf32> to vector<8x256xf32>
    %247 = arith.addf %245, %246 : vector<8x256xf32>
    %248 = tpu.concatenate %223, %247 in 0 : vector<8x256xf32>, vector<8x256xf32> -> vector<16x256xf32>
    %c4 = arith.constant 4 : index
    %c0_77 = arith.constant 0 : index
    %c0_78 = arith.constant 0 : index
    %249 = vector.load %arg1[%c4, %c0_77, %c0_78] : memref<9x256x256xbf16, #tpu.memory_space<vmem>>, vector<1x256x256xbf16>
    %250 = vector.shape_cast %249 : vector<1x256x256xbf16> to vector<256x256xbf16>
    %c4_79 = arith.constant 4 : index
    %c0_80 = arith.constant 0 : index
    %c0_81 = arith.constant 0 : index
    %251 = vector.load %arg2[%c4_79, %c0_80, %c0_81] : memref<9x3x256xf32, #tpu.memory_space<vmem>>, vector<1x3x256xf32>
    %252 = vector.shape_cast %251 : vector<1x3x256xf32> to vector<3x256xf32>
    %253 = vector.extract_strided_slice %252 {offsets = [0, 0], sizes = [1, 256], strides = [1, 1]} : vector<3x256xf32> to vector<1x256xf32>
    %254 = vector.extract_strided_slice %252 {offsets = [1, 0], sizes = [1, 256], strides = [1, 1]} : vector<3x256xf32> to vector<1x256xf32>
    %255 = vector.extract_strided_slice %252 {offsets = [2, 0], sizes = [1, 256], strides = [1, 1]} : vector<3x256xf32> to vector<1x256xf32>
    %256 = arith.truncf %248 : vector<16x256xf32> to vector<16x256xbf16>
    %cst_82 = arith.constant dense<0.000000e+00> : vector<16x256xf32>
    %257 = tpu.matmul %256, %250, %cst_82 {dimension_numbers = #tpu.dot_dimension_numbers<[1], [0], [0], [1], [0, 0, 1, 1], [], []>} : vector<16x256xbf16>, vector<256x256xbf16>, vector<16x256xf32> -> vector<16x256xf32>
    %258 = vector.broadcast %253 : vector<1x256xf32> to vector<16x256xf32>
    %259 = arith.addf %257, %258 : vector<16x256xf32>
    %cst_83 = arith.constant 0.000000e+00 : f32
    %260 = vector.broadcast %cst_83 : f32 to vector<16x256xf32>
    %261 = arith.maximumf %259, %260 : vector<16x256xf32>
    %262 = vector.extract_strided_slice %261 {offsets = [0, 0], sizes = [8, 256], strides = [1, 1]} : vector<16x256xf32> to vector<8x256xf32>
    %cst_84 = arith.constant dense<0.000000e+00> : vector<256xf32>
    %263 = vector.multi_reduction <add>, %262, %cst_84 [0] : vector<8x256xf32> to vector<256xf32>
    %264 = vector.shape_cast %263 : vector<256xf32> to vector<1x256xf32>
    %cst_85 = arith.constant 8.000000e+00 : f32
    %265 = vector.broadcast %cst_85 : f32 to vector<1x256xf32>
    %266 = arith.divf %264, %265 : vector<1x256xf32>
    %267 = arith.mulf %262, %262 : vector<8x256xf32>
    %cst_86 = arith.constant dense<0.000000e+00> : vector<256xf32>
    %268 = vector.multi_reduction <add>, %267, %cst_86 [0] : vector<8x256xf32> to vector<256xf32>
    %269 = vector.shape_cast %268 : vector<256xf32> to vector<1x256xf32>
    %cst_87 = arith.constant 8.000000e+00 : f32
    %270 = vector.broadcast %cst_87 : f32 to vector<1x256xf32>
    %271 = arith.divf %269, %270 : vector<1x256xf32>
    %272 = arith.mulf %266, %266 : vector<1x256xf32>
    %273 = arith.subf %271, %272 : vector<1x256xf32>
    %cst_88 = arith.constant 0.000000e+00 : f32
    %274 = vector.broadcast %cst_88 : f32 to vector<1x256xf32>
    %275 = arith.maximumf %273, %274 : vector<1x256xf32>
    %cst_89 = arith.constant 9.99999974E-6 : f32
    %276 = vector.broadcast %cst_89 : f32 to vector<1x256xf32>
    %277 = arith.addf %275, %276 : vector<1x256xf32>
    %278 = math.rsqrt %277 : vector<1x256xf32>
    %279 = arith.mulf %254, %278 : vector<1x256xf32>
    %280 = arith.mulf %266, %279 : vector<1x256xf32>
    %281 = arith.subf %255, %280 : vector<1x256xf32>
    %282 = vector.broadcast %279 : vector<1x256xf32> to vector<8x256xf32>
    %283 = arith.mulf %262, %282 : vector<8x256xf32>
    %284 = vector.broadcast %281 : vector<1x256xf32> to vector<8x256xf32>
    %285 = arith.addf %283, %284 : vector<8x256xf32>
    %286 = vector.extract_strided_slice %261 {offsets = [8, 0], sizes = [8, 256], strides = [1, 1]} : vector<16x256xf32> to vector<8x256xf32>
    %cst_90 = arith.constant dense<0.000000e+00> : vector<256xf32>
    %287 = vector.multi_reduction <add>, %286, %cst_90 [0] : vector<8x256xf32> to vector<256xf32>
    %288 = vector.shape_cast %287 : vector<256xf32> to vector<1x256xf32>
    %cst_91 = arith.constant 8.000000e+00 : f32
    %289 = vector.broadcast %cst_91 : f32 to vector<1x256xf32>
    %290 = arith.divf %288, %289 : vector<1x256xf32>
    %291 = arith.mulf %286, %286 : vector<8x256xf32>
    %cst_92 = arith.constant dense<0.000000e+00> : vector<256xf32>
    %292 = vector.multi_reduction <add>, %291, %cst_92 [0] : vector<8x256xf32> to vector<256xf32>
    %293 = vector.shape_cast %292 : vector<256xf32> to vector<1x256xf32>
    %cst_93 = arith.constant 8.000000e+00 : f32
    %294 = vector.broadcast %cst_93 : f32 to vector<1x256xf32>
    %295 = arith.divf %293, %294 : vector<1x256xf32>
    %296 = arith.mulf %290, %290 : vector<1x256xf32>
    %297 = arith.subf %295, %296 : vector<1x256xf32>
    %cst_94 = arith.constant 0.000000e+00 : f32
    %298 = vector.broadcast %cst_94 : f32 to vector<1x256xf32>
    %299 = arith.maximumf %297, %298 : vector<1x256xf32>
    %cst_95 = arith.constant 9.99999974E-6 : f32
    %300 = vector.broadcast %cst_95 : f32 to vector<1x256xf32>
    %301 = arith.addf %299, %300 : vector<1x256xf32>
    %302 = math.rsqrt %301 : vector<1x256xf32>
    %303 = arith.mulf %254, %302 : vector<1x256xf32>
    %304 = arith.mulf %290, %303 : vector<1x256xf32>
    %305 = arith.subf %255, %304 : vector<1x256xf32>
    %306 = vector.broadcast %303 : vector<1x256xf32> to vector<8x256xf32>
    %307 = arith.mulf %286, %306 : vector<8x256xf32>
    %308 = vector.broadcast %305 : vector<1x256xf32> to vector<8x256xf32>
    %309 = arith.addf %307, %308 : vector<8x256xf32>
    %310 = tpu.concatenate %285, %309 in 0 : vector<8x256xf32>, vector<8x256xf32> -> vector<16x256xf32>
    %311 = vector.extract_strided_slice %310 {offsets = [0, 0], sizes = [8, 256], strides = [1, 1]} : vector<16x256xf32> to vector<8x256xf32>
    %312 = vector.extract_strided_slice %310 {offsets = [8, 0], sizes = [8, 256], strides = [1, 1]} : vector<16x256xf32> to vector<8x256xf32>
    %313 = arith.mulf %311, %312 : vector<8x256xf32>
    %c5 = arith.constant 5 : index
    %c0_96 = arith.constant 0 : index
    %c0_97 = arith.constant 0 : index
    %314 = vector.load %arg1[%c5, %c0_96, %c0_97] : memref<9x256x256xbf16, #tpu.memory_space<vmem>>, vector<1x256x256xbf16>
    %315 = vector.shape_cast %314 : vector<1x256x256xbf16> to vector<256x256xbf16>
    %c5_98 = arith.constant 5 : index
    %c0_99 = arith.constant 0 : index
    %c0_100 = arith.constant 0 : index
    %316 = vector.load %arg2[%c5_98, %c0_99, %c0_100] : memref<9x3x256xf32, #tpu.memory_space<vmem>>, vector<1x3x256xf32>
    %317 = vector.shape_cast %316 : vector<1x3x256xf32> to vector<3x256xf32>
    %318 = vector.extract_strided_slice %317 {offsets = [0, 0], sizes = [1, 256], strides = [1, 1]} : vector<3x256xf32> to vector<1x256xf32>
    %319 = vector.extract_strided_slice %317 {offsets = [1, 0], sizes = [1, 256], strides = [1, 1]} : vector<3x256xf32> to vector<1x256xf32>
    %320 = vector.extract_strided_slice %317 {offsets = [2, 0], sizes = [1, 256], strides = [1, 1]} : vector<3x256xf32> to vector<1x256xf32>
    %321 = arith.truncf %313 : vector<8x256xf32> to vector<8x256xbf16>
    %cst_101 = arith.constant dense<0.000000e+00> : vector<8x256xf32>
    %322 = tpu.matmul %321, %315, %cst_101 {dimension_numbers = #tpu.dot_dimension_numbers<[1], [0], [0], [1], [0, 0, 1, 1], [], []>} : vector<8x256xbf16>, vector<256x256xbf16>, vector<8x256xf32> -> vector<8x256xf32>
    %323 = vector.broadcast %318 : vector<1x256xf32> to vector<8x256xf32>
    %324 = arith.addf %322, %323 : vector<8x256xf32>
    %cst_102 = arith.constant 0.000000e+00 : f32
    %325 = vector.broadcast %cst_102 : f32 to vector<8x256xf32>
    %326 = arith.maximumf %324, %325 : vector<8x256xf32>
    %cst_103 = arith.constant dense<0.000000e+00> : vector<256xf32>
    %327 = vector.multi_reduction <add>, %326, %cst_103 [0] : vector<8x256xf32> to vector<256xf32>
    %328 = vector.shape_cast %327 : vector<256xf32> to vector<1x256xf32>
    %cst_104 = arith.constant 8.000000e+00 : f32
    %329 = vector.broadcast %cst_104 : f32 to vector<1x256xf32>
    %330 = arith.divf %328, %329 : vector<1x256xf32>
    %331 = arith.mulf %326, %326 : vector<8x256xf32>
    %cst_105 = arith.constant dense<0.000000e+00> : vector<256xf32>
    %332 = vector.multi_reduction <add>, %331, %cst_105 [0] : vector<8x256xf32> to vector<256xf32>
    %333 = vector.shape_cast %332 : vector<256xf32> to vector<1x256xf32>
    %cst_106 = arith.constant 8.000000e+00 : f32
    %334 = vector.broadcast %cst_106 : f32 to vector<1x256xf32>
    %335 = arith.divf %333, %334 : vector<1x256xf32>
    %336 = arith.mulf %330, %330 : vector<1x256xf32>
    %337 = arith.subf %335, %336 : vector<1x256xf32>
    %cst_107 = arith.constant 0.000000e+00 : f32
    %338 = vector.broadcast %cst_107 : f32 to vector<1x256xf32>
    %339 = arith.maximumf %337, %338 : vector<1x256xf32>
    %cst_108 = arith.constant 9.99999974E-6 : f32
    %340 = vector.broadcast %cst_108 : f32 to vector<1x256xf32>
    %341 = arith.addf %339, %340 : vector<1x256xf32>
    %342 = math.rsqrt %341 : vector<1x256xf32>
    %343 = arith.mulf %319, %342 : vector<1x256xf32>
    %344 = arith.mulf %330, %343 : vector<1x256xf32>
    %345 = arith.subf %320, %344 : vector<1x256xf32>
    %346 = vector.broadcast %343 : vector<1x256xf32> to vector<8x256xf32>
    %347 = arith.mulf %326, %346 : vector<8x256xf32>
    %348 = vector.broadcast %345 : vector<1x256xf32> to vector<8x256xf32>
    %349 = arith.addf %347, %348 : vector<8x256xf32>
    %c6 = arith.constant 6 : index
    %c0_109 = arith.constant 0 : index
    %c0_110 = arith.constant 0 : index
    %350 = vector.load %arg1[%c6, %c0_109, %c0_110] : memref<9x256x256xbf16, #tpu.memory_space<vmem>>, vector<1x256x256xbf16>
    %351 = vector.shape_cast %350 : vector<1x256x256xbf16> to vector<256x256xbf16>
    %c6_111 = arith.constant 6 : index
    %c0_112 = arith.constant 0 : index
    %c0_113 = arith.constant 0 : index
    %352 = vector.load %arg2[%c6_111, %c0_112, %c0_113] : memref<9x3x256xf32, #tpu.memory_space<vmem>>, vector<1x3x256xf32>
    %353 = vector.shape_cast %352 : vector<1x3x256xf32> to vector<3x256xf32>
    %354 = vector.extract_strided_slice %353 {offsets = [0, 0], sizes = [1, 256], strides = [1, 1]} : vector<3x256xf32> to vector<1x256xf32>
    %355 = vector.extract_strided_slice %353 {offsets = [1, 0], sizes = [1, 256], strides = [1, 1]} : vector<3x256xf32> to vector<1x256xf32>
    %356 = vector.extract_strided_slice %353 {offsets = [2, 0], sizes = [1, 256], strides = [1, 1]} : vector<3x256xf32> to vector<1x256xf32>
    %357 = arith.truncf %349 : vector<8x256xf32> to vector<8x256xbf16>
    %cst_114 = arith.constant dense<0.000000e+00> : vector<8x256xf32>
    %358 = tpu.matmul %357, %351, %cst_114 {dimension_numbers = #tpu.dot_dimension_numbers<[1], [0], [0], [1], [0, 0, 1, 1], [], []>} : vector<8x256xbf16>, vector<256x256xbf16>, vector<8x256xf32> -> vector<8x256xf32>
    %359 = vector.broadcast %354 : vector<1x256xf32> to vector<8x256xf32>
    %360 = arith.addf %358, %359 : vector<8x256xf32>
    %cst_115 = arith.constant 0.000000e+00 : f32
    %361 = vector.broadcast %cst_115 : f32 to vector<8x256xf32>
    %362 = arith.maximumf %360, %361 : vector<8x256xf32>
    %cst_116 = arith.constant dense<0.000000e+00> : vector<256xf32>
    %363 = vector.multi_reduction <add>, %362, %cst_116 [0] : vector<8x256xf32> to vector<256xf32>
    %364 = vector.shape_cast %363 : vector<256xf32> to vector<1x256xf32>
    %cst_117 = arith.constant 8.000000e+00 : f32
    %365 = vector.broadcast %cst_117 : f32 to vector<1x256xf32>
    %366 = arith.divf %364, %365 : vector<1x256xf32>
    %367 = arith.mulf %362, %362 : vector<8x256xf32>
    %cst_118 = arith.constant dense<0.000000e+00> : vector<256xf32>
    %368 = vector.multi_reduction <add>, %367, %cst_118 [0] : vector<8x256xf32> to vector<256xf32>
    %369 = vector.shape_cast %368 : vector<256xf32> to vector<1x256xf32>
    %cst_119 = arith.constant 8.000000e+00 : f32
    %370 = vector.broadcast %cst_119 : f32 to vector<1x256xf32>
    %371 = arith.divf %369, %370 : vector<1x256xf32>
    %372 = arith.mulf %366, %366 : vector<1x256xf32>
    %373 = arith.subf %371, %372 : vector<1x256xf32>
    %cst_120 = arith.constant 0.000000e+00 : f32
    %374 = vector.broadcast %cst_120 : f32 to vector<1x256xf32>
    %375 = arith.maximumf %373, %374 : vector<1x256xf32>
    %cst_121 = arith.constant 9.99999974E-6 : f32
    %376 = vector.broadcast %cst_121 : f32 to vector<1x256xf32>
    %377 = arith.addf %375, %376 : vector<1x256xf32>
    %378 = math.rsqrt %377 : vector<1x256xf32>
    %379 = arith.mulf %355, %378 : vector<1x256xf32>
    %380 = arith.mulf %366, %379 : vector<1x256xf32>
    %381 = arith.subf %356, %380 : vector<1x256xf32>
    %382 = vector.broadcast %379 : vector<1x256xf32> to vector<8x256xf32>
    %383 = arith.mulf %362, %382 : vector<8x256xf32>
    %384 = vector.broadcast %381 : vector<1x256xf32> to vector<8x256xf32>
    %385 = arith.addf %383, %384 : vector<8x256xf32>
    %c7 = arith.constant 7 : index
    %c0_122 = arith.constant 0 : index
    %c0_123 = arith.constant 0 : index
    %386 = vector.load %arg1[%c7, %c0_122, %c0_123] : memref<9x256x256xbf16, #tpu.memory_space<vmem>>, vector<1x256x256xbf16>
    %387 = vector.shape_cast %386 : vector<1x256x256xbf16> to vector<256x256xbf16>
    %c7_124 = arith.constant 7 : index
    %c0_125 = arith.constant 0 : index
    %c0_126 = arith.constant 0 : index
    %388 = vector.load %arg2[%c7_124, %c0_125, %c0_126] : memref<9x3x256xf32, #tpu.memory_space<vmem>>, vector<1x3x256xf32>
    %389 = vector.shape_cast %388 : vector<1x3x256xf32> to vector<3x256xf32>
    %390 = vector.extract_strided_slice %389 {offsets = [0, 0], sizes = [1, 256], strides = [1, 1]} : vector<3x256xf32> to vector<1x256xf32>
    %391 = vector.extract_strided_slice %389 {offsets = [1, 0], sizes = [1, 256], strides = [1, 1]} : vector<3x256xf32> to vector<1x256xf32>
    %392 = vector.extract_strided_slice %389 {offsets = [2, 0], sizes = [1, 256], strides = [1, 1]} : vector<3x256xf32> to vector<1x256xf32>
    %393 = arith.truncf %385 : vector<8x256xf32> to vector<8x256xbf16>
    %cst_127 = arith.constant dense<0.000000e+00> : vector<8x256xf32>
    %394 = tpu.matmul %393, %387, %cst_127 {dimension_numbers = #tpu.dot_dimension_numbers<[1], [0], [0], [1], [0, 0, 1, 1], [], []>} : vector<8x256xbf16>, vector<256x256xbf16>, vector<8x256xf32> -> vector<8x256xf32>
    %395 = vector.broadcast %390 : vector<1x256xf32> to vector<8x256xf32>
    %396 = arith.addf %394, %395 : vector<8x256xf32>
    %cst_128 = arith.constant 0.000000e+00 : f32
    %397 = vector.broadcast %cst_128 : f32 to vector<8x256xf32>
    %398 = arith.maximumf %396, %397 : vector<8x256xf32>
    %cst_129 = arith.constant dense<0.000000e+00> : vector<256xf32>
    %399 = vector.multi_reduction <add>, %398, %cst_129 [0] : vector<8x256xf32> to vector<256xf32>
    %400 = vector.shape_cast %399 : vector<256xf32> to vector<1x256xf32>
    %cst_130 = arith.constant 8.000000e+00 : f32
    %401 = vector.broadcast %cst_130 : f32 to vector<1x256xf32>
    %402 = arith.divf %400, %401 : vector<1x256xf32>
    %403 = arith.mulf %398, %398 : vector<8x256xf32>
    %cst_131 = arith.constant dense<0.000000e+00> : vector<256xf32>
    %404 = vector.multi_reduction <add>, %403, %cst_131 [0] : vector<8x256xf32> to vector<256xf32>
    %405 = vector.shape_cast %404 : vector<256xf32> to vector<1x256xf32>
    %cst_132 = arith.constant 8.000000e+00 : f32
    %406 = vector.broadcast %cst_132 : f32 to vector<1x256xf32>
    %407 = arith.divf %405, %406 : vector<1x256xf32>
    %408 = arith.mulf %402, %402 : vector<1x256xf32>
    %409 = arith.subf %407, %408 : vector<1x256xf32>
    %cst_133 = arith.constant 0.000000e+00 : f32
    %410 = vector.broadcast %cst_133 : f32 to vector<1x256xf32>
    %411 = arith.maximumf %409, %410 : vector<1x256xf32>
    %cst_134 = arith.constant 9.99999974E-6 : f32
    %412 = vector.broadcast %cst_134 : f32 to vector<1x256xf32>
    %413 = arith.addf %411, %412 : vector<1x256xf32>
    %414 = math.rsqrt %413 : vector<1x256xf32>
    %415 = arith.mulf %391, %414 : vector<1x256xf32>
    %416 = arith.mulf %402, %415 : vector<1x256xf32>
    %417 = arith.subf %392, %416 : vector<1x256xf32>
    %418 = vector.broadcast %415 : vector<1x256xf32> to vector<8x256xf32>
    %419 = arith.mulf %398, %418 : vector<8x256xf32>
    %420 = vector.broadcast %417 : vector<1x256xf32> to vector<8x256xf32>
    %421 = arith.addf %419, %420 : vector<8x256xf32>
    %c8 = arith.constant 8 : index
    %c0_135 = arith.constant 0 : index
    %c0_136 = arith.constant 0 : index
    %422 = vector.load %arg1[%c8, %c0_135, %c0_136] : memref<9x256x256xbf16, #tpu.memory_space<vmem>>, vector<1x256x256xbf16>
    %423 = vector.shape_cast %422 : vector<1x256x256xbf16> to vector<256x256xbf16>
    %c8_137 = arith.constant 8 : index
    %c0_138 = arith.constant 0 : index
    %c0_139 = arith.constant 0 : index
    %424 = vector.load %arg2[%c8_137, %c0_138, %c0_139] : memref<9x3x256xf32, #tpu.memory_space<vmem>>, vector<1x3x256xf32>
    %425 = vector.shape_cast %424 : vector<1x3x256xf32> to vector<3x256xf32>
    %426 = vector.extract_strided_slice %425 {offsets = [0, 0], sizes = [1, 256], strides = [1, 1]} : vector<3x256xf32> to vector<1x256xf32>
    %427 = vector.extract_strided_slice %425 {offsets = [1, 0], sizes = [1, 256], strides = [1, 1]} : vector<3x256xf32> to vector<1x256xf32>
    %428 = vector.extract_strided_slice %425 {offsets = [2, 0], sizes = [1, 256], strides = [1, 1]} : vector<3x256xf32> to vector<1x256xf32>
    %429 = arith.truncf %421 : vector<8x256xf32> to vector<8x256xbf16>
    %cst_140 = arith.constant dense<0.000000e+00> : vector<8x256xf32>
    %430 = tpu.matmul %429, %423, %cst_140 {dimension_numbers = #tpu.dot_dimension_numbers<[1], [0], [0], [1], [0, 0, 1, 1], [], []>} : vector<8x256xbf16>, vector<256x256xbf16>, vector<8x256xf32> -> vector<8x256xf32>
    %431 = vector.broadcast %426 : vector<1x256xf32> to vector<8x256xf32>
    %432 = arith.addf %430, %431 : vector<8x256xf32>
    %cst_141 = arith.constant 0.000000e+00 : f32
    %433 = vector.broadcast %cst_141 : f32 to vector<8x256xf32>
    %434 = arith.maximumf %432, %433 : vector<8x256xf32>
    %cst_142 = arith.constant dense<0.000000e+00> : vector<256xf32>
    %435 = vector.multi_reduction <add>, %434, %cst_142 [0] : vector<8x256xf32> to vector<256xf32>
    %436 = vector.shape_cast %435 : vector<256xf32> to vector<1x256xf32>
    %cst_143 = arith.constant 8.000000e+00 : f32
    %437 = vector.broadcast %cst_143 : f32 to vector<1x256xf32>
    %438 = arith.divf %436, %437 : vector<1x256xf32>
    %439 = arith.mulf %434, %434 : vector<8x256xf32>
    %cst_144 = arith.constant dense<0.000000e+00> : vector<256xf32>
    %440 = vector.multi_reduction <add>, %439, %cst_144 [0] : vector<8x256xf32> to vector<256xf32>
    %441 = vector.shape_cast %440 : vector<256xf32> to vector<1x256xf32>
    %cst_145 = arith.constant 8.000000e+00 : f32
    %442 = vector.broadcast %cst_145 : f32 to vector<1x256xf32>
    %443 = arith.divf %441, %442 : vector<1x256xf32>
    %444 = arith.mulf %438, %438 : vector<1x256xf32>
    %445 = arith.subf %443, %444 : vector<1x256xf32>
    %cst_146 = arith.constant 0.000000e+00 : f32
    %446 = vector.broadcast %cst_146 : f32 to vector<1x256xf32>
    %447 = arith.maximumf %445, %446 : vector<1x256xf32>
    %cst_147 = arith.constant 9.99999974E-6 : f32
    %448 = vector.broadcast %cst_147 : f32 to vector<1x256xf32>
    %449 = arith.addf %447, %448 : vector<1x256xf32>
    %450 = math.rsqrt %449 : vector<1x256xf32>
    %451 = arith.mulf %427, %450 : vector<1x256xf32>
    %452 = arith.mulf %438, %451 : vector<1x256xf32>
    %453 = arith.subf %428, %452 : vector<1x256xf32>
    %454 = vector.broadcast %451 : vector<1x256xf32> to vector<8x256xf32>
    %455 = arith.mulf %434, %454 : vector<8x256xf32>
    %456 = vector.broadcast %453 : vector<1x256xf32> to vector<8x256xf32>
    %457 = arith.addf %455, %456 : vector<8x256xf32>
    %c0_148 = arith.constant 0 : index
    %c0_149 = arith.constant 0 : index
    %458 = vector.load %arg3[%c0_148, %c0_149] : memref<8x256xf32, #tpu.memory_space<vmem>>, vector<8x256xf32>
    tpu.vector_store %arg3[%c0_148, %c0_149], %457 {strides = array<i32>} : memref<8x256xf32, #tpu.memory_space<vmem>>, vector<8x256xf32>,
    return
  }
}

</mosaic_0001>

<llo_original>
// kernel: siamese_forward.1
$region0: #{siamese_forward.1}
  #allocation0 [shape = 'u32[]', space=smem, size = 0x4, offset = 0x4, fixed_abs, tag = 'smem constant byte address 0x4 - core index']
  #allocation1 [shape = 'u32[144,128]{1,0:T(1,128)}', space=vmem, size = 0x12000, scoped, tag = 'internal scratch']
  %s0 = inlined_call_operand.vmem [shape: f32[16,256], index: 0, kind: input, shape index: {}]
  %s1 = inlined_call_operand.hbm [shape: bf16[9,256,256], index: 1, kind: input, shape index: {}]
  %s2 = inlined_call_operand.hbm [shape: f32[9,3,256], index: 2, kind: input, shape index: {}]
  %s3 = inlined_call_operand.vmem [shape: f32[8,256], index: 3, kind: output, shape index: {}]
  %s4 = sld [smem:[#allocation0]]
  $region30: #{siamese_forward.1} parent=0
    _
  %s6 = ssub.s32 1, %s4
  %s7 = scalar_select 0, %s6, %s4
  $region1: #{siamese_forward.1} parent=0
    #allocation2 [shape = 'u8[1179648]{0}', space=vmem, size = 0x120000, scoped, tag = 'input window, operand 1, single buffered']
    #allocation3 [shape = 's32[1]{0}', space=sflag, size = 0x4, scoped, tag = 'scoped memory for siamese_forward.1']
    #allocation4 [shape = 'u8[36864]{0}', space=vmem, size = 0x9000, scoped, tag = 'input window, operand 2, single buffered']
    #allocation5 [shape = 's32[1]{0}', space=sflag, size = 0x4, scoped, tag = 'scoped memory for siamese_forward.1']
    %8 = vsyncpa [#allocation3], 0
    %9 = vsyncpa [#allocation5], 0
    // Predicated region
    $region2: #{siamese_forward.1} parent=1 // pred_check
      _
    $region3: #{siamese_forward.1} parent=1 // pred_check_branch
      %11 = sbr.rel (0) target = $region5
    $region4: #{siamese_forward.1} parent=1 // pred_region
      _
    $region5: #{siamese_forward.1} parent=1 // pred_fallthru
      _
    // Predicated region
    $region6: #{siamese_forward.1} parent=1 // pred_check
      _
    $region7: #{siamese_forward.1} parent=1 // pred_check_branch
      %13 = sbr.rel (0) target = $region9
    $region8: #{siamese_forward.1} parent=1 // pred_region
      %s15 = ssub.s32 36864, 36864
      %16 = vsyncadd [#allocation3], %s15
      %s17 = sshll.u32 [#allocation2], 4
      %s18 = int_to_ptr.vmem [resolvable:$true] %s17
      %23 = dma.hbm_to_vmem [thread:$0]  %s1, 36864, %s18, [#allocation3], 128, 128, 8
    $region9: #{siamese_forward.1} parent=1 // pred_fallthru
      _
    // Predicated region
    $region10: #{siamese_forward.1} parent=1 // pred_check
      _
    $region11: #{siamese_forward.1} parent=1 // pred_check_branch
      %25 = sbr.rel (0) target = $region13
    $region12: #{siamese_forward.1} parent=1 // pred_region
      %s27 = ssub.s32 1152, 1152
      %28 = vsyncadd [#allocation5], %s27
      %s29 = sshll.u32 [#allocation4], 4
      %s30 = int_to_ptr.vmem [resolvable:$true] %s29
      %35 = dma.hbm_to_vmem [thread:$0]  %s2, 1152, %s30, [#allocation5], 128, 128, 8
    $region13: #{siamese_forward.1} parent=1 // pred_fallthru
      _
    // Predicated region
    $region14: #{siamese_forward.1} parent=1 // pred_check
      _
    $region15: #{siamese_forward.1} parent=1 // pred_check_branch
      %37 = sbr.rel (0) target = $region17
    $region16: #{siamese_forward.1} parent=1 // pred_region
      %38 = dma.done [#allocation3], 36864
    $region17: #{siamese_forward.1} parent=1 // pred_fallthru
      _
    // Predicated region
    $region18: #{siamese_forward.1} parent=1 // pred_check
      _
    $region19: #{siamese_forward.1} parent=1 // pred_check_branch
      %40 = sbr.rel (0) target = $region21
    $region20: #{siamese_forward.1} parent=1 // pred_region
      %41 = dma.done [#allocation5], 1152
    $region21: #{siamese_forward.1} parent=1 // pred_fallthru
      _
    %v42 = vld [vmem:[%s0] sm:$0xff]
    %v43 = vld [vmem:[%s0 + $0x8] sm:$0xff]
    %v44 = vld [vmem:[%s0 + $0x10] sm:$0xff]
    %v45 = vld [vmem:[%s0 + $0x18] sm:$0xff]
    %v46 = vld [vmem:[#allocation2] sm:$0xff]
    %v47 = vld [vmem:[#allocation2 + $0x8] sm:$0xff]
    %v48 = vld [vmem:[#allocation2 + $0x10] sm:$0xff]
    %v49 = vld [vmem:[#allocation2 + $0x18] sm:$0xff]
    %v50 = vld [vmem:[#allocation2 + $0x20] sm:$0xff]
    %v51 = vld [vmem:[#allocation2 + $0x28] sm:$0xff]
    %v52 = vld [vmem:[#allocation2 + $0x30] sm:$0xff]
    %v53 = vld [vmem:[#allocation2 + $0x38] sm:$0xff]
    %v54 = vld [vmem:[#allocation2 + $0x40] sm:$0xff]
    %v55 = vld [vmem:[#allocation2 + $0x48] sm:$0xff]
    %v56 = vld [vmem:[#allocation2 + $0x50] sm:$0xff]
    %v57 = vld [vmem:[#allocation2 + $0x58] sm:$0xff]
    %v58 = vld [vmem:[#allocation2 + $0x60] sm:$0xff]
    %v59 = vld [vmem:[#allocation2 + $0x68] sm:$0xff]
    %v60 = vld [vmem:[#allocation2 + $0x70] sm:$0xff]
    %v61 = vld [vmem:[#allocation2 + $0x78] sm:$0xff]
    %v62 = vld [vmem:[#allocation2 + $0x80] sm:$0xff]
    %v63 = vld [vmem:[#allocation2 + $0x88] sm:$0xff]
    %v64 = vld [vmem:[#allocation2 + $0x90] sm:$0xff]
    %v65 = vld [vmem:[#allocation2 + $0x98] sm:$0xff]
    %v66 = vld [vmem:[#allocation2 + $0xa0] sm:$0xff]
    %v67 = vld [vmem:[#allocation2 + $0xa8] sm:$0xff]
    %v68 = vld [vmem:[#allocation2 + $0xb0] sm:$0xff]
    %v69 = vld [vmem:[#allocation2 + $0xb8] sm:$0xff]
    %v70 = vld [vmem:[#allocation2 + $0xc0] sm:$0xff]
    %v71 = vld [vmem:[#allocation2 + $0xc8] sm:$0xff]
    %v72 = vld [vmem:[#allocation2 + $0xd0] sm:$0xff]
    %v73 = vld [vmem:[#allocation2 + $0xd8] sm:$0xff]
    %v74 = vld [vmem:[#allocation2 + $0xe0] sm:$0xff]
    %v75 = vld [vmem:[#allocation2 + $0xe8] sm:$0xff]
    %v76 = vld [vmem:[#allocation2 + $0xf0] sm:$0xff]
    %v77 = vld [vmem:[#allocation2 + $0xf8] sm:$0xff]
    %v78 = vld [vmem:[#allocation4] sm:$0x77]
    %v79 = vpack.c.bf16 %v44, %v42
    %v80 = vpack.c.bf16 %v45, %v43
    %v82 = vlaneseq
    %v83 = vshrl.u32 %v82, 7
    %v84 = vsub.s32 0, %v83
    %v85 = vrot.slane %v78, %v84
    %v86 = vlaneseq
    %v87 = vshrl.u32 %v86, 7
    %v88 = vsub.s32 4, %v87
    %v89 = vrot.slane %v78, %v88
    %v92 = vlaneseq
    %v93 = vshrl.u32 %v92, 7
    %v94 = vsub.s32 0, %v93
    %v95 = vrot.slane %v85, %v94
    %v96 = vlaneseq
    %v97 = vshrl.u32 %v96, 7
    %v98 = vsub.s32 0, %v97
    %v99 = vrot.slane %v89, %v98
    %v132 = vunpack.c.l.b16 %v46
    %v133 = vunpack.c.h.b16 %v46
    %v134 = vunpack.c.l.b16 %v47
    %v135 = vunpack.c.h.b16 %v47
    %v136 = vunpack.c.l.b16 %v48
    %v137 = vunpack.c.h.b16 %v48
    %v138 = vunpack.c.l.b16 %v49
    %v139 = vunpack.c.h.b16 %v49
    %v140 = vunpack.c.l.b16 %v50
    %v141 = vunpack.c.h.b16 %v50
    %v142 = vunpack.c.l.b16 %v51
    %v143 = vunpack.c.h.b16 %v51
    %v144 = vunpack.c.l.b16 %v52
    %v145 = vunpack.c.h.b16 %v52
    %v146 = vunpack.c.l.b16 %v53
    %v147 = vunpack.c.h.b16 %v53
    %v148 = vunpack.c.l.b16 %v54
    %v149 = vunpack.c.h.b16 %v54
    %v150 = vunpack.c.l.b16 %v55
    %v151 = vunpack.c.h.b16 %v55
    %v152 = vunpack.c.l.b16 %v56
    %v153 = vunpack.c.h.b16 %v56
    %v154 = vunpack.c.l.b16 %v57
    %v155 = vunpack.c.h.b16 %v57
    %v156 = vunpack.c.l.b16 %v58
    %v157 = vunpack.c.h.b16 %v58
    %v158 = vunpack.c.l.b16 %v59
    %v159 = vunpack.c.h.b16 %v59
    %v160 = vunpack.c.l.b16 %v60
    %v161 = vunpack.c.h.b16 %v60
    %v162 = vunpack.c.l.b16 %v61
    %v163 = vunpack.c.h.b16 %v61
    %v164 = vunpack.c.l.b16 %v62
    %v165 = vunpack.c.h.b16 %v62
    %v166 = vunpack.c.l.b16 %v63
    %v167 = vunpack.c.h.b16 %v63
    %v168 = vunpack.c.l.b16 %v64
    %v169 = vunpack.c.h.b16 %v64
    %v170 = vunpack.c.l.b16 %v65
    %v171 = vunpack.c.h.b16 %v65
    %v172 = vunpack.c.l.b16 %v66
    %v173 = vunpack.c.h.b16 %v66
    %v174 = vunpack.c.l.b16 %v67
    %v175 = vunpack.c.h.b16 %v67
    %v176 = vunpack.c.l.b16 %v68
    %v177 = vunpack.c.h.b16 %v68
    %v178 = vunpack.c.l.b16 %v69
    %v179 = vunpack.c.h.b16 %v69
    %v180 = vunpack.c.l.b16 %v70
    %v181 = vunpack.c.h.b16 %v70
    %v182 = vunpack.c.l.b16 %v71
    %v183 = vunpack.c.h.b16 %v71
    %v184 = vunpack.c.l.b16 %v72
    %v185 = vunpack.c.h.b16 %v72
    %v186 = vunpack.c.l.b16 %v73
    %v187 = vunpack.c.h.b16 %v73
    %v188 = vunpack.c.l.b16 %v74
    %v189 = vunpack.c.h.b16 %v74
    %v190 = vunpack.c.l.b16 %v75
    %v191 = vunpack.c.h.b16 %v75
    %v192 = vunpack.c.l.b16 %v76
    %v193 = vunpack.c.h.b16 %v76
    %v194 = vunpack.c.l.b16 %v77
    %v195 = vunpack.c.h.b16 %v77
    %v196 = vpack.c.b16 %v134, %v132
    %v197 = vpack.c.b16 %v135, %v133
    %v198 = vpack.c.b16 %v138, %v136
    %v199 = vpack.c.b16 %v139, %v137
    %v200 = vpack.c.b16 %v142, %v140
    %v201 = vpack.c.b16 %v143, %v141
    %v202 = vpack.c.b16 %v146, %v144
    %v203 = vpack.c.b16 %v147, %v145
    %v204 = vpack.c.b16 %v150, %v148
    %v205 = vpack.c.b16 %v151, %v149
    %v206 = vpack.c.b16 %v154, %v152
    %v207 = vpack.c.b16 %v155, %v153
    %v208 = vpack.c.b16 %v158, %v156
    %v209 = vpack.c.b16 %v159, %v157
    %v210 = vpack.c.b16 %v162, %v160
    %v211 = vpack.c.b16 %v163, %v161
    %v212 = vpack.c.b16 %v166, %v164
    %v213 = vpack.c.b16 %v167, %v165
    %v214 = vpack.c.b16 %v170, %v168
    %v215 = vpack.c.b16 %v171, %v169
    %v216 = vpack.c.b16 %v174, %v172
    %v217 = vpack.c.b16 %v175, %v173
    %v218 = vpack.c.b16 %v178, %v176
    %v219 = vpack.c.b16 %v179, %v177
    %v220 = vpack.c.b16 %v182, %v180
    %v221 = vpack.c.b16 %v183, %v181
    %v222 = vpack.c.b16 %v186, %v184
    %v223 = vpack.c.b16 %v187, %v185
    %v224 = vpack.c.b16 %v190, %v188
    %v225 = vpack.c.b16 %v191, %v189
    %v226 = vpack.c.b16 %v194, %v192
    %v227 = vpack.c.b16 %v195, %v193
    %260 = vmatprep.subr.bf16.mxu0 %v197
    %261 = vmatpush1.bf16.msra.mxu0 %v196
    %262 = vmatprep.subr.bf16.mxu0 %v199
    %263 = vmatpush1.bf16.msra.mxu0 %v198
    %264 = vmatprep.subr.bf16.mxu0 %v201
    %265 = vmatpush1.bf16.msra.mxu0 %v200
    %266 = vmatprep.subr.bf16.mxu0 %v203
    %267 = vmatpush1.bf16.msra.mxu0 %v202
    %268 = vmatprep.subr.bf16.mxu0 %v205
    %269 = vmatpush1.bf16.msra.mxu0 %v204
    %270 = vmatprep.subr.bf16.mxu0 %v207
    %271 = vmatpush1.bf16.msra.mxu0 %v206
    %272 = vmatprep.subr.bf16.mxu0 %v209
    %273 = vmatpush1.bf16.msra.mxu0 %v208
    %274 = vmatprep.subr.bf16.mxu0 %v211
    %275 = vmatpush1.bf16.msra.mxu0 %v210
    %276 = vmatprep.subr.bf16.mxu0 %v213
    %277 = vmatpush1.bf16.msra.mxu0 %v212
    %278 = vmatprep.subr.bf16.mxu0 %v215
    %279 = vmatpush1.bf16.msra.mxu0 %v214
    %280 = vmatprep.subr.bf16.mxu0 %v217
    %281 = vmatpush1.bf16.msra.mxu0 %v216
    %282 = vmatprep.subr.bf16.mxu0 %v219
    %283 = vmatpush1.bf16.msra.mxu0 %v218
    %284 = vmatprep.subr.bf16.mxu0 %v221
    %285 = vmatpush1.bf16.msra.mxu0 %v220
    %286 = vmatprep.subr.bf16.mxu0 %v223
    %287 = vmatpush1.bf16.msra.mxu0 %v222
    %288 = vmatprep.subr.bf16.mxu0 %v225
    %289 = vmatpush1.bf16.msra.mxu0 %v224
    %290 = vmatprep.subr.bf16.mxu0 %v227
    %291 = vmatpush1.bf16.msra.mxu0 %v226
    %292 = vmatprep.mubr.bf16.mxu0 %v80
    %293 = vmatmul.mubr.bf16.gmra.mrb[0].mxu0 %v79
    %v294 = vpop.f32.mrb[0].mxu0
    %v295 = vadd.f32 %v95, %v294
    %v296 = vpop.f32.mrb[0].mxu0
    %v297 = vadd.f32 %v99, %v296
    %v298 = vpop.f32.mrb[0].mxu0
    %v299 = vadd.f32 %v95, %v298
    %v300 = vpop.f32.mrb[0].mxu0
    %v301 = vadd.f32 %v99, %v300
    %302 = vdwg.mxu0
    %v303 = vmax.f32 %v295, 0.0
    %v304 = vmax.f32 %v297, 0.0
    %v305 = vmax.f32 %v299, 0.0
    %v306 = vmax.f32 %v301, 0.0
    %v307 = vrot.slane %v303, 4
    %v308 = vadd.f32 %v303, %v307
    %v309 = vrot.slane %v308, 2
    %v310 = vadd.f32 %v308, %v309
    %v311 = vrot.slane %v310, 1
    %v312 = vadd.f32 %v310, %v311
    %v313 = vrot.slane %v304, 4
    %v314 = vadd.f32 %v304, %v313
    %v315 = vrot.slane %v314, 2
    %v316 = vadd.f32 %v314, %v315
    %v317 = vrot.slane %v316, 1
    %v318 = vadd.f32 %v316, %v317
    %v319 = vrcp.pop 8.0
    %v320 = vmul.f32 %v312, %v319
    %v321 = vmul.f32 %v318, %v319
    %v322 = vmul.f32 %v303, %v303
    %v323 = vmul.f32 %v304, %v304
    %v324 = vrot.slane %v322, 4
    %v325 = vadd.f32 %v322, %v324
    %v326 = vrot.slane %v325, 2
    %v327 = vadd.f32 %v325, %v326
    %v328 = vrot.slane %v327, 1
    %v329 = vadd.f32 %v327, %v328
    %v330 = vrot.slane %v323, 4
    %v331 = vadd.f32 %v323, %v330
    %v332 = vrot.slane %v331, 2
    %v333 = vadd.f32 %v331, %v332
    %v334 = vrot.slane %v333, 1
    %v335 = vadd.f32 %v333, %v334
    %v336 = vmul.f32 %v329, %v319
    %v337 = vmul.f32 %v335, %v319
    %v338 = vmul.f32 %v320, %v320
    %v339 = vmul.f32 %v321, %v321
    %v340 = vsub.f32 %v336, %v338
    %v341 = vsub.f32 %v337, %v339
    %v342 = vmax.f32 %v340, 0.0
    %v343 = vmax.f32 %v341, 0.0
    %v344 = vadd.f32 %v342, 1e-05
    %v345 = vadd.f32 %v343, 1e-05
    %v346 = vrsqrt.pop %v344
    %v347 = vrsqrt.pop %v345
    %v350 = vcombine.low %v346, %v347
    %v351 = vrot.slane %v350, 7
    %v353 = vmul.f32 %v78, %v351
    %v355 = vlaneseq
    %v356 = vshrl.u32 %v355, 7
    %v357 = vsub.s32 1, %v356
    %v358 = vrot.slane %v353, %v357
    %v359 = vlaneseq
    %v360 = vshrl.u32 %v359, 7
    %v361 = vsub.s32 5, %v360
    %v362 = vrot.slane %v353, %v361
    %v365 = vmul.f32 %v320, %v358
    %v366 = vmul.f32 %v321, %v362
    %v369 = vcombine.low %v365, %v366
    %v370 = vrot.slane %v369, 6
    %v372 = vsub.f32 %v78, %v370
    %v373 = vlaneseq
    %v374 = vshrl.u32 %v373, 7
    %v375 = vsub.s32 1, %v374
    %v376 = vrot.slane %v358, %v375
    %v377 = vlaneseq
    %v378 = vshrl.u32 %v377, 7
    %v379 = vsub.s32 1, %v378
    %v380 = vrot.slane %v362, %v379
    %v381 = vmul.f32 %v303, %v376
    %v382 = vmul.f32 %v304, %v380
    %v384 = vlaneseq
    %v385 = vshrl.u32 %v384, 7
    %v386 = vsub.s32 2, %v385
    %v387 = vrot.slane %v372, %v386
    %v388 = vlaneseq
    %v389 = vshrl.u32 %v388, 7
    %v390 = vsub.s32 6, %v389
    %v391 = vrot.slane %v372, %v390
    %v394 = vlaneseq
    %v395 = vshrl.u32 %v394, 7
    %v396 = vsub.s32 2, %v395
    %v397 = vrot.slane %v387, %v396
    %v398 = vlaneseq
    %v399 = vshrl.u32 %v398, 7
    %v400 = vsub.s32 2, %v399
    %v401 = vrot.slane %v391, %v400
    %v402 = vadd.f32 %v381, %v397
    %v403 = vadd.f32 %v382, %v401
    %v404 = vrot.slane %v305, 4
    %v405 = vadd.f32 %v305, %v404
    %v406 = vrot.slane %v405, 2
    %v407 = vadd.f32 %v405, %v406
    %v408 = vrot.slane %v407, 1
    %v409 = vadd.f32 %v407, %v408
    %v410 = vrot.slane %v306, 4
    %v411 = vadd.f32 %v306, %v410
    %v412 = vrot.slane %v411, 2
    %v413 = vadd.f32 %v411, %v412
    %v414 = vrot.slane %v413, 1
    %v415 = vadd.f32 %v413, %v414
    %v416 = vmul.f32 %v409, %v319
    %v417 = vmul.f32 %v415, %v319
    %v418 = vmul.f32 %v305, %v305
    %v419 = vmul.f32 %v306, %v306
    %v420 = vrot.slane %v418, 4
    %v421 = vadd.f32 %v418, %v420
    %v422 = vrot.slane %v421, 2
    %v423 = vadd.f32 %v421, %v422
    %v424 = vrot.slane %v423, 1
    %v425 = vadd.f32 %v423, %v424
    %v426 = vrot.slane %v419, 4
    %v427 = vadd.f32 %v419, %v426
    %v428 = vrot.slane %v427, 2
    %v429 = vadd.f32 %v427, %v428
    %v430 = vrot.slane %v429, 1
    %v431 = vadd.f32 %v429, %v430
    %v432 = vmul.f32 %v425, %v319
    %v433 = vmul.f32 %v431, %v319
    %v434 = vmul.f32 %v416, %v416
    %v435 = vmul.f32 %v417, %v417
    %v436 = vsub.f32 %v432, %v434
    %v437 = vsub.f32 %v433, %v435
    %v438 = vmax.f32 %v436, 0.0
    %v439 = vmax.f32 %v437, 0.0
    %v440 = vadd.f32 %v438, 1e-05
    %v441 = vadd.f32 %v439, 1e-05
    %v442 = vrsqrt.pop %v440
    %v443 = vrsqrt.pop %v441
    %v446 = vcombine.low %v442, %v443
    %v447 = vrot.slane %v446, 7
    %v449 = vmul.f32 %v78, %v447
    %v451 = vlaneseq
    %v452 = vshrl.u32 %v451, 7
    %v453 = vsub.s32 1, %v452
    %v454 = vrot.slane %v449, %v453
    %v455 = vlaneseq
    %v456 = vshrl.u32 %v455, 7
    %v457 = vsub.s32 5, %v456
    %v458 = vrot.slane %v449, %v457
    %v461 = vmul.f32 %v416, %v454
    %v462 = vmul.f32 %v417, %v458
    %v465 = vcombine.low %v461, %v462
    %v466 = vrot.slane %v465, 6
    %v468 = vsub.f32 %v78, %v466
    %v469 = vlaneseq
    %v470 = vshrl.u32 %v469, 7
    %v471 = vsub.s32 1, %v470
    %v472 = vrot.slane %v454, %v471
    %v473 = vlaneseq
    %v474 = vshrl.u32 %v473, 7
    %v475 = vsub.s32 1, %v474
    %v476 = vrot.slane %v458, %v475
    %v477 = vmul.f32 %v305, %v472
    %v478 = vmul.f32 %v306, %v476
    %v480 = vlaneseq
    %v481 = vshrl.u32 %v480, 7
    %v482 = vsub.s32 2, %v481
    %v483 = vrot.slane %v468, %v482
    %v484 = vlaneseq
    %v485 = vshrl.u32 %v484, 7
    %v486 = vsub.s32 6, %v485
    %v487 = vrot.slane %v468, %v486
    %v490 = vlaneseq
    %v491 = vshrl.u32 %v490, 7
    %v492 = vsub.s32 2, %v491
    %v493 = vrot.slane %v483, %v492
    %v494 = vlaneseq
    %v495 = vshrl.u32 %v494, 7
    %v496 = vsub.s32 2, %v495
    %v497 = vrot.slane %v487, %v496
    %v498 = vadd.f32 %v477, %v493
    %v499 = vadd.f32 %v478, %v497
    %s500 = scalar_lea.vmem [#allocation2], 256
    %v501 = vld [vmem:[%s500] sm:$0xff]
    %v502 = vld [vmem:[%s500 + $0x8] sm:$0xff]
    %v503 = vld [vmem:[%s500 + $0x10] sm:$0xff]
    %v504 = vld [vmem:[%s500 + $0x18] sm:$0xff]
    %v505 = vld [vmem:[%s500 + $0x20] sm:$0xff]
    %v506 = vld [vmem:[%s500 + $0x28] sm:$0xff]
    %v507 = vld [vmem:[%s500 + $0x30] sm:$0xff]
    %v508 = vld [vmem:[%s500 + $0x38] sm:$0xff]
    %v509 = vld [vmem:[%s500 + $0x40] sm:$0xff]
    %v510 = vld [vmem:[%s500 + $0x48] sm:$0xff]
    %v511 = vld [vmem:[%s500 + $0x50] sm:$0xff]
    %v512 = vld [vmem:[%s500 + $0x58] sm:$0xff]
    %v513 = vld [vmem:[%s500 + $0x60] sm:$0xff]
    %v514 = vld [vmem:[%s500 + $0x68] sm:$0xff]
    %v515 = vld [vmem:[%s500 + $0x70] sm:$0xff]
    %v516 = vld [vmem:[%s500 + $0x78] sm:$0xff]
    %v517 = vld [vmem:[%s500 + $0x80] sm:$0xff]
    %v518 = vld [vmem:[%s500 + $0x88] sm:$0xff]
    %v519 = vld [vmem:[%s500 + $0x90] sm:$0xff]
    %v520 = vld [vmem:[%s500 + $0x98] sm:$0xff]
    %v521 = vld [vmem:[%s500 + $0xa0] sm:$0xff]
    %v522 = vld [vmem:[%s500 + $0xa8] sm:$0xff]
    %v523 = vld [vmem:[%s500 + $0xb0] sm:$0xff]
    %v524 = vld [vmem:[%s500 + $0xb8] sm:$0xff]
    %v525 = vld [vmem:[%s500 + $0xc0] sm:$0xff]
    %v526 = vld [vmem:[%s500 + $0xc8] sm:$0xff]
    %v527 = vld [vmem:[%s500 + $0xd0] sm:$0xff]
    %v528 = vld [vmem:[%s500 + $0xd8] sm:$0xff]
    %v529 = vld [vmem:[%s500 + $0xe0] sm:$0xff]
    %v530 = vld [vmem:[%s500 + $0xe8] sm:$0xff]
    %v531 = vld [vmem:[%s500 + $0xf0] sm:$0xff]
    %v532 = vld [vmem:[%s500 + $0xf8] sm:$0xff]
    %s533 = scalar_lea.vmem [#allocation4], 8
    %v534 = vld [vmem:[%s533] sm:$0x77]
    %v535 = vpack.c.bf16 %v498, %v402
    %v536 = vpack.c.bf16 %v499, %v403
    %v538 = vlaneseq
    %v539 = vshrl.u32 %v538, 7
    %v540 = vsub.s32 0, %v539
    %v541 = vrot.slane %v534, %v540
    %v542 = vlaneseq
    %v543 = vshrl.u32 %v542, 7
    %v544 = vsub.s32 4, %v543
    %v545 = vrot.slane %v534, %v544
    %v548 = vlaneseq
    %v549 = vshrl.u32 %v548, 7
    %v550 = vsub.s32 0, %v549
    %v551 = vrot.slane %v541, %v550
    %v552 = vlaneseq
    %v553 = vshrl.u32 %v552, 7
    %v554 = vsub.s32 0, %v553
    %v555 = vrot.slane %v545, %v554
    %v588 = vunpack.c.l.b16 %v501
    %v589 = vunpack.c.h.b16 %v501
    %v590 = vunpack.c.l.b16 %v502
    %v591 = vunpack.c.h.b16 %v502
    %v592 = vunpack.c.l.b16 %v503
    %v593 = vunpack.c.h.b16 %v503
    %v594 = vunpack.c.l.b16 %v504
    %v595 = vunpack.c.h.b16 %v504
    %v596 = vunpack.c.l.b16 %v505
    %v597 = vunpack.c.h.b16 %v505
    %v598 = vunpack.c.l.b16 %v506
    %v599 = vunpack.c.h.b16 %v506
    %v600 = vunpack.c.l.b16 %v507
    %v601 = vunpack.c.h.b16 %v507
    %v602 = vunpack.c.l.b16 %v508
    %v603 = vunpack.c.h.b16 %v508
    %v604 = vunpack.c.l.b16 %v509
    %v605 = vunpack.c.h.b16 %v509
    %v606 = vunpack.c.l.b16 %v510
    %v607 = vunpack.c.h.b16 %v510
    %v608 = vunpack.c.l.b16 %v511
    %v609 = vunpack.c.h.b16 %v511
    %v610 = vunpack.c.l.b16 %v512
    %v611 = vunpack.c.h.b16 %v512
    %v612 = vunpack.c.l.b16 %v513
    %v613 = vunpack.c.h.b16 %v513
    %v614 = vunpack.c.l.b16 %v514
    %v615 = vunpack.c.h.b16 %v514
    %v616 = vunpack.c.l.b16 %v515
    %v617 = vunpack.c.h.b16 %v515
    %v618 = vunpack.c.l.b16 %v516
    %v619 = vunpack.c.h.b16 %v516
    %v620 = vunpack.c.l.b16 %v517
    %v621 = vunpack.c.h.b16 %v517
    %v622 = vunpack.c.l.b16 %v518
    %v623 = vunpack.c.h.b16 %v518
    %v624 = vunpack.c.l.b16 %v519
    %v625 = vunpack.c.h.b16 %v519
    %v626 = vunpack.c.l.b16 %v520
    %v627 = vunpack.c.h.b16 %v520
    %v628 = vunpack.c.l.b16 %v521
    %v629 = vunpack.c.h.b16 %v521
    %v630 = vunpack.c.l.b16 %v522
    %v631 = vunpack.c.h.b16 %v522
    %v632 = vunpack.c.l.b16 %v523
    %v633 = vunpack.c.h.b16 %v523
    %v634 = vunpack.c.l.b16 %v524
    %v635 = vunpack.c.h.b16 %v524
    %v636 = vunpack.c.l.b16 %v525
    %v637 = vunpack.c.h.b16 %v525
    %v638 = vunpack.c.l.b16 %v526
    %v639 = vunpack.c.h.b16 %v526
    %v640 = vunpack.c.l.b16 %v527
    %v641 = vunpack.c.h.b16 %v527
    %v642 = vunpack.c.l.b16 %v528
    %v643 = vunpack.c.h.b16 %v528
    %v644 = vunpack.c.l.b16 %v529
    %v645 = vunpack.c.h.b16 %v529
    %v646 = vunpack.c.l.b16 %v530
    %v647 = vunpack.c.h.b16 %v530
    %v648 = vunpack.c.l.b16 %v531
    %v649 = vunpack.c.h.b16 %v531
    %v650 = vunpack.c.l.b16 %v532
    %v651 = vunpack.c.h.b16 %v532
    %v652 = vpack.c.b16 %v590, %v588
    %v653 = vpack.c.b16 %v591, %v589
    %v654 = vpack.c.b16 %v594, %v592
    %v655 = vpack.c.b16 %v595, %v593
    %v656 = vpack.c.b16 %v598, %v596
    %v657 = vpack.c.b16 %v599, %v597
    %v658 = vpack.c.b16 %v602, %v600
    %v659 = vpack.c.b16 %v603, %v601
    %v660 = vpack.c.b16 %v606, %v604
    %v661 = vpack.c.b16 %v607, %v605
    %v662 = vpack.c.b16 %v610, %v608
    %v663 = vpack.c.b16 %v611, %v609
    %v664 = vpack.c.b16 %v614, %v612
    %v665 = vpack.c.b16 %v615, %v613
    %v666 = vpack.c.b16 %v618, %v616
    %v667 = vpack.c.b16 %v619, %v617
    %v668 = vpack.c.b16 %v622, %v620
    %v669 = vpack.c.b16 %v623, %v621
    %v670 = vpack.c.b16 %v626, %v624
    %v671 = vpack.c.b16 %v627, %v625
    %v672 = vpack.c.b16 %v630, %v628
    %v673 = vpack.c.b16 %v631, %v629
    %v674 = vpack.c.b16 %v634, %v632
    %v675 = vpack.c.b16 %v635, %v633
    %v676 = vpack.c.b16 %v638, %v636
    %v677 = vpack.c.b16 %v639, %v637
    %v678 = vpack.c.b16 %v642, %v640
    %v679 = vpack.c.b16 %v643, %v641
    %v680 = vpack.c.b16 %v646, %v644
    %v681 = vpack.c.b16 %v647, %v645
    %v682 = vpack.c.b16 %v650, %v648
    %v683 = vpack.c.b16 %v651, %v649
    %716 = vmatprep.subr.bf16.mxu0 %v653
    %717 = vmatpush1.bf16.msra.mxu0 %v652
    %718 = vmatprep.subr.bf16.mxu0 %v655
    %719 = vmatpush1.bf16.msra.mxu0 %v654
    %720 = vmatprep.subr.bf16.mxu0 %v657
    %721 = vmatpush1.bf16.msra.mxu0 %v656
    %722 = vmatprep.subr.bf16.mxu0 %v659
    %723 = vmatpush1.bf16.msra.mxu0 %v658
    %724 = vmatprep.subr.bf16.mxu0 %v661
    %725 = vmatpush1.bf16.msra.mxu0 %v660
    %726 = vmatprep.subr.bf16.mxu0 %v663
    %727 = vmatpush1.bf16.msra.mxu0 %v662
    %728 = vmatprep.subr.bf16.mxu0 %v665
    %729 = vmatpush1.bf16.msra.mxu0 %v664
    %730 = vmatprep.subr.bf16.mxu0 %v667
    %731 = vmatpush1.bf16.msra.mxu0 %v666
    %732 = vmatprep.subr.bf16.mxu0 %v669
    %733 = vmatpush1.bf16.msra.mxu0 %v668
    %734 = vmatprep.subr.bf16.mxu0 %v671
    %735 = vmatpush1.bf16.msra.mxu0 %v670
    %736 = vmatprep.subr.bf16.mxu0 %v673
    %737 = vmatpush1.bf16.msra.mxu0 %v672
    %738 = vmatprep.subr.bf16.mxu0 %v675
    %739 = vmatpush1.bf16.msra.mxu0 %v674
    %740 = vmatprep.subr.bf16.mxu0 %v677
    %741 = vmatpush1.bf16.msra.mxu0 %v676
    %742 = vmatprep.subr.bf16.mxu0 %v679
    %743 = vmatpush1.bf16.msra.mxu0 %v678
    %744 = vmatprep.subr.bf16.mxu0 %v681
    %745 = vmatpush1.bf16.msra.mxu0 %v680
    %746 = vmatprep.subr.bf16.mxu0 %v683
    %747 = vmatpush1.bf16.msra.mxu0 %v682
    %748 = vmatprep.mubr.bf16.mxu0 %v536
    %749 = vmatmul.mubr.bf16.gmra.mrb[0].mxu0 %v535
    %v750 = vpop.f32.mrb[0].mxu0
    %v751 = vadd.f32 %v551, %v750
    %v752 = vpop.f32.mrb[0].mxu0
    %v753 = vadd.f32 %v555, %v752
    %v754 = vpop.f32.mrb[0].mxu0
    %v755 = vadd.f32 %v551, %v754
    %v756 = vpop.f32.mrb[0].mxu0
    %v757 = vadd.f32 %v555, %v756
    %758 = vdwg.mxu0
    %v759 = vmax.f32 %v751, 0.0
    %v760 = vmax.f32 %v753, 0.0
    %v761 = vmax.f32 %v755, 0.0
    %v762 = vmax.f32 %v757, 0.0
    %v763 = vrot.slane %v759, 4
    %v764 = vadd.f32 %v759, %v763
    %v765 = vrot.slane %v764, 2
    %v766 = vadd.f32 %v764, %v765
    %v767 = vrot.slane %v766, 1
    %v768 = vadd.f32 %v766, %v767
    %v769 = vrot.slane %v760, 4
    %v770 = vadd.f32 %v760, %v769
    %v771 = vrot.slane %v770, 2
    %v772 = vadd.f32 %v770, %v771
    %v773 = vrot.slane %v772, 1
    %v774 = vadd.f32 %v772, %v773
    %v775 = vmul.f32 %v768, %v319
    %v776 = vmul.f32 %v774, %v319
    %v777 = vmul.f32 %v759, %v759
    %v778 = vmul.f32 %v760, %v760
    %v779 = vrot.slane %v777, 4
    %v780 = vadd.f32 %v777, %v779
    %v781 = vrot.slane %v780, 2
    %v782 = vadd.f32 %v780, %v781
    %v783 = vrot.slane %v782, 1
    %v784 = vadd.f32 %v782, %v783
    %v785 = vrot.slane %v778, 4
    %v786 = vadd.f32 %v778, %v785
    %v787 = vrot.slane %v786, 2
    %v788 = vadd.f32 %v786, %v787
    %v789 = vrot.slane %v788, 1
    %v790 = vadd.f32 %v788, %v789
    %v791 = vmul.f32 %v784, %v319
    %v792 = vmul.f32 %v790, %v319
    %v793 = vmul.f32 %v775, %v775
    %v794 = vmul.f32 %v776, %v776
    %v795 = vsub.f32 %v791, %v793
    %v796 = vsub.f32 %v792, %v794
    %v797 = vmax.f32 %v795, 0.0
    %v798 = vmax.f32 %v796, 0.0
    %v799 = vadd.f32 %v797, 1e-05
    %v800 = vadd.f32 %v798, 1e-05
    %v801 = vrsqrt.pop %v799
    %v802 = vrsqrt.pop %v800
    %v805 = vcombine.low %v801, %v802
    %v806 = vrot.slane %v805, 7
    %v808 = vmul.f32 %v534, %v806
    %v810 = vlaneseq
    %v811 = vshrl.u32 %v810, 7
    %v812 = vsub.s32 1, %v811
    %v813 = vrot.slane %v808, %v812
    %v814 = vlaneseq
    %v815 = vshrl.u32 %v814, 7
    %v816 = vsub.s32 5, %v815
    %v817 = vrot.slane %v808, %v816
    %v820 = vmul.f32 %v775, %v813
    %v821 = vmul.f32 %v776, %v817
    %v824 = vcombine.low %v820, %v821
    %v825 = vrot.slane %v824, 6
    %v827 = vsub.f32 %v534, %v825
    %v828 = vlaneseq
    %v829 = vshrl.u32 %v828, 7
    %v830 = vsub.s32 1, %v829
    %v831 = vrot.slane %v813, %v830
    %v832 = vlaneseq
    %v833 = vshrl.u32 %v832, 7
    %v834 = vsub.s32 1, %v833
    %v835 = vrot.slane %v817, %v834
    %v836 = vmul.f32 %v759, %v831
    %v837 = vmul.f32 %v760, %v835
    %v839 = vlaneseq
    %v840 = vshrl.u32 %v839, 7
    %v841 = vsub.s32 2, %v840
    %v842 = vrot.slane %v827, %v841
    %v843 = vlaneseq
    %v844 = vshrl.u32 %v843, 7
    %v845 = vsub.s32 6, %v844
    %v846 = vrot.slane %v827, %v845
    %v849 = vlaneseq
    %v850 = vshrl.u32 %v849, 7
    %v851 = vsub.s32 2, %v850
    %v852 = vrot.slane %v842, %v851
    %v853 = vlaneseq
    %v854 = vshrl.u32 %v853, 7
    %v855 = vsub.s32 2, %v854
    %v856 = vrot.slane %v846, %v855
    %v857 = vadd.f32 %v836, %v852
    %v858 = vadd.f32 %v837, %v856
    %v859 = vrot.slane %v761, 4
    %v860 = vadd.f32 %v761, %v859
    %v861 = vrot.slane %v860, 2
    %v862 = vadd.f32 %v860, %v861
    %v863 = vrot.slane %v862, 1
    %v864 = vadd.f32 %v862, %v863
    %v865 = vrot.slane %v762, 4
    %v866 = vadd.f32 %v762, %v865
    %v867 = vrot.slane %v866, 2
    %v868 = vadd.f32 %v866, %v867
    %v869 = vrot.slane %v868, 1
    %v870 = vadd.f32 %v868, %v869
    %v871 = vmul.f32 %v864, %v319
    %v872 = vmul.f32 %v870, %v319
    %v873 = vmul.f32 %v761, %v761
    %v874 = vmul.f32 %v762, %v762
    %v875 = vrot.slane %v873, 4
    %v876 = vadd.f32 %v873, %v875
    %v877 = vrot.slane %v876, 2
    %v878 = vadd.f32 %v876, %v877
    %v879 = vrot.slane %v878, 1
    %v880 = vadd.f32 %v878, %v879
    %v881 = vrot.slane %v874, 4
    %v882 = vadd.f32 %v874, %v881
    %v883 = vrot.slane %v882, 2
    %v884 = vadd.f32 %v882, %v883
    %v885 = vrot.slane %v884, 1
    %v886 = vadd.f32 %v884, %v885
    %v887 = vmul.f32 %v880, %v319
    %v888 = vmul.f32 %v886, %v319
    %v889 = vmul.f32 %v871, %v871
    %v890 = vmul.f32 %v872, %v872
    %v891 = vsub.f32 %v887, %v889
    %v892 = vsub.f32 %v888, %v890
    %v893 = vmax.f32 %v891, 0.0
    %v894 = vmax.f32 %v892, 0.0
    %v895 = vadd.f32 %v893, 1e-05
    %v896 = vadd.f32 %v894, 1e-05
    %v897 = vrsqrt.pop %v895
    %v898 = vrsqrt.pop %v896
    %v901 = vcombine.low %v897, %v898
    %v902 = vrot.slane %v901, 7
    %v904 = vmul.f32 %v534, %v902
    %v906 = vlaneseq
    %v907 = vshrl.u32 %v906, 7
    %v908 = vsub.s32 1, %v907
    %v909 = vrot.slane %v904, %v908
    %v910 = vlaneseq
    %v911 = vshrl.u32 %v910, 7
    %v912 = vsub.s32 5, %v911
    %v913 = vrot.slane %v904, %v912
    %v916 = vmul.f32 %v871, %v909
    %v917 = vmul.f32 %v872, %v913
    %v920 = vcombine.low %v916, %v917
    %v921 = vrot.slane %v920, 6
    %v923 = vsub.f32 %v534, %v921
    %v924 = vlaneseq
    %v925 = vshrl.u32 %v924, 7
    %v926 = vsub.s32 1, %v925
    %v927 = vrot.slane %v909, %v926
    %v928 = vlaneseq
    %v929 = vshrl.u32 %v928, 7
    %v930 = vsub.s32 1, %v929
    %v931 = vrot.slane %v913, %v930
    %v932 = vmul.f32 %v761, %v927
    %v933 = vmul.f32 %v762, %v931
    %v935 = vlaneseq
    %v936 = vshrl.u32 %v935, 7
    %v937 = vsub.s32 2, %v936
    %v938 = vrot.slane %v923, %v937
    %v939 = vlaneseq
    %v940 = vshrl.u32 %v939, 7
    %v941 = vsub.s32 6, %v940
    %v942 = vrot.slane %v923, %v941
    %v945 = vlaneseq
    %v946 = vshrl.u32 %v945, 7
    %v947 = vsub.s32 2, %v946
    %v948 = vrot.slane %v938, %v947
    %v949 = vlaneseq
    %v950 = vshrl.u32 %v949, 7
    %v951 = vsub.s32 2, %v950
    %v952 = vrot.slane %v942, %v951
    %v953 = vadd.f32 %v932, %v948
    %v954 = vadd.f32 %v933, %v952
    %s955 = scalar_lea.vmem [#allocation2], 512
    %v956 = vld [vmem:[%s955] sm:$0xff]
    %v957 = vld [vmem:[%s955 + $0x8] sm:$0xff]
    %v958 = vld [vmem:[%s955 + $0x10] sm:$0xff]
    %v959 = vld [vmem:[%s955 + $0x18] sm:$0xff]
    %v960 = vld [vmem:[%s955 + $0x20] sm:$0xff]
    %v961 = vld [vmem:[%s955 + $0x28] sm:$0xff]
    %v962 = vld [vmem:[%s955 + $0x30] sm:$0xff]
    %v963 = vld [vmem:[%s955 + $0x38] sm:$0xff]
    %v964 = vld [vmem:[%s955 + $0x40] sm:$0xff]
    %v965 = vld [vmem:[%s955 + $0x48] sm:$0xff]
    %v966 = vld [vmem:[%s955 + $0x50] sm:$0xff]
    %v967 = vld [vmem:[%s955 + $0x58] sm:$0xff]
    %v968 = vld [vmem:[%s955 + $0x60] sm:$0xff]
    %v969 = vld [vmem:[%s955 + $0x68] sm:$0xff]
    %v970 = vld [vmem:[%s955 + $0x70] sm:$0xff]
    %v971 = vld [vmem:[%s955 + $0x78] sm:$0xff]
    %v972 = vld [vmem:[%s955 + $0x80] sm:$0xff]
    %v973 = vld [vmem:[%s955 + $0x88] sm:$0xff]
    %v974 = vld [vmem:[%s955 + $0x90] sm:$0xff]
    %v975 = vld [vmem:[%s955 + $0x98] sm:$0xff]
    %v976 = vld [vmem:[%s955 + $0xa0] sm:$0xff]
    %v977 = vld [vmem:[%s955 + $0xa8] sm:$0xff]
    %v978 = vld [vmem:[%s955 + $0xb0] sm:$0xff]
    %v979 = vld [vmem:[%s955 + $0xb8] sm:$0xff]
    %v980 = vld [vmem:[%s955 + $0xc0] sm:$0xff]
    %v981 = vld [vmem:[%s955 + $0xc8] sm:$0xff]
    %v982 = vld [vmem:[%s955 + $0xd0] sm:$0xff]
    %v983 = vld [vmem:[%s955 + $0xd8] sm:$0xff]
    %v984 = vld [vmem:[%s955 + $0xe0] sm:$0xff]
    %v985 = vld [vmem:[%s955 + $0xe8] sm:$0xff]
    %v986 = vld [vmem:[%s955 + $0xf0] sm:$0xff]
    %v987 = vld [vmem:[%s955 + $0xf8] sm:$0xff]
    %s988 = scalar_lea.vmem [#allocation4], 16
    %v989 = vld [vmem:[%s988] sm:$0x77]
    %v990 = vpack.c.bf16 %v953, %v857
    %v991 = vpack.c.bf16 %v954, %v858
    %v993 = vlaneseq
    %v994 = vshrl.u32 %v993, 7
    %v995 = vsub.s32 0, %v994
    %v996 = vrot.slane %v989, %v995
    %v997 = vlaneseq
    %v998 = vshrl.u32 %v997, 7
    %v999 = vsub.s32 4, %v998
    %v1000 = vrot.slane %v989, %v999
    %v1003 = vlaneseq
    %v1004 = vshrl.u32 %v1003, 7
    %v1005 = vsub.s32 0, %v1004
    %v1006 = vrot.slane %v996, %v1005
    %v1007 = vlaneseq
    %v1008 = vshrl.u32 %v1007, 7
    %v1009 = vsub.s32 0, %v1008
    %v1010 = vrot.slane %v1000, %v1009
    %v1043 = vunpack.c.l.b16 %v956
    %v1044 = vunpack.c.h.b16 %v956
    %v1045 = vunpack.c.l.b16 %v957
    %v1046 = vunpack.c.h.b16 %v957
    %v1047 = vunpack.c.l.b16 %v958
    %v1048 = vunpack.c.h.b16 %v958
    %v1049 = vunpack.c.l.b16 %v959
    %v1050 = vunpack.c.h.b16 %v959
    %v1051 = vunpack.c.l.b16 %v960
    %v1052 = vunpack.c.h.b16 %v960
    %v1053 = vunpack.c.l.b16 %v961
    %v1054 = vunpack.c.h.b16 %v961
    %v1055 = vunpack.c.l.b16 %v962
    %v1056 = vunpack.c.h.b16 %v962
    %v1057 = vunpack.c.l.b16 %v963
    %v1058 = vunpack.c.h.b16 %v963
    %v1059 = vunpack.c.l.b16 %v964
    %v1060 = vunpack.c.h.b16 %v964
    %v1061 = vunpack.c.l.b16 %v965
    %v1062 = vunpack.c.h.b16 %v965
    %v1063 = vunpack.c.l.b16 %v966
    %v1064 = vunpack.c.h.b16 %v966
    %v1065 = vunpack.c.l.b16 %v967
    %v1066 = vunpack.c.h.b16 %v967
    %v1067 = vunpack.c.l.b16 %v968
    %v1068 = vunpack.c.h.b16 %v968
    %v1069 = vunpack.c.l.b16 %v969
    %v1070 = vunpack.c.h.b16 %v969
    %v1071 = vunpack.c.l.b16 %v970
    %v1072 = vunpack.c.h.b16 %v970
    %v1073 = vunpack.c.l.b16 %v971
    %v1074 = vunpack.c.h.b16 %v971
    %v1075 = vunpack.c.l.b16 %v972
    %v1076 = vunpack.c.h.b16 %v972
    %v1077 = vunpack.c.l.b16 %v973
    %v1078 = vunpack.c.h.b16 %v973
    %v1079 = vunpack.c.l.b16 %v974
    %v1080 = vunpack.c.h.b16 %v974
    %v1081 = vunpack.c.l.b16 %v975
    %v1082 = vunpack.c.h.b16 %v975
    %v1083 = vunpack.c.l.b16 %v976
    %v1084 = vunpack.c.h.b16 %v976
    %v1085 = vunpack.c.l.b16 %v977
    %v1086 = vunpack.c.h.b16 %v977
    %v1087 = vunpack.c.l.b16 %v978
    %v1088 = vunpack.c.h.b16 %v978
    %v1089 = vunpack.c.l.b16 %v979
    %v1090 = vunpack.c.h.b16 %v979
    %v1091 = vunpack.c.l.b16 %v980
    %v1092 = vunpack.c.h.b16 %v980
    %v1093 = vunpack.c.l.b16 %v981
    %v1094 = vunpack.c.h.b16 %v981
    %v1095 = vunpack.c.l.b16 %v982
    %v1096 = vunpack.c.h.b16 %v982
    %v1097 = vunpack.c.l.b16 %v983
    %v1098 = vunpack.c.h.b16 %v983
    %v1099 = vunpack.c.l.b16 %v984
    %v1100 = vunpack.c.h.b16 %v984
    %v1101 = vunpack.c.l.b16 %v985
    %v1102 = vunpack.c.h.b16 %v985
    %v1103 = vunpack.c.l.b16 %v986
    %v1104 = vunpack.c.h.b16 %v986
    %v1105 = vunpack.c.l.b16 %v987
    %v1106 = vunpack.c.h.b16 %v987
    %v1107 = vpack.c.b16 %v1045, %v1043
    %v1108 = vpack.c.b16 %v1046, %v1044
    %v1109 = vpack.c.b16 %v1049, %v1047
    %v1110 = vpack.c.b16 %v1050, %v1048
    %v1111 = vpack.c.b16 %v1053, %v1051
    %v1112 = vpack.c.b16 %v1054, %v1052
    %v1113 = vpack.c.b16 %v1057, %v1055
    %v1114 = vpack.c.b16 %v1058, %v1056
    %v1115 = vpack.c.b16 %v1061, %v1059
    %v1116 = vpack.c.b16 %v1062, %v1060
    %v1117 = vpack.c.b16 %v1065, %v1063
    %v1118 = vpack.c.b16 %v1066, %v1064
    %v1119 = vpack.c.b16 %v1069, %v1067
    %v1120 = vpack.c.b16 %v1070, %v1068
    %v1121 = vpack.c.b16 %v1073, %v1071
    %v1122 = vpack.c.b16 %v1074, %v1072
    %v1123 = vpack.c.b16 %v1077, %v1075
    %v1124 = vpack.c.b16 %v1078, %v1076
    %v1125 = vpack.c.b16 %v1081, %v1079
    %v1126 = vpack.c.b16 %v1082, %v1080
    %v1127 = vpack.c.b16 %v1085, %v1083
    %v1128 = vpack.c.b16 %v1086, %v1084
    %v1129 = vpack.c.b16 %v1089, %v1087
    %v1130 = vpack.c.b16 %v1090, %v1088
    %v1131 = vpack.c.b16 %v1093, %v1091
    %v1132 = vpack.c.b16 %v1094, %v1092
    %v1133 = vpack.c.b16 %v1097, %v1095
    %v1134 = vpack.c.b16 %v1098, %v1096
    %v1135 = vpack.c.b16 %v1101, %v1099
    %v1136 = vpack.c.b16 %v1102, %v1100
    %v1137 = vpack.c.b16 %v1105, %v1103
    %v1138 = vpack.c.b16 %v1106, %v1104
    %1171 = vmatprep.subr.bf16.mxu0 %v1108
    %1172 = vmatpush1.bf16.msra.mxu0 %v1107
    %1173 = vmatprep.subr.bf16.mxu0 %v1110
    %1174 = vmatpush1.bf16.msra.mxu0 %v1109
    %1175 = vmatprep.subr.bf16.mxu0 %v1112
    %1176 = vmatpush1.bf16.msra.mxu0 %v1111
    %1177 = vmatprep.subr.bf16.mxu0 %v1114
    %1178 = vmatpush1.bf16.msra.mxu0 %v1113
    %1179 = vmatprep.subr.bf16.mxu0 %v1116
    %1180 = vmatpush1.bf16.msra.mxu0 %v1115
    %1181 = vmatprep.subr.bf16.mxu0 %v1118
    %1182 = vmatpush1.bf16.msra.mxu0 %v1117
    %1183 = vmatprep.subr.bf16.mxu0 %v1120
    %1184 = vmatpush1.bf16.msra.mxu0 %v1119
    %1185 = vmatprep.subr.bf16.mxu0 %v1122
    %1186 = vmatpush1.bf16.msra.mxu0 %v1121
    %1187 = vmatprep.subr.bf16.mxu0 %v1124
    %1188 = vmatpush1.bf16.msra.mxu0 %v1123
    %1189 = vmatprep.subr.bf16.mxu0 %v1126
    %1190 = vmatpush1.bf16.msra.mxu0 %v1125
    %1191 = vmatprep.subr.bf16.mxu0 %v1128
    %1192 = vmatpush1.bf16.msra.mxu0 %v1127
    %1193 = vmatprep.subr.bf16.mxu0 %v1130
    %1194 = vmatpush1.bf16.msra.mxu0 %v1129
    %1195 = vmatprep.subr.bf16.mxu0 %v1132
    %1196 = vmatpush1.bf16.msra.mxu0 %v1131
    %1197 = vmatprep.subr.bf16.mxu0 %v1134
    %1198 = vmatpush1.bf16.msra.mxu0 %v1133
    %1199 = vmatprep.subr.bf16.mxu0 %v1136
    %1200 = vmatpush1.bf16.msra.mxu0 %v1135
    %1201 = vmatprep.subr.bf16.mxu0 %v1138
    %1202 = vmatpush1.bf16.msra.mxu0 %v1137
    %1203 = vmatprep.mubr.bf16.mxu0 %v991
    %1204 = vmatmul.mubr.bf16.gmra.mrb[0].mxu0 %v990
    %v1205 = vpop.f32.mrb[0].mxu0
    %v1206 = vadd.f32 %v1006, %v1205
    %v1207 = vpop.f32.mrb[0].mxu0
    %v1208 = vadd.f32 %v1010, %v1207
    %v1209 = vpop.f32.mrb[0].mxu0
    %v1210 = vadd.f32 %v1006, %v1209
    %v1211 = vpop.f32.mrb[0].mxu0
    %v1212 = vadd.f32 %v1010, %v1211
    %1213 = vdwg.mxu0
    %v1214 = vmax.f32 %v1206, 0.0
    %v1215 = vmax.f32 %v1208, 0.0
    %v1216 = vmax.f32 %v1210, 0.0
    %v1217 = vmax.f32 %v1212, 0.0
    %v1218 = vrot.slane %v1214, 4
    %v1219 = vadd.f32 %v1214, %v1218
    %v1220 = vrot.slane %v1219, 2
    %v1221 = vadd.f32 %v1219, %v1220
    %v1222 = vrot.slane %v1221, 1
    %v1223 = vadd.f32 %v1221, %v1222
    %v1224 = vrot.slane %v1215, 4
    %v1225 = vadd.f32 %v1215, %v1224
    %v1226 = vrot.slane %v1225, 2
    %v1227 = vadd.f32 %v1225, %v1226
    %v1228 = vrot.slane %v1227, 1
    %v1229 = vadd.f32 %v1227, %v1228
    %v1230 = vmul.f32 %v1223, %v319
    %v1231 = vmul.f32 %v1229, %v319
    %v1232 = vmul.f32 %v1214, %v1214
    %v1233 = vmul.f32 %v1215, %v1215
    %v1234 = vrot.slane %v1232, 4
    %v1235 = vadd.f32 %v1232, %v1234
    %v1236 = vrot.slane %v1235, 2
    %v1237 = vadd.f32 %v1235, %v1236
    %v1238 = vrot.slane %v1237, 1
    %v1239 = vadd.f32 %v1237, %v1238
    %v1240 = vrot.slane %v1233, 4
    %v1241 = vadd.f32 %v1233, %v1240
    %v1242 = vrot.slane %v1241, 2
    %v1243 = vadd.f32 %v1241, %v1242
    %v1244 = vrot.slane %v1243, 1
    %v1245 = vadd.f32 %v1243, %v1244
    %v1246 = vmul.f32 %v1239, %v319
    %v1247 = vmul.f32 %v1245, %v319
    %v1248 = vmul.f32 %v1230, %v1230
    %v1249 = vmul.f32 %v1231, %v1231
    %v1250 = vsub.f32 %v1246, %v1248
    %v1251 = vsub.f32 %v1247, %v1249
    %v1252 = vmax.f32 %v1250, 0.0
    %v1253 = vmax.f32 %v1251, 0.0
    %v1254 = vadd.f32 %v1252, 1e-05
    %v1255 = vadd.f32 %v1253, 1e-05
    %v1256 = vrsqrt.pop %v1254
    %v1257 = vrsqrt.pop %v1255
    %v1260 = vcombine.low %v1256, %v1257
    %v1261 = vrot.slane %v1260, 7
    %v1263 = vmul.f32 %v989, %v1261
    %v1265 = vlaneseq
    %v1266 = vshrl.u32 %v1265, 7
    %v1267 = vsub.s32 1, %v1266
    %v1268 = vrot.slane %v1263, %v1267
    %v1269 = vlaneseq
    %v1270 = vshrl.u32 %v1269, 7
    %v1271 = vsub.s32 5, %v1270
    %v1272 = vrot.slane %v1263, %v1271
    %v1275 = vmul.f32 %v1230, %v1268
    %v1276 = vmul.f32 %v1231, %v1272
    %v1279 = vcombine.low %v1275, %v1276
    %v1280 = vrot.slane %v1279, 6
    %v1282 = vsub.f32 %v989, %v1280
    %v1283 = vlaneseq
    %v1284 = vshrl.u32 %v1283, 7
    %v1285 = vsub.s32 1, %v1284
    %v1286 = vrot.slane %v1268, %v1285
    %v1287 = vlaneseq
    %v1288 = vshrl.u32 %v1287, 7
    %v1289 = vsub.s32 1, %v1288
    %v1290 = vrot.slane %v1272, %v1289
    %v1291 = vmul.f32 %v1214, %v1286
    %v1292 = vmul.f32 %v1215, %v1290
    %v1294 = vlaneseq
    %v1295 = vshrl.u32 %v1294, 7
    %v1296 = vsub.s32 2, %v1295
    %v1297 = vrot.slane %v1282, %v1296
    %v1298 = vlaneseq
    %v1299 = vshrl.u32 %v1298, 7
    %v1300 = vsub.s32 6, %v1299
    %v1301 = vrot.slane %v1282, %v1300
    %v1304 = vlaneseq
    %v1305 = vshrl.u32 %v1304, 7
    %v1306 = vsub.s32 2, %v1305
    %v1307 = vrot.slane %v1297, %v1306
    %v1308 = vlaneseq
    %v1309 = vshrl.u32 %v1308, 7
    %v1310 = vsub.s32 2, %v1309
    %v1311 = vrot.slane %v1301, %v1310
    %v1312 = vadd.f32 %v1291, %v1307
    %v1313 = vadd.f32 %v1292, %v1311
    %v1314 = vrot.slane %v1216, 4
    %v1315 = vadd.f32 %v1216, %v1314
    %v1316 = vrot.slane %v1315, 2
    %v1317 = vadd.f32 %v1315, %v1316
    %v1318 = vrot.slane %v1317, 1
    %v1319 = vadd.f32 %v1317, %v1318
    %v1320 = vrot.slane %v1217, 4
    %v1321 = vadd.f32 %v1217, %v1320
    %v1322 = vrot.slane %v1321, 2
    %v1323 = vadd.f32 %v1321, %v1322
    %v1324 = vrot.slane %v1323, 1
    %v1325 = vadd.f32 %v1323, %v1324
    %v1326 = vmul.f32 %v1319, %v319
    %v1327 = vmul.f32 %v1325, %v319
    %v1328 = vmul.f32 %v1216, %v1216
    %v1329 = vmul.f32 %v1217, %v1217
    %v1330 = vrot.slane %v1328, 4
    %v1331 = vadd.f32 %v1328, %v1330
    %v1332 = vrot.slane %v1331, 2
    %v1333 = vadd.f32 %v1331, %v1332
    %v1334 = vrot.slane %v1333, 1
    %v1335 = vadd.f32 %v1333, %v1334
    %v1336 = vrot.slane %v1329, 4
    %v1337 = vadd.f32 %v1329, %v1336
    %v1338 = vrot.slane %v1337, 2
    %v1339 = vadd.f32 %v1337, %v1338
    %v1340 = vrot.slane %v1339, 1
    %v1341 = vadd.f32 %v1339, %v1340
    %v1342 = vmul.f32 %v1335, %v319
    %v1343 = vmul.f32 %v1341, %v319
    %v1344 = vmul.f32 %v1326, %v1326
    %v1345 = vmul.f32 %v1327, %v1327
    %v1346 = vsub.f32 %v1342, %v1344
    %v1347 = vsub.f32 %v1343, %v1345
    %v1348 = vmax.f32 %v1346, 0.0
    %v1349 = vmax.f32 %v1347, 0.0
    %v1350 = vadd.f32 %v1348, 1e-05
    %v1351 = vadd.f32 %v1349, 1e-05
    %v1352 = vrsqrt.pop %v1350
    %v1353 = vrsqrt.pop %v1351
    %v1356 = vcombine.low %v1352, %v1353
    %v1357 = vrot.slane %v1356, 7
    %v1359 = vmul.f32 %v989, %v1357
    %v1361 = vlaneseq
    %v1362 = vshrl.u32 %v1361, 7
    %v1363 = vsub.s32 1, %v1362
    %v1364 = vrot.slane %v1359, %v1363
    %v1365 = vlaneseq
    %v1366 = vshrl.u32 %v1365, 7
    %v1367 = vsub.s32 5, %v1366
    %v1368 = vrot.slane %v1359, %v1367
    %v1371 = vmul.f32 %v1326, %v1364
    %v1372 = vmul.f32 %v1327, %v1368
    %v1375 = vcombine.low %v1371, %v1372
    %v1376 = vrot.slane %v1375, 6
    %v1378 = vsub.f32 %v989, %v1376
    %v1379 = vlaneseq
    %v1380 = vshrl.u32 %v1379, 7
    %v1381 = vsub.s32 1, %v1380
    %v1382 = vrot.slane %v1364, %v1381
    %v1383 = vlaneseq
    %v1384 = vshrl.u32 %v1383, 7
    %v1385 = vsub.s32 1, %v1384
    %v1386 = vrot.slane %v1368, %v1385
    %v1387 = vmul.f32 %v1216, %v1382
    %v1388 = vmul.f32 %v1217, %v1386
    %v1390 = vlaneseq
    %v1391 = vshrl.u32 %v1390, 7
    %v1392 = vsub.s32 2, %v1391
    %v1393 = vrot.slane %v1378, %v1392
    %v1394 = vlaneseq
    %v1395 = vshrl.u32 %v1394, 7
    %v1396 = vsub.s32 6, %v1395
    %v1397 = vrot.slane %v1378, %v1396
    %v1400 = vlaneseq
    %v1401 = vshrl.u32 %v1400, 7
    %v1402 = vsub.s32 2, %v1401
    %v1403 = vrot.slane %v1393, %v1402
    %v1404 = vlaneseq
    %v1405 = vshrl.u32 %v1404, 7
    %v1406 = vsub.s32 2, %v1405
    %v1407 = vrot.slane %v1397, %v1406
    %v1408 = vadd.f32 %v1387, %v1403
    %v1409 = vadd.f32 %v1388, %v1407
    %s1410 = scalar_lea.vmem [#allocation2], 768
    %v1411 = vld [vmem:[%s1410] sm:$0xff]
    %v1412 = vld [vmem:[%s1410 + $0x8] sm:$0xff]
    %v1413 = vld [vmem:[%s1410 + $0x10] sm:$0xff]
    %v1414 = vld [vmem:[%s1410 + $0x18] sm:$0xff]
    %v1415 = vld [vmem:[%s1410 + $0x20] sm:$0xff]
    %v1416 = vld [vmem:[%s1410 + $0x28] sm:$0xff]
    %v1417 = vld [vmem:[%s1410 + $0x30] sm:$0xff]
    %v1418 = vld [vmem:[%s1410 + $0x38] sm:$0xff]
    %v1419 = vld [vmem:[%s1410 + $0x40] sm:$0xff]
    %v1420 = vld [vmem:[%s1410 + $0x48] sm:$0xff]
    %v1421 = vld [vmem:[%s1410 + $0x50] sm:$0xff]
    %v1422 = vld [vmem:[%s1410 + $0x58] sm:$0xff]
    %v1423 = vld [vmem:[%s1410 + $0x60] sm:$0xff]
    %v1424 = vld [vmem:[%s1410 + $0x68] sm:$0xff]
    %v1425 = vld [vmem:[%s1410 + $0x70] sm:$0xff]
    %v1426 = vld [vmem:[%s1410 + $0x78] sm:$0xff]
    %v1427 = vld [vmem:[%s1410 + $0x80] sm:$0xff]
    %v1428 = vld [vmem:[%s1410 + $0x88] sm:$0xff]
    %v1429 = vld [vmem:[%s1410 + $0x90] sm:$0xff]
    %v1430 = vld [vmem:[%s1410 + $0x98] sm:$0xff]
    %v1431 = vld [vmem:[%s1410 + $0xa0] sm:$0xff]
    %v1432 = vld [vmem:[%s1410 + $0xa8] sm:$0xff]
    %v1433 = vld [vmem:[%s1410 + $0xb0] sm:$0xff]
    %v1434 = vld [vmem:[%s1410 + $0xb8] sm:$0xff]
    %v1435 = vld [vmem:[%s1410 + $0xc0] sm:$0xff]
    %v1436 = vld [vmem:[%s1410 + $0xc8] sm:$0xff]
    %v1437 = vld [vmem:[%s1410 + $0xd0] sm:$0xff]
    %v1438 = vld [vmem:[%s1410 + $0xd8] sm:$0xff]
    %v1439 = vld [vmem:[%s1410 + $0xe0] sm:$0xff]
    %v1440 = vld [vmem:[%s1410 + $0xe8] sm:$0xff]
    %v1441 = vld [vmem:[%s1410 + $0xf0] sm:$0xff]
    %v1442 = vld [vmem:[%s1410 + $0xf8] sm:$0xff]
    %s1443 = scalar_lea.vmem [#allocation4], 24
    %v1444 = vld [vmem:[%s1443] sm:$0x77]
    %v1445 = vpack.c.bf16 %v1408, %v1312
    %v1446 = vpack.c.bf16 %v1409, %v1313
    %v1448 = vlaneseq
    %v1449 = vshrl.u32 %v1448, 7
    %v1450 = vsub.s32 0, %v1449
    %v1451 = vrot.slane %v1444, %v1450
    %v1452 = vlaneseq
    %v1453 = vshrl.u32 %v1452, 7
    %v1454 = vsub.s32 4, %v1453
    %v1455 = vrot.slane %v1444, %v1454
    %v1458 = vlaneseq
    %v1459 = vshrl.u32 %v1458, 7
    %v1460 = vsub.s32 0, %v1459
    %v1461 = vrot.slane %v1451, %v1460
    %v1462 = vlaneseq
    %v1463 = vshrl.u32 %v1462, 7
    %v1464 = vsub.s32 0, %v1463
    %v1465 = vrot.slane %v1455, %v1464
    %v1498 = vunpack.c.l.b16 %v1411
    %v1499 = vunpack.c.h.b16 %v1411
    %v1500 = vunpack.c.l.b16 %v1412
    %v1501 = vunpack.c.h.b16 %v1412
    %v1502 = vunpack.c.l.b16 %v1413
    %v1503 = vunpack.c.h.b16 %v1413
    %v1504 = vunpack.c.l.b16 %v1414
    %v1505 = vunpack.c.h.b16 %v1414
    %v1506 = vunpack.c.l.b16 %v1415
    %v1507 = vunpack.c.h.b16 %v1415
    %v1508 = vunpack.c.l.b16 %v1416
    %v1509 = vunpack.c.h.b16 %v1416
    %v1510 = vunpack.c.l.b16 %v1417
    %v1511 = vunpack.c.h.b16 %v1417
    %v1512 = vunpack.c.l.b16 %v1418
    %v1513 = vunpack.c.h.b16 %v1418
    %v1514 = vunpack.c.l.b16 %v1419
    %v1515 = vunpack.c.h.b16 %v1419
    %v1516 = vunpack.c.l.b16 %v1420
    %v1517 = vunpack.c.h.b16 %v1420
    %v1518 = vunpack.c.l.b16 %v1421
    %v1519 = vunpack.c.h.b16 %v1421
    %v1520 = vunpack.c.l.b16 %v1422
    %v1521 = vunpack.c.h.b16 %v1422
    %v1522 = vunpack.c.l.b16 %v1423
    %v1523 = vunpack.c.h.b16 %v1423
    %v1524 = vunpack.c.l.b16 %v1424
    %v1525 = vunpack.c.h.b16 %v1424
    %v1526 = vunpack.c.l.b16 %v1425
    %v1527 = vunpack.c.h.b16 %v1425
    %v1528 = vunpack.c.l.b16 %v1426
    %v1529 = vunpack.c.h.b16 %v1426
    %v1530 = vunpack.c.l.b16 %v1427
    %v1531 = vunpack.c.h.b16 %v1427
    %v1532 = vunpack.c.l.b16 %v1428
    %v1533 = vunpack.c.h.b16 %v1428
    %v1534 = vunpack.c.l.b16 %v1429
    %v1535 = vunpack.c.h.b16 %v1429
    %v1536 = vunpack.c.l.b16 %v1430
    %v1537 = vunpack.c.h.b16 %v1430
    %v1538 = vunpack.c.l.b16 %v1431
    %v1539 = vunpack.c.h.b16 %v1431
    %v1540 = vunpack.c.l.b16 %v1432
    %v1541 = vunpack.c.h.b16 %v1432
    %v1542 = vunpack.c.l.b16 %v1433
    %v1543 = vunpack.c.h.b16 %v1433
    %v1544 = vunpack.c.l.b16 %v1434
    %v1545 = vunpack.c.h.b16 %v1434
    %v1546 = vunpack.c.l.b16 %v1435
    %v1547 = vunpack.c.h.b16 %v1435
    %v1548 = vunpack.c.l.b16 %v1436
    %v1549 = vunpack.c.h.b16 %v1436
    %v1550 = vunpack.c.l.b16 %v1437
    %v1551 = vunpack.c.h.b16 %v1437
    %v1552 = vunpack.c.l.b16 %v1438
    %v1553 = vunpack.c.h.b16 %v1438
    %v1554 = vunpack.c.l.b16 %v1439
    %v1555 = vunpack.c.h.b16 %v1439
    %v1556 = vunpack.c.l.b16 %v1440
    %v1557 = vunpack.c.h.b16 %v1440
    %v1558 = vunpack.c.l.b16 %v1441
    %v1559 = vunpack.c.h.b16 %v1441
    %v1560 = vunpack.c.l.b16 %v1442
    %v1561 = vunpack.c.h.b16 %v1442
    %v1562 = vpack.c.b16 %v1500, %v1498
    %v1563 = vpack.c.b16 %v1501, %v1499
    %v1564 = vpack.c.b16 %v1504, %v1502
    %v1565 = vpack.c.b16 %v1505, %v1503
    %v1566 = vpack.c.b16 %v1508, %v1506
    %v1567 = vpack.c.b16 %v1509, %v1507
    %v1568 = vpack.c.b16 %v1512, %v1510
    %v1569 = vpack.c.b16 %v1513, %v1511
    %v1570 = vpack.c.b16 %v1516, %v1514
    %v1571 = vpack.c.b16 %v1517, %v1515
    %v1572 = vpack.c.b16 %v1520, %v1518
    %v1573 = vpack.c.b16 %v1521, %v1519
    %v1574 = vpack.c.b16 %v1524, %v1522
    %v1575 = vpack.c.b16 %v1525, %v1523
    %v1576 = vpack.c.b16 %v1528, %v1526
    %v1577 = vpack.c.b16 %v1529, %v1527
    %v1578 = vpack.c.b16 %v1532, %v1530
    %v1579 = vpack.c.b16 %v1533, %v1531
    %v1580 = vpack.c.b16 %v1536, %v1534
    %v1581 = vpack.c.b16 %v1537, %v1535
    %v1582 = vpack.c.b16 %v1540, %v1538
    %v1583 = vpack.c.b16 %v1541, %v1539
    %v1584 = vpack.c.b16 %v1544, %v1542
    %v1585 = vpack.c.b16 %v1545, %v1543
    %v1586 = vpack.c.b16 %v1548, %v1546
    %v1587 = vpack.c.b16 %v1549, %v1547
    %v1588 = vpack.c.b16 %v1552, %v1550
    %v1589 = vpack.c.b16 %v1553, %v1551
    %v1590 = vpack.c.b16 %v1556, %v1554
    %v1591 = vpack.c.b16 %v1557, %v1555
    %v1592 = vpack.c.b16 %v1560, %v1558
    %v1593 = vpack.c.b16 %v1561, %v1559
    %1626 = vmatprep.subr.bf16.mxu0 %v1563
    %1627 = vmatpush1.bf16.msra.mxu0 %v1562
    %1628 = vmatprep.subr.bf16.mxu0 %v1565
    %1629 = vmatpush1.bf16.msra.mxu0 %v1564
    %1630 = vmatprep.subr.bf16.mxu0 %v1567
    %1631 = vmatpush1.bf16.msra.mxu0 %v1566
    %1632 = vmatprep.subr.bf16.mxu0 %v1569
    %1633 = vmatpush1.bf16.msra.mxu0 %v1568
    %1634 = vmatprep.subr.bf16.mxu0 %v1571
    %1635 = vmatpush1.bf16.msra.mxu0 %v1570
    %1636 = vmatprep.subr.bf16.mxu0 %v1573
    %1637 = vmatpush1.bf16.msra.mxu0 %v1572
    %1638 = vmatprep.subr.bf16.mxu0 %v1575
    %1639 = vmatpush1.bf16.msra.mxu0 %v1574
    %1640 = vmatprep.subr.bf16.mxu0 %v1577
    %1641 = vmatpush1.bf16.msra.mxu0 %v1576
    %1642 = vmatprep.subr.bf16.mxu0 %v1579
    %1643 = vmatpush1.bf16.msra.mxu0 %v1578
    %1644 = vmatprep.subr.bf16.mxu0 %v1581
    %1645 = vmatpush1.bf16.msra.mxu0 %v1580
    %1646 = vmatprep.subr.bf16.mxu0 %v1583
    %1647 = vmatpush1.bf16.msra.mxu0 %v1582
    %1648 = vmatprep.subr.bf16.mxu0 %v1585
    %1649 = vmatpush1.bf16.msra.mxu0 %v1584
    %1650 = vmatprep.subr.bf16.mxu0 %v1587
    %1651 = vmatpush1.bf16.msra.mxu0 %v1586
    %1652 = vmatprep.subr.bf16.mxu0 %v1589
    %1653 = vmatpush1.bf16.msra.mxu0 %v1588
    %1654 = vmatprep.subr.bf16.mxu0 %v1591
    %1655 = vmatpush1.bf16.msra.mxu0 %v1590
    %1656 = vmatprep.subr.bf16.mxu0 %v1593
    %1657 = vmatpush1.bf16.msra.mxu0 %v1592
    %1658 = vmatprep.mubr.bf16.mxu0 %v1446
    %1659 = vmatmul.mubr.bf16.gmra.mrb[0].mxu0 %v1445
    %v1660 = vpop.f32.mrb[0].mxu0
    %v1661 = vadd.f32 %v1461, %v1660
    %v1662 = vpop.f32.mrb[0].mxu0
    %v1663 = vadd.f32 %v1465, %v1662
    %v1664 = vpop.f32.mrb[0].mxu0
    %v1665 = vadd.f32 %v1461, %v1664
    %v1666 = vpop.f32.mrb[0].mxu0
    %v1667 = vadd.f32 %v1465, %v1666
    %1668 = vdwg.mxu0
    %v1669 = vmax.f32 %v1661, 0.0
    %v1670 = vmax.f32 %v1663, 0.0
    %v1671 = vmax.f32 %v1665, 0.0
    %v1672 = vmax.f32 %v1667, 0.0
    %v1673 = vrot.slane %v1669, 4
    %v1674 = vadd.f32 %v1669, %v1673
    %v1675 = vrot.slane %v1674, 2
    %v1676 = vadd.f32 %v1674, %v1675
    %v1677 = vrot.slane %v1676, 1
    %v1678 = vadd.f32 %v1676, %v1677
    %v1679 = vrot.slane %v1670, 4
    %v1680 = vadd.f32 %v1670, %v1679
    %v1681 = vrot.slane %v1680, 2
    %v1682 = vadd.f32 %v1680, %v1681
    %v1683 = vrot.slane %v1682, 1
    %v1684 = vadd.f32 %v1682, %v1683
    %v1685 = vmul.f32 %v1678, %v319
    %v1686 = vmul.f32 %v1684, %v319
    %v1687 = vmul.f32 %v1669, %v1669
    %v1688 = vmul.f32 %v1670, %v1670
    %v1689 = vrot.slane %v1687, 4
    %v1690 = vadd.f32 %v1687, %v1689
    %v1691 = vrot.slane %v1690, 2
    %v1692 = vadd.f32 %v1690, %v1691
    %v1693 = vrot.slane %v1692, 1
    %v1694 = vadd.f32 %v1692, %v1693
    %v1695 = vrot.slane %v1688, 4
    %v1696 = vadd.f32 %v1688, %v1695
    %v1697 = vrot.slane %v1696, 2
    %v1698 = vadd.f32 %v1696, %v1697
    %v1699 = vrot.slane %v1698, 1
    %v1700 = vadd.f32 %v1698, %v1699
    %v1701 = vmul.f32 %v1694, %v319
    %v1702 = vmul.f32 %v1700, %v319
    %v1703 = vmul.f32 %v1685, %v1685
    %v1704 = vmul.f32 %v1686, %v1686
    %v1705 = vsub.f32 %v1701, %v1703
    %v1706 = vsub.f32 %v1702, %v1704
    %v1707 = vmax.f32 %v1705, 0.0
    %v1708 = vmax.f32 %v1706, 0.0
    %v1709 = vadd.f32 %v1707, 1e-05
    %v1710 = vadd.f32 %v1708, 1e-05
    %v1711 = vrsqrt.pop %v1709
    %v1712 = vrsqrt.pop %v1710
    %v1715 = vcombine.low %v1711, %v1712
    %v1716 = vrot.slane %v1715, 7
    %v1718 = vmul.f32 %v1444, %v1716
    %v1720 = vlaneseq
    %v1721 = vshrl.u32 %v1720, 7
    %v1722 = vsub.s32 1, %v1721
    %v1723 = vrot.slane %v1718, %v1722
    %v1724 = vlaneseq
    %v1725 = vshrl.u32 %v1724, 7
    %v1726 = vsub.s32 5, %v1725
    %v1727 = vrot.slane %v1718, %v1726
    %v1730 = vmul.f32 %v1685, %v1723
    %v1731 = vmul.f32 %v1686, %v1727
    %v1734 = vcombine.low %v1730, %v1731
    %v1735 = vrot.slane %v1734, 6
    %v1737 = vsub.f32 %v1444, %v1735
    %v1738 = vlaneseq
    %v1739 = vshrl.u32 %v1738, 7
    %v1740 = vsub.s32 1, %v1739
    %v1741 = vrot.slane %v1723, %v1740
    %v1742 = vlaneseq
    %v1743 = vshrl.u32 %v1742, 7
    %v1744 = vsub.s32 1, %v1743
    %v1745 = vrot.slane %v1727, %v1744
    %v1746 = vmul.f32 %v1669, %v1741
    %v1747 = vmul.f32 %v1670, %v1745
    %v1749 = vlaneseq
    %v1750 = vshrl.u32 %v1749, 7
    %v1751 = vsub.s32 2, %v1750
    %v1752 = vrot.slane %v1737, %v1751
    %v1753 = vlaneseq
    %v1754 = vshrl.u32 %v1753, 7
    %v1755 = vsub.s32 6, %v1754
    %v1756 = vrot.slane %v1737, %v1755
    %v1759 = vlaneseq
    %v1760 = vshrl.u32 %v1759, 7
    %v1761 = vsub.s32 2, %v1760
    %v1762 = vrot.slane %v1752, %v1761
    %v1763 = vlaneseq
    %v1764 = vshrl.u32 %v1763, 7
    %v1765 = vsub.s32 2, %v1764
    %v1766 = vrot.slane %v1756, %v1765
    %v1767 = vadd.f32 %v1746, %v1762
    %v1768 = vadd.f32 %v1747, %v1766
    %v1769 = vrot.slane %v1671, 4
    %v1770 = vadd.f32 %v1671, %v1769
    %v1771 = vrot.slane %v1770, 2
    %v1772 = vadd.f32 %v1770, %v1771
    %v1773 = vrot.slane %v1772, 1
    %v1774 = vadd.f32 %v1772, %v1773
    %v1775 = vrot.slane %v1672, 4
    %v1776 = vadd.f32 %v1672, %v1775
    %v1777 = vrot.slane %v1776, 2
    %v1778 = vadd.f32 %v1776, %v1777
    %v1779 = vrot.slane %v1778, 1
    %v1780 = vadd.f32 %v1778, %v1779
    %v1781 = vmul.f32 %v1774, %v319
    %v1782 = vmul.f32 %v1780, %v319
    %v1783 = vmul.f32 %v1671, %v1671
    %v1784 = vmul.f32 %v1672, %v1672
    %v1785 = vrot.slane %v1783, 4
    %v1786 = vadd.f32 %v1783, %v1785
    %v1787 = vrot.slane %v1786, 2
    %v1788 = vadd.f32 %v1786, %v1787
    %v1789 = vrot.slane %v1788, 1
    %v1790 = vadd.f32 %v1788, %v1789
    %v1791 = vrot.slane %v1784, 4
    %v1792 = vadd.f32 %v1784, %v1791
    %v1793 = vrot.slane %v1792, 2
    %v1794 = vadd.f32 %v1792, %v1793
    %v1795 = vrot.slane %v1794, 1
    %v1796 = vadd.f32 %v1794, %v1795
    %v1797 = vmul.f32 %v1790, %v319
    %v1798 = vmul.f32 %v1796, %v319
    %v1799 = vmul.f32 %v1781, %v1781
    %v1800 = vmul.f32 %v1782, %v1782
    %v1801 = vsub.f32 %v1797, %v1799
    %v1802 = vsub.f32 %v1798, %v1800
    %v1803 = vmax.f32 %v1801, 0.0
    %v1804 = vmax.f32 %v1802, 0.0
    %v1805 = vadd.f32 %v1803, 1e-05
    %v1806 = vadd.f32 %v1804, 1e-05
    %v1807 = vrsqrt.pop %v1805
    %v1808 = vrsqrt.pop %v1806
    %v1811 = vcombine.low %v1807, %v1808
    %v1812 = vrot.slane %v1811, 7
    %v1814 = vmul.f32 %v1444, %v1812
    %v1816 = vlaneseq
    %v1817 = vshrl.u32 %v1816, 7
    %v1818 = vsub.s32 1, %v1817
    %v1819 = vrot.slane %v1814, %v1818
    %v1820 = vlaneseq
    %v1821 = vshrl.u32 %v1820, 7
    %v1822 = vsub.s32 5, %v1821
    %v1823 = vrot.slane %v1814, %v1822
    %v1826 = vmul.f32 %v1781, %v1819
    %v1827 = vmul.f32 %v1782, %v1823
    %v1830 = vcombine.low %v1826, %v1827
    %v1831 = vrot.slane %v1830, 6
    %v1833 = vsub.f32 %v1444, %v1831
    %v1834 = vlaneseq
    %v1835 = vshrl.u32 %v1834, 7
    %v1836 = vsub.s32 1, %v1835
    %v1837 = vrot.slane %v1819, %v1836
    %v1838 = vlaneseq
    %v1839 = vshrl.u32 %v1838, 7
    %v1840 = vsub.s32 1, %v1839
    %v1841 = vrot.slane %v1823, %v1840
    %v1842 = vmul.f32 %v1671, %v1837
    %v1843 = vmul.f32 %v1672, %v1841
    %v1845 = vlaneseq
    %v1846 = vshrl.u32 %v1845, 7
    %v1847 = vsub.s32 2, %v1846
    %v1848 = vrot.slane %v1833, %v1847
    %v1849 = vlaneseq
    %v1850 = vshrl.u32 %v1849, 7
    %v1851 = vsub.s32 6, %v1850
    %v1852 = vrot.slane %v1833, %v1851
    %v1855 = vlaneseq
    %v1856 = vshrl.u32 %v1855, 7
    %v1857 = vsub.s32 2, %v1856
    %v1858 = vrot.slane %v1848, %v1857
    %v1859 = vlaneseq
    %v1860 = vshrl.u32 %v1859, 7
    %v1861 = vsub.s32 2, %v1860
    %v1862 = vrot.slane %v1852, %v1861
    %v1863 = vadd.f32 %v1842, %v1858
    %v1864 = vadd.f32 %v1843, %v1862
    %s1865 = scalar_lea.vmem [#allocation2], 1024
    %v1866 = vld [vmem:[%s1865] sm:$0xff]
    %v1867 = vld [vmem:[%s1865 + $0x8] sm:$0xff]
    %v1868 = vld [vmem:[%s1865 + $0x10] sm:$0xff]
    %v1869 = vld [vmem:[%s1865 + $0x18] sm:$0xff]
    %v1870 = vld [vmem:[%s1865 + $0x20] sm:$0xff]
    %v1871 = vld [vmem:[%s1865 + $0x28] sm:$0xff]
    %v1872 = vld [vmem:[%s1865 + $0x30] sm:$0xff]
    %v1873 = vld [vmem:[%s1865 + $0x38] sm:$0xff]
    %v1874 = vld [vmem:[%s1865 + $0x40] sm:$0xff]
    %v1875 = vld [vmem:[%s1865 + $0x48] sm:$0xff]
    %v1876 = vld [vmem:[%s1865 + $0x50] sm:$0xff]
    %v1877 = vld [vmem:[%s1865 + $0x58] sm:$0xff]
    %v1878 = vld [vmem:[%s1865 + $0x60] sm:$0xff]
    %v1879 = vld [vmem:[%s1865 + $0x68] sm:$0xff]
    %v1880 = vld [vmem:[%s1865 + $0x70] sm:$0xff]
    %v1881 = vld [vmem:[%s1865 + $0x78] sm:$0xff]
    %v1882 = vld [vmem:[%s1865 + $0x80] sm:$0xff]
    %v1883 = vld [vmem:[%s1865 + $0x88] sm:$0xff]
    %v1884 = vld [vmem:[%s1865 + $0x90] sm:$0xff]
    %v1885 = vld [vmem:[%s1865 + $0x98] sm:$0xff]
    %v1886 = vld [vmem:[%s1865 + $0xa0] sm:$0xff]
    %v1887 = vld [vmem:[%s1865 + $0xa8] sm:$0xff]
    %v1888 = vld [vmem:[%s1865 + $0xb0] sm:$0xff]
    %v1889 = vld [vmem:[%s1865 + $0xb8] sm:$0xff]
    %v1890 = vld [vmem:[%s1865 + $0xc0] sm:$0xff]
    %v1891 = vld [vmem:[%s1865 + $0xc8] sm:$0xff]
    %v1892 = vld [vmem:[%s1865 + $0xd0] sm:$0xff]
    %v1893 = vld [vmem:[%s1865 + $0xd8] sm:$0xff]
    %v1894 = vld [vmem:[%s1865 + $0xe0] sm:$0xff]
    %v1895 = vld [vmem:[%s1865 + $0xe8] sm:$0xff]
    %v1896 = vld [vmem:[%s1865 + $0xf0] sm:$0xff]
    %v1897 = vld [vmem:[%s1865 + $0xf8] sm:$0xff]
    %s1898 = scalar_lea.vmem [#allocation4], 32
    %v1899 = vld [vmem:[%s1898] sm:$0x77]
    %v1900 = vpack.c.bf16 %v1863, %v1767
    %v1901 = vpack.c.bf16 %v1864, %v1768
    %v1903 = vlaneseq
    %v1904 = vshrl.u32 %v1903, 7
    %v1905 = vsub.s32 0, %v1904
    %v1906 = vrot.slane %v1899, %v1905
    %v1907 = vlaneseq
    %v1908 = vshrl.u32 %v1907, 7
    %v1909 = vsub.s32 4, %v1908
    %v1910 = vrot.slane %v1899, %v1909
    %v1913 = vlaneseq
    %v1914 = vshrl.u32 %v1913, 7
    %v1915 = vsub.s32 0, %v1914
    %v1916 = vrot.slane %v1906, %v1915
    %v1917 = vlaneseq
    %v1918 = vshrl.u32 %v1917, 7
    %v1919 = vsub.s32 0, %v1918
    %v1920 = vrot.slane %v1910, %v1919
    %v1953 = vunpack.c.l.b16 %v1866
    %v1954 = vunpack.c.h.b16 %v1866
    %v1955 = vunpack.c.l.b16 %v1867
    %v1956 = vunpack.c.h.b16 %v1867
    %v1957 = vunpack.c.l.b16 %v1868
    %v1958 = vunpack.c.h.b16 %v1868
    %v1959 = vunpack.c.l.b16 %v1869
    %v1960 = vunpack.c.h.b16 %v1869
    %v1961 = vunpack.c.l.b16 %v1870
    %v1962 = vunpack.c.h.b16 %v1870
    %v1963 = vunpack.c.l.b16 %v1871
    %v1964 = vunpack.c.h.b16 %v1871
    %v1965 = vunpack.c.l.b16 %v1872
    %v1966 = vunpack.c.h.b16 %v1872
    %v1967 = vunpack.c.l.b16 %v1873
    %v1968 = vunpack.c.h.b16 %v1873
    %v1969 = vunpack.c.l.b16 %v1874
    %v1970 = vunpack.c.h.b16 %v1874
    %v1971 = vunpack.c.l.b16 %v1875
    %v1972 = vunpack.c.h.b16 %v1875
    %v1973 = vunpack.c.l.b16 %v1876
    %v1974 = vunpack.c.h.b16 %v1876
    %v1975 = vunpack.c.l.b16 %v1877
    %v1976 = vunpack.c.h.b16 %v1877
    %v1977 = vunpack.c.l.b16 %v1878
    %v1978 = vunpack.c.h.b16 %v1878
    %v1979 = vunpack.c.l.b16 %v1879
    %v1980 = vunpack.c.h.b16 %v1879
    %v1981 = vunpack.c.l.b16 %v1880
    %v1982 = vunpack.c.h.b16 %v1880
    %v1983 = vunpack.c.l.b16 %v1881
    %v1984 = vunpack.c.h.b16 %v1881
    %v1985 = vunpack.c.l.b16 %v1882
    %v1986 = vunpack.c.h.b16 %v1882
    %v1987 = vunpack.c.l.b16 %v1883
    %v1988 = vunpack.c.h.b16 %v1883
    %v1989 = vunpack.c.l.b16 %v1884
    %v1990 = vunpack.c.h.b16 %v1884
    %v1991 = vunpack.c.l.b16 %v1885
    %v1992 = vunpack.c.h.b16 %v1885
    %v1993 = vunpack.c.l.b16 %v1886
    %v1994 = vunpack.c.h.b16 %v1886
    %v1995 = vunpack.c.l.b16 %v1887
    %v1996 = vunpack.c.h.b16 %v1887
    %v1997 = vunpack.c.l.b16 %v1888
    %v1998 = vunpack.c.h.b16 %v1888
    %v1999 = vunpack.c.l.b16 %v1889
    %v2000 = vunpack.c.h.b16 %v1889
    %v2001 = vunpack.c.l.b16 %v1890
    %v2002 = vunpack.c.h.b16 %v1890
    %v2003 = vunpack.c.l.b16 %v1891
    %v2004 = vunpack.c.h.b16 %v1891
    %v2005 = vunpack.c.l.b16 %v1892
    %v2006 = vunpack.c.h.b16 %v1892
    %v2007 = vunpack.c.l.b16 %v1893
    %v2008 = vunpack.c.h.b16 %v1893
    %v2009 = vunpack.c.l.b16 %v1894
    %v2010 = vunpack.c.h.b16 %v1894
    %v2011 = vunpack.c.l.b16 %v1895
    %v2012 = vunpack.c.h.b16 %v1895
    %v2013 = vunpack.c.l.b16 %v1896
    %v2014 = vunpack.c.h.b16 %v1896
    %v2015 = vunpack.c.l.b16 %v1897
    %v2016 = vunpack.c.h.b16 %v1897
    %v2017 = vpack.c.b16 %v1955, %v1953
    %v2018 = vpack.c.b16 %v1956, %v1954
    %v2019 = vpack.c.b16 %v1959, %v1957
    %v2020 = vpack.c.b16 %v1960, %v1958
    %v2021 = vpack.c.b16 %v1963, %v1961
    %v2022 = vpack.c.b16 %v1964, %v1962
    %v2023 = vpack.c.b16 %v1967, %v1965
    %v2024 = vpack.c.b16 %v1968, %v1966
    %v2025 = vpack.c.b16 %v1971, %v1969
    %v2026 = vpack.c.b16 %v1972, %v1970
    %v2027 = vpack.c.b16 %v1975, %v1973
    %v2028 = vpack.c.b16 %v1976, %v1974
    %v2029 = vpack.c.b16 %v1979, %v1977
    %v2030 = vpack.c.b16 %v1980, %v1978
    %v2031 = vpack.c.b16 %v1983, %v1981
    %v2032 = vpack.c.b16 %v1984, %v1982
    %v2033 = vpack.c.b16 %v1987, %v1985
    %v2034 = vpack.c.b16 %v1988, %v1986
    %v2035 = vpack.c.b16 %v1991, %v1989
    %v2036 = vpack.c.b16 %v1992, %v1990
    %v2037 = vpack.c.b16 %v1995, %v1993
    %v2038 = vpack.c.b16 %v1996, %v1994
    %v2039 = vpack.c.b16 %v1999, %v1997
    %v2040 = vpack.c.b16 %v2000, %v1998
    %v2041 = vpack.c.b16 %v2003, %v2001
    %v2042 = vpack.c.b16 %v2004, %v2002
    %v2043 = vpack.c.b16 %v2007, %v2005
    %v2044 = vpack.c.b16 %v2008, %v2006
    %v2045 = vpack.c.b16 %v2011, %v2009
    %v2046 = vpack.c.b16 %v2012, %v2010
    %v2047 = vpack.c.b16 %v2015, %v2013
    %v2048 = vpack.c.b16 %v2016, %v2014
    %2081 = vmatprep.subr.bf16.mxu0 %v2018
    %2082 = vmatpush1.bf16.msra.mxu0 %v2017
    %2083 = vmatprep.subr.bf16.mxu0 %v2020
    %2084 = vmatpush1.bf16.msra.mxu0 %v2019
    %2085 = vmatprep.subr.bf16.mxu0 %v2022
    %2086 = vmatpush1.bf16.msra.mxu0 %v2021
    %2087 = vmatprep.subr.bf16.mxu0 %v2024
    %2088 = vmatpush1.bf16.msra.mxu0 %v2023
    %2089 = vmatprep.subr.bf16.mxu0 %v2026
    %2090 = vmatpush1.bf16.msra.mxu0 %v2025
    %2091 = vmatprep.subr.bf16.mxu0 %v2028
    %2092 = vmatpush1.bf16.msra.mxu0 %v2027
    %2093 = vmatprep.subr.bf16.mxu0 %v2030
    %2094 = vmatpush1.bf16.msra.mxu0 %v2029
    %2095 = vmatprep.subr.bf16.mxu0 %v2032
    %2096 = vmatpush1.bf16.msra.mxu0 %v2031
    %2097 = vmatprep.subr.bf16.mxu0 %v2034
    %2098 = vmatpush1.bf16.msra.mxu0 %v2033
    %2099 = vmatprep.subr.bf16.mxu0 %v2036
    %2100 = vmatpush1.bf16.msra.mxu0 %v2035
    %2101 = vmatprep.subr.bf16.mxu0 %v2038
    %2102 = vmatpush1.bf16.msra.mxu0 %v2037
    %2103 = vmatprep.subr.bf16.mxu0 %v2040
    %2104 = vmatpush1.bf16.msra.mxu0 %v2039
    %2105 = vmatprep.subr.bf16.mxu0 %v2042
    %2106 = vmatpush1.bf16.msra.mxu0 %v2041
    %2107 = vmatprep.subr.bf16.mxu0 %v2044
    %2108 = vmatpush1.bf16.msra.mxu0 %v2043
    %2109 = vmatprep.subr.bf16.mxu0 %v2046
    %2110 = vmatpush1.bf16.msra.mxu0 %v2045
    %2111 = vmatprep.subr.bf16.mxu0 %v2048
    %2112 = vmatpush1.bf16.msra.mxu0 %v2047
    %2113 = vmatprep.mubr.bf16.mxu0 %v1901
    %2114 = vmatmul.mubr.bf16.gmra.mrb[0].mxu0 %v1900
    %v2115 = vpop.f32.mrb[0].mxu0
    %v2116 = vadd.f32 %v1916, %v2115
    %v2117 = vpop.f32.mrb[0].mxu0
    %v2118 = vadd.f32 %v1920, %v2117
    %v2119 = vpop.f32.mrb[0].mxu0
    %v2120 = vadd.f32 %v1916, %v2119
    %v2121 = vpop.f32.mrb[0].mxu0
    %v2122 = vadd.f32 %v1920, %v2121
    %2123 = vdwg.mxu0
    %v2124 = vmax.f32 %v2116, 0.0
    %v2125 = vmax.f32 %v2118, 0.0
    %v2126 = vmax.f32 %v2120, 0.0
    %v2127 = vmax.f32 %v2122, 0.0
    %v2128 = vrot.slane %v2124, 4
    %v2129 = vadd.f32 %v2124, %v2128
    %v2130 = vrot.slane %v2129, 2
    %v2131 = vadd.f32 %v2129, %v2130
    %v2132 = vrot.slane %v2131, 1
    %v2133 = vadd.f32 %v2131, %v2132
    %v2134 = vrot.slane %v2125, 4
    %v2135 = vadd.f32 %v2125, %v2134
    %v2136 = vrot.slane %v2135, 2
    %v2137 = vadd.f32 %v2135, %v2136
    %v2138 = vrot.slane %v2137, 1
    %v2139 = vadd.f32 %v2137, %v2138
    %v2140 = vmul.f32 %v2133, %v319
    %v2141 = vmul.f32 %v2139, %v319
    %v2142 = vmul.f32 %v2124, %v2124
    %v2143 = vmul.f32 %v2125, %v2125
    %v2144 = vrot.slane %v2142, 4
    %v2145 = vadd.f32 %v2142, %v2144
    %v2146 = vrot.slane %v2145, 2
    %v2147 = vadd.f32 %v2145, %v2146
    %v2148 = vrot.slane %v2147, 1
    %v2149 = vadd.f32 %v2147, %v2148
    %v2150 = vrot.slane %v2143, 4
    %v2151 = vadd.f32 %v2143, %v2150
    %v2152 = vrot.slane %v2151, 2
    %v2153 = vadd.f32 %v2151, %v2152
    %v2154 = vrot.slane %v2153, 1
    %v2155 = vadd.f32 %v2153, %v2154
    %v2156 = vmul.f32 %v2149, %v319
    %v2157 = vmul.f32 %v2155, %v319
    %v2158 = vmul.f32 %v2140, %v2140
    %v2159 = vmul.f32 %v2141, %v2141
    %v2160 = vsub.f32 %v2156, %v2158
    %v2161 = vsub.f32 %v2157, %v2159
    %v2162 = vmax.f32 %v2160, 0.0
    %v2163 = vmax.f32 %v2161, 0.0
    %v2164 = vadd.f32 %v2162, 1e-05
    %v2165 = vadd.f32 %v2163, 1e-05
    %v2166 = vrsqrt.pop %v2164
    %v2167 = vrsqrt.pop %v2165
    %v2170 = vcombine.low %v2166, %v2167
    %v2171 = vrot.slane %v2170, 7
    %v2173 = vmul.f32 %v1899, %v2171
    %v2175 = vlaneseq
    %v2176 = vshrl.u32 %v2175, 7
    %v2177 = vsub.s32 1, %v2176
    %v2178 = vrot.slane %v2173, %v2177
    %v2179 = vlaneseq
    %v2180 = vshrl.u32 %v2179, 7
    %v2181 = vsub.s32 5, %v2180
    %v2182 = vrot.slane %v2173, %v2181
    %v2185 = vmul.f32 %v2140, %v2178
    %v2186 = vmul.f32 %v2141, %v2182
    %v2189 = vcombine.low %v2185, %v2186
    %v2190 = vrot.slane %v2189, 6
    %v2192 = vsub.f32 %v1899, %v2190
    %v2193 = vlaneseq
    %v2194 = vshrl.u32 %v2193, 7
    %v2195 = vsub.s32 1, %v2194
    %v2196 = vrot.slane %v2178, %v2195
    %v2197 = vlaneseq
    %v2198 = vshrl.u32 %v2197, 7
    %v2199 = vsub.s32 1, %v2198
    %v2200 = vrot.slane %v2182, %v2199
    %v2201 = vmul.f32 %v2124, %v2196
    %v2202 = vmul.f32 %v2125, %v2200
    %v2204 = vlaneseq
    %v2205 = vshrl.u32 %v2204, 7
    %v2206 = vsub.s32 2, %v2205
    %v2207 = vrot.slane %v2192, %v2206
    %v2208 = vlaneseq
    %v2209 = vshrl.u32 %v2208, 7
    %v2210 = vsub.s32 6, %v2209
    %v2211 = vrot.slane %v2192, %v2210
    %v2214 = vlaneseq
    %v2215 = vshrl.u32 %v2214, 7
    %v2216 = vsub.s32 2, %v2215
    %v2217 = vrot.slane %v2207, %v2216
    %v2218 = vlaneseq
    %v2219 = vshrl.u32 %v2218, 7
    %v2220 = vsub.s32 2, %v2219
    %v2221 = vrot.slane %v2211, %v2220
    %v2222 = vadd.f32 %v2201, %v2217
    %v2223 = vadd.f32 %v2202, %v2221
    %v2224 = vrot.slane %v2126, 4
    %v2225 = vadd.f32 %v2126, %v2224
    %v2226 = vrot.slane %v2225, 2
    %v2227 = vadd.f32 %v2225, %v2226
    %v2228 = vrot.slane %v2227, 1
    %v2229 = vadd.f32 %v2227, %v2228
    %v2230 = vrot.slane %v2127, 4
    %v2231 = vadd.f32 %v2127, %v2230
    %v2232 = vrot.slane %v2231, 2
    %v2233 = vadd.f32 %v2231, %v2232
    %v2234 = vrot.slane %v2233, 1
    %v2235 = vadd.f32 %v2233, %v2234
    %v2236 = vmul.f32 %v2229, %v319
    %v2237 = vmul.f32 %v2235, %v319
    %v2238 = vmul.f32 %v2126, %v2126
    %v2239 = vmul.f32 %v2127, %v2127
    %v2240 = vrot.slane %v2238, 4
    %v2241 = vadd.f32 %v2238, %v2240
    %v2242 = vrot.slane %v2241, 2
    %v2243 = vadd.f32 %v2241, %v2242
    %v2244 = vrot.slane %v2243, 1
    %v2245 = vadd.f32 %v2243, %v2244
    %v2246 = vrot.slane %v2239, 4
    %v2247 = vadd.f32 %v2239, %v2246
    %v2248 = vrot.slane %v2247, 2
    %v2249 = vadd.f32 %v2247, %v2248
    %v2250 = vrot.slane %v2249, 1
    %v2251 = vadd.f32 %v2249, %v2250
    %v2252 = vmul.f32 %v2245, %v319
    %v2253 = vmul.f32 %v2251, %v319
    %v2254 = vmul.f32 %v2236, %v2236
    %v2255 = vmul.f32 %v2237, %v2237
    %v2256 = vsub.f32 %v2252, %v2254
    %v2257 = vsub.f32 %v2253, %v2255
    %v2258 = vmax.f32 %v2256, 0.0
    %v2259 = vmax.f32 %v2257, 0.0
    %v2260 = vadd.f32 %v2258, 1e-05
    %v2261 = vadd.f32 %v2259, 1e-05
    %v2262 = vrsqrt.pop %v2260
    %v2263 = vrsqrt.pop %v2261
    %v2266 = vcombine.low %v2262, %v2263
    %v2267 = vrot.slane %v2266, 7
    %v2269 = vmul.f32 %v1899, %v2267
    %v2271 = vlaneseq
    %v2272 = vshrl.u32 %v2271, 7
    %v2273 = vsub.s32 1, %v2272
    %v2274 = vrot.slane %v2269, %v2273
    %v2275 = vlaneseq
    %v2276 = vshrl.u32 %v2275, 7
    %v2277 = vsub.s32 5, %v2276
    %v2278 = vrot.slane %v2269, %v2277
    %v2281 = vmul.f32 %v2236, %v2274
    %v2282 = vmul.f32 %v2237, %v2278
    %v2285 = vcombine.low %v2281, %v2282
    %v2286 = vrot.slane %v2285, 6
    %v2288 = vsub.f32 %v1899, %v2286
    %v2289 = vlaneseq
    %v2290 = vshrl.u32 %v2289, 7
    %v2291 = vsub.s32 1, %v2290
    %v2292 = vrot.slane %v2274, %v2291
    %v2293 = vlaneseq
    %v2294 = vshrl.u32 %v2293, 7
    %v2295 = vsub.s32 1, %v2294
    %v2296 = vrot.slane %v2278, %v2295
    %v2297 = vmul.f32 %v2126, %v2292
    %v2298 = vmul.f32 %v2127, %v2296
    %v2300 = vlaneseq
    %v2301 = vshrl.u32 %v2300, 7
    %v2302 = vsub.s32 2, %v2301
    %v2303 = vrot.slane %v2288, %v2302
    %v2304 = vlaneseq
    %v2305 = vshrl.u32 %v2304, 7
    %v2306 = vsub.s32 6, %v2305
    %v2307 = vrot.slane %v2288, %v2306
    %v2310 = vlaneseq
    %v2311 = vshrl.u32 %v2310, 7
    %v2312 = vsub.s32 2, %v2311
    %v2313 = vrot.slane %v2303, %v2312
    %v2314 = vlaneseq
    %v2315 = vshrl.u32 %v2314, 7
    %v2316 = vsub.s32 2, %v2315
    %v2317 = vrot.slane %v2307, %v2316
    %v2318 = vadd.f32 %v2297, %v2313
    %v2319 = vadd.f32 %v2298, %v2317
    %v2320 = vmul.f32 %v2222, %v2318
    %v2321 = vmul.f32 %v2223, %v2319
    %s2322 = scalar_lea.vmem [#allocation2], 1280
    %v2323 = vld [vmem:[%s2322] sm:$0xff]
    %v2324 = vld [vmem:[%s2322 + $0x8] sm:$0xff]
    %v2325 = vld [vmem:[%s2322 + $0x10] sm:$0xff]
    %v2326 = vld [vmem:[%s2322 + $0x18] sm:$0xff]
    %v2327 = vld [vmem:[%s2322 + $0x20] sm:$0xff]
    %v2328 = vld [vmem:[%s2322 + $0x28] sm:$0xff]
    %v2329 = vld [vmem:[%s2322 + $0x30] sm:$0xff]
    %v2330 = vld [vmem:[%s2322 + $0x38] sm:$0xff]
    %v2331 = vld [vmem:[%s2322 + $0x40] sm:$0xff]
    %v2332 = vld [vmem:[%s2322 + $0x48] sm:$0xff]
    %v2333 = vld [vmem:[%s2322 + $0x50] sm:$0xff]
    %v2334 = vld [vmem:[%s2322 + $0x58] sm:$0xff]
    %v2335 = vld [vmem:[%s2322 + $0x60] sm:$0xff]
    %v2336 = vld [vmem:[%s2322 + $0x68] sm:$0xff]
    %v2337 = vld [vmem:[%s2322 + $0x70] sm:$0xff]
    %v2338 = vld [vmem:[%s2322 + $0x78] sm:$0xff]
    %v2339 = vld [vmem:[%s2322 + $0x80] sm:$0xff]
    %v2340 = vld [vmem:[%s2322 + $0x88] sm:$0xff]
    %v2341 = vld [vmem:[%s2322 + $0x90] sm:$0xff]
    %v2342 = vld [vmem:[%s2322 + $0x98] sm:$0xff]
    %v2343 = vld [vmem:[%s2322 + $0xa0] sm:$0xff]
    %v2344 = vld [vmem:[%s2322 + $0xa8] sm:$0xff]
    %v2345 = vld [vmem:[%s2322 + $0xb0] sm:$0xff]
    %v2346 = vld [vmem:[%s2322 + $0xb8] sm:$0xff]
    %v2347 = vld [vmem:[%s2322 + $0xc0] sm:$0xff]
    %v2348 = vld [vmem:[%s2322 + $0xc8] sm:$0xff]
    %v2349 = vld [vmem:[%s2322 + $0xd0] sm:$0xff]
    %v2350 = vld [vmem:[%s2322 + $0xd8] sm:$0xff]
    %v2351 = vld [vmem:[%s2322 + $0xe0] sm:$0xff]
    %v2352 = vld [vmem:[%s2322 + $0xe8] sm:$0xff]
    %v2353 = vld [vmem:[%s2322 + $0xf0] sm:$0xff]
    %v2354 = vld [vmem:[%s2322 + $0xf8] sm:$0xff]
    %s2355 = scalar_lea.vmem [#allocation4], 40
    %v2356 = vld [vmem:[%s2355] sm:$0x77]
    %v2357 = vpack.c.bf16 %v2320, %v2320
    %v2358 = vpack.c.bf16 %v2321, %v2321
    %v2360 = vlaneseq
    %v2361 = vshrl.u32 %v2360, 7
    %v2362 = vsub.s32 0, %v2361
    %v2363 = vrot.slane %v2356, %v2362
    %v2364 = vlaneseq
    %v2365 = vshrl.u32 %v2364, 7
    %v2366 = vsub.s32 4, %v2365
    %v2367 = vrot.slane %v2356, %v2366
    %v2370 = vlaneseq
    %v2371 = vshrl.u32 %v2370, 7
    %v2372 = vsub.s32 0, %v2371
    %v2373 = vrot.slane %v2363, %v2372
    %v2374 = vlaneseq
    %v2375 = vshrl.u32 %v2374, 7
    %v2376 = vsub.s32 0, %v2375
    %v2377 = vrot.slane %v2367, %v2376
    %v2410 = vunpack.c.l.b16 %v2323
    %v2411 = vunpack.c.h.b16 %v2323
    %v2412 = vunpack.c.l.b16 %v2324
    %v2413 = vunpack.c.h.b16 %v2324
    %v2414 = vunpack.c.l.b16 %v2325
    %v2415 = vunpack.c.h.b16 %v2325
    %v2416 = vunpack.c.l.b16 %v2326
    %v2417 = vunpack.c.h.b16 %v2326
    %v2418 = vunpack.c.l.b16 %v2327
    %v2419 = vunpack.c.h.b16 %v2327
    %v2420 = vunpack.c.l.b16 %v2328
    %v2421 = vunpack.c.h.b16 %v2328
    %v2422 = vunpack.c.l.b16 %v2329
    %v2423 = vunpack.c.h.b16 %v2329
    %v2424 = vunpack.c.l.b16 %v2330
    %v2425 = vunpack.c.h.b16 %v2330
    %v2426 = vunpack.c.l.b16 %v2331
    %v2427 = vunpack.c.h.b16 %v2331
    %v2428 = vunpack.c.l.b16 %v2332
    %v2429 = vunpack.c.h.b16 %v2332
    %v2430 = vunpack.c.l.b16 %v2333
    %v2431 = vunpack.c.h.b16 %v2333
    %v2432 = vunpack.c.l.b16 %v2334
    %v2433 = vunpack.c.h.b16 %v2334
    %v2434 = vunpack.c.l.b16 %v2335
    %v2435 = vunpack.c.h.b16 %v2335
    %v2436 = vunpack.c.l.b16 %v2336
    %v2437 = vunpack.c.h.b16 %v2336
    %v2438 = vunpack.c.l.b16 %v2337
    %v2439 = vunpack.c.h.b16 %v2337
    %v2440 = vunpack.c.l.b16 %v2338
    %v2441 = vunpack.c.h.b16 %v2338
    %v2442 = vunpack.c.l.b16 %v2339
    %v2443 = vunpack.c.h.b16 %v2339
    %v2444 = vunpack.c.l.b16 %v2340
    %v2445 = vunpack.c.h.b16 %v2340
    %v2446 = vunpack.c.l.b16 %v2341
    %v2447 = vunpack.c.h.b16 %v2341
    %v2448 = vunpack.c.l.b16 %v2342
    %v2449 = vunpack.c.h.b16 %v2342
    %v2450 = vunpack.c.l.b16 %v2343
    %v2451 = vunpack.c.h.b16 %v2343
    %v2452 = vunpack.c.l.b16 %v2344
    %v2453 = vunpack.c.h.b16 %v2344
    %v2454 = vunpack.c.l.b16 %v2345
    %v2455 = vunpack.c.h.b16 %v2345
    %v2456 = vunpack.c.l.b16 %v2346
    %v2457 = vunpack.c.h.b16 %v2346
    %v2458 = vunpack.c.l.b16 %v2347
    %v2459 = vunpack.c.h.b16 %v2347
    %v2460 = vunpack.c.l.b16 %v2348
    %v2461 = vunpack.c.h.b16 %v2348
    %v2462 = vunpack.c.l.b16 %v2349
    %v2463 = vunpack.c.h.b16 %v2349
    %v2464 = vunpack.c.l.b16 %v2350
    %v2465 = vunpack.c.h.b16 %v2350
    %v2466 = vunpack.c.l.b16 %v2351
    %v2467 = vunpack.c.h.b16 %v2351
    %v2468 = vunpack.c.l.b16 %v2352
    %v2469 = vunpack.c.h.b16 %v2352
    %v2470 = vunpack.c.l.b16 %v2353
    %v2471 = vunpack.c.h.b16 %v2353
    %v2472 = vunpack.c.l.b16 %v2354
    %v2473 = vunpack.c.h.b16 %v2354
    %v2474 = vpack.c.b16 %v2412, %v2410
    %v2475 = vpack.c.b16 %v2413, %v2411
    %v2476 = vpack.c.b16 %v2416, %v2414
    %v2477 = vpack.c.b16 %v2417, %v2415
    %v2478 = vpack.c.b16 %v2420, %v2418
    %v2479 = vpack.c.b16 %v2421, %v2419
    %v2480 = vpack.c.b16 %v2424, %v2422
    %v2481 = vpack.c.b16 %v2425, %v2423
    %v2482 = vpack.c.b16 %v2428, %v2426
    %v2483 = vpack.c.b16 %v2429, %v2427
    %v2484 = vpack.c.b16 %v2432, %v2430
    %v2485 = vpack.c.b16 %v2433, %v2431
    %v2486 = vpack.c.b16 %v2436, %v2434
    %v2487 = vpack.c.b16 %v2437, %v2435
    %v2488 = vpack.c.b16 %v2440, %v2438
    %v2489 = vpack.c.b16 %v2441, %v2439
    %v2490 = vpack.c.b16 %v2444, %v2442
    %v2491 = vpack.c.b16 %v2445, %v2443
    %v2492 = vpack.c.b16 %v2448, %v2446
    %v2493 = vpack.c.b16 %v2449, %v2447
    %v2494 = vpack.c.b16 %v2452, %v2450
    %v2495 = vpack.c.b16 %v2453, %v2451
    %v2496 = vpack.c.b16 %v2456, %v2454
    %v2497 = vpack.c.b16 %v2457, %v2455
    %v2498 = vpack.c.b16 %v2460, %v2458
    %v2499 = vpack.c.b16 %v2461, %v2459
    %v2500 = vpack.c.b16 %v2464, %v2462
    %v2501 = vpack.c.b16 %v2465, %v2463
    %v2502 = vpack.c.b16 %v2468, %v2466
    %v2503 = vpack.c.b16 %v2469, %v2467
    %v2504 = vpack.c.b16 %v2472, %v2470
    %v2505 = vpack.c.b16 %v2473, %v2471
    %2538 = vmatprep.subr.bf16.mxu0 %v2475
    %2539 = vmatpush1.bf16.msra.mxu0 %v2474
    %2540 = vmatprep.subr.bf16.mxu0 %v2477
    %2541 = vmatpush1.bf16.msra.mxu0 %v2476
    %2542 = vmatprep.subr.bf16.mxu0 %v2479
    %2543 = vmatpush1.bf16.msra.mxu0 %v2478
    %2544 = vmatprep.subr.bf16.mxu0 %v2481
    %2545 = vmatpush1.bf16.msra.mxu0 %v2480
    %2546 = vmatprep.subr.bf16.mxu0 %v2483
    %2547 = vmatpush1.bf16.msra.mxu0 %v2482
    %2548 = vmatprep.subr.bf16.mxu0 %v2485
    %2549 = vmatpush1.bf16.msra.mxu0 %v2484
    %2550 = vmatprep.subr.bf16.mxu0 %v2487
    %2551 = vmatpush1.bf16.msra.mxu0 %v2486
    %2552 = vmatprep.subr.bf16.mxu0 %v2489
    %2553 = vmatpush1.bf16.msra.mxu0 %v2488
    %2554 = vmatprep.subr.bf16.mxu0 %v2491
    %2555 = vmatpush1.bf16.msra.mxu0 %v2490
    %2556 = vmatprep.subr.bf16.mxu0 %v2493
    %2557 = vmatpush1.bf16.msra.mxu0 %v2492
    %2558 = vmatprep.subr.bf16.mxu0 %v2495
    %2559 = vmatpush1.bf16.msra.mxu0 %v2494
    %2560 = vmatprep.subr.bf16.mxu0 %v2497
    %2561 = vmatpush1.bf16.msra.mxu0 %v2496
    %2562 = vmatprep.subr.bf16.mxu0 %v2499
    %2563 = vmatpush1.bf16.msra.mxu0 %v2498
    %2564 = vmatprep.subr.bf16.mxu0 %v2501
    %2565 = vmatpush1.bf16.msra.mxu0 %v2500
    %2566 = vmatprep.subr.bf16.mxu0 %v2503
    %2567 = vmatpush1.bf16.msra.mxu0 %v2502
    %2568 = vmatprep.subr.bf16.mxu0 %v2505
    %2569 = vmatpush1.bf16.msra.mxu0 %v2504
    %2570 = vmatprep.mubr.bf16.mxu0 %v2358
    %2571 = vmatmul.mubr.bf16.gmra.mrb[0].mxu0 %v2357
    %v2572 = vpop.f32.mrb[0].mxu0
    %v2573 = vadd.f32 %v2373, %v2572
    %v2574 = vpop.f32.mrb[0].mxu0
    %v2575 = vadd.f32 %v2377, %v2574
    %v2576 = vpop.f32.mrb[0].mxu0
    %v2577 = vpop.f32.mrb[0].mxu0
    %2578 = vdwg.mxu0
    %v2579 = vmax.f32 %v2573, 0.0
    %v2580 = vmax.f32 %v2575, 0.0
    %v2581 = vrot.slane %v2579, 4
    %v2582 = vadd.f32 %v2579, %v2581
    %v2583 = vrot.slane %v2582, 2
    %v2584 = vadd.f32 %v2582, %v2583
    %v2585 = vrot.slane %v2584, 1
    %v2586 = vadd.f32 %v2584, %v2585
    %v2587 = vrot.slane %v2580, 4
    %v2588 = vadd.f32 %v2580, %v2587
    %v2589 = vrot.slane %v2588, 2
    %v2590 = vadd.f32 %v2588, %v2589
    %v2591 = vrot.slane %v2590, 1
    %v2592 = vadd.f32 %v2590, %v2591
    %v2593 = vmul.f32 %v2586, %v319
    %v2594 = vmul.f32 %v2592, %v319
    %v2595 = vmul.f32 %v2579, %v2579
    %v2596 = vmul.f32 %v2580, %v2580
    %v2597 = vrot.slane %v2595, 4
    %v2598 = vadd.f32 %v2595, %v2597
    %v2599 = vrot.slane %v2598, 2
    %v2600 = vadd.f32 %v2598, %v2599
    %v2601 = vrot.slane %v2600, 1
    %v2602 = vadd.f32 %v2600, %v2601
    %v2603 = vrot.slane %v2596, 4
    %v2604 = vadd.f32 %v2596, %v2603
    %v2605 = vrot.slane %v2604, 2
    %v2606 = vadd.f32 %v2604, %v2605
    %v2607 = vrot.slane %v2606, 1
    %v2608 = vadd.f32 %v2606, %v2607
    %v2609 = vmul.f32 %v2602, %v319
    %v2610 = vmul.f32 %v2608, %v319
    %v2611 = vmul.f32 %v2593, %v2593
    %v2612 = vmul.f32 %v2594, %v2594
    %v2613 = vsub.f32 %v2609, %v2611
    %v2614 = vsub.f32 %v2610, %v2612
    %v2615 = vmax.f32 %v2613, 0.0
    %v2616 = vmax.f32 %v2614, 0.0
    %v2617 = vadd.f32 %v2615, 1e-05
    %v2618 = vadd.f32 %v2616, 1e-05
    %v2619 = vrsqrt.pop %v2617
    %v2620 = vrsqrt.pop %v2618
    %v2623 = vcombine.low %v2619, %v2620
    %v2624 = vrot.slane %v2623, 7
    %v2626 = vmul.f32 %v2356, %v2624
    %v2628 = vlaneseq
    %v2629 = vshrl.u32 %v2628, 7
    %v2630 = vsub.s32 1, %v2629
    %v2631 = vrot.slane %v2626, %v2630
    %v2632 = vlaneseq
    %v2633 = vshrl.u32 %v2632, 7
    %v2634 = vsub.s32 5, %v2633
    %v2635 = vrot.slane %v2626, %v2634
    %v2638 = vmul.f32 %v2593, %v2631
    %v2639 = vmul.f32 %v2594, %v2635
    %v2642 = vcombine.low %v2638, %v2639
    %v2643 = vrot.slane %v2642, 6
    %v2645 = vsub.f32 %v2356, %v2643
    %v2646 = vlaneseq
    %v2647 = vshrl.u32 %v2646, 7
    %v2648 = vsub.s32 1, %v2647
    %v2649 = vrot.slane %v2631, %v2648
    %v2650 = vlaneseq
    %v2651 = vshrl.u32 %v2650, 7
    %v2652 = vsub.s32 1, %v2651
    %v2653 = vrot.slane %v2635, %v2652
    %v2654 = vmul.f32 %v2579, %v2649
    %v2655 = vmul.f32 %v2580, %v2653
    %v2657 = vlaneseq
    %v2658 = vshrl.u32 %v2657, 7
    %v2659 = vsub.s32 2, %v2658
    %v2660 = vrot.slane %v2645, %v2659
    %v2661 = vlaneseq
    %v2662 = vshrl.u32 %v2661, 7
    %v2663 = vsub.s32 6, %v2662
    %v2664 = vrot.slane %v2645, %v2663
    %v2667 = vlaneseq
    %v2668 = vshrl.u32 %v2667, 7
    %v2669 = vsub.s32 2, %v2668
    %v2670 = vrot.slane %v2660, %v2669
    %v2671 = vlaneseq
    %v2672 = vshrl.u32 %v2671, 7
    %v2673 = vsub.s32 2, %v2672
    %v2674 = vrot.slane %v2664, %v2673
    %v2675 = vadd.f32 %v2654, %v2670
    %v2676 = vadd.f32 %v2655, %v2674
    %s2677 = scalar_lea.vmem [#allocation2], 1536
    %v2678 = vld [vmem:[%s2677] sm:$0xff]
    %v2679 = vld [vmem:[%s2677 + $0x8] sm:$0xff]
    %v2680 = vld [vmem:[%s2677 + $0x10] sm:$0xff]
    %v2681 = vld [vmem:[%s2677 + $0x18] sm:$0xff]
    %v2682 = vld [vmem:[%s2677 + $0x20] sm:$0xff]
    %v2683 = vld [vmem:[%s2677 + $0x28] sm:$0xff]
    %v2684 = vld [vmem:[%s2677 + $0x30] sm:$0xff]
    %v2685 = vld [vmem:[%s2677 + $0x38] sm:$0xff]
    %v2686 = vld [vmem:[%s2677 + $0x40] sm:$0xff]
    %v2687 = vld [vmem:[%s2677 + $0x48] sm:$0xff]
    %v2688 = vld [vmem:[%s2677 + $0x50] sm:$0xff]
    %v2689 = vld [vmem:[%s2677 + $0x58] sm:$0xff]
    %v2690 = vld [vmem:[%s2677 + $0x60] sm:$0xff]
    %v2691 = vld [vmem:[%s2677 + $0x68] sm:$0xff]
    %v2692 = vld [vmem:[%s2677 + $0x70] sm:$0xff]
    %v2693 = vld [vmem:[%s2677 + $0x78] sm:$0xff]
    %v2694 = vld [vmem:[%s2677 + $0x80] sm:$0xff]
    %v2695 = vld [vmem:[%s2677 + $0x88] sm:$0xff]
    %v2696 = vld [vmem:[%s2677 + $0x90] sm:$0xff]
    %v2697 = vld [vmem:[%s2677 + $0x98] sm:$0xff]
    %v2698 = vld [vmem:[%s2677 + $0xa0] sm:$0xff]
    %v2699 = vld [vmem:[%s2677 + $0xa8] sm:$0xff]
    %v2700 = vld [vmem:[%s2677 + $0xb0] sm:$0xff]
    %v2701 = vld [vmem:[%s2677 + $0xb8] sm:$0xff]
    %v2702 = vld [vmem:[%s2677 + $0xc0] sm:$0xff]
    %v2703 = vld [vmem:[%s2677 + $0xc8] sm:$0xff]
    %v2704 = vld [vmem:[%s2677 + $0xd0] sm:$0xff]
    %v2705 = vld [vmem:[%s2677 + $0xd8] sm:$0xff]
    %v2706 = vld [vmem:[%s2677 + $0xe0] sm:$0xff]
    %v2707 = vld [vmem:[%s2677 + $0xe8] sm:$0xff]
    %v2708 = vld [vmem:[%s2677 + $0xf0] sm:$0xff]
    %v2709 = vld [vmem:[%s2677 + $0xf8] sm:$0xff]
    %s2710 = scalar_lea.vmem [#allocation4], 48
    %v2711 = vld [vmem:[%s2710] sm:$0x77]
    %v2712 = vpack.c.bf16 %v2675, %v2675
    %v2713 = vpack.c.bf16 %v2676, %v2676
    %v2715 = vlaneseq
    %v2716 = vshrl.u32 %v2715, 7
    %v2717 = vsub.s32 0, %v2716
    %v2718 = vrot.slane %v2711, %v2717
    %v2719 = vlaneseq
    %v2720 = vshrl.u32 %v2719, 7
    %v2721 = vsub.s32 4, %v2720
    %v2722 = vrot.slane %v2711, %v2721
    %v2725 = vlaneseq
    %v2726 = vshrl.u32 %v2725, 7
    %v2727 = vsub.s32 0, %v2726
    %v2728 = vrot.slane %v2718, %v2727
    %v2729 = vlaneseq
    %v2730 = vshrl.u32 %v2729, 7
    %v2731 = vsub.s32 0, %v2730
    %v2732 = vrot.slane %v2722, %v2731
    %v2765 = vunpack.c.l.b16 %v2678
    %v2766 = vunpack.c.h.b16 %v2678
    %v2767 = vunpack.c.l.b16 %v2679
    %v2768 = vunpack.c.h.b16 %v2679
    %v2769 = vunpack.c.l.b16 %v2680
    %v2770 = vunpack.c.h.b16 %v2680
    %v2771 = vunpack.c.l.b16 %v2681
    %v2772 = vunpack.c.h.b16 %v2681
    %v2773 = vunpack.c.l.b16 %v2682
    %v2774 = vunpack.c.h.b16 %v2682
    %v2775 = vunpack.c.l.b16 %v2683
    %v2776 = vunpack.c.h.b16 %v2683
    %v2777 = vunpack.c.l.b16 %v2684
    %v2778 = vunpack.c.h.b16 %v2684
    %v2779 = vunpack.c.l.b16 %v2685
    %v2780 = vunpack.c.h.b16 %v2685
    %v2781 = vunpack.c.l.b16 %v2686
    %v2782 = vunpack.c.h.b16 %v2686
    %v2783 = vunpack.c.l.b16 %v2687
    %v2784 = vunpack.c.h.b16 %v2687
    %v2785 = vunpack.c.l.b16 %v2688
    %v2786 = vunpack.c.h.b16 %v2688
    %v2787 = vunpack.c.l.b16 %v2689
    %v2788 = vunpack.c.h.b16 %v2689
    %v2789 = vunpack.c.l.b16 %v2690
    %v2790 = vunpack.c.h.b16 %v2690
    %v2791 = vunpack.c.l.b16 %v2691
    %v2792 = vunpack.c.h.b16 %v2691
    %v2793 = vunpack.c.l.b16 %v2692
    %v2794 = vunpack.c.h.b16 %v2692
    %v2795 = vunpack.c.l.b16 %v2693
    %v2796 = vunpack.c.h.b16 %v2693
    %v2797 = vunpack.c.l.b16 %v2694
    %v2798 = vunpack.c.h.b16 %v2694
    %v2799 = vunpack.c.l.b16 %v2695
    %v2800 = vunpack.c.h.b16 %v2695
    %v2801 = vunpack.c.l.b16 %v2696
    %v2802 = vunpack.c.h.b16 %v2696
    %v2803 = vunpack.c.l.b16 %v2697
    %v2804 = vunpack.c.h.b16 %v2697
    %v2805 = vunpack.c.l.b16 %v2698
    %v2806 = vunpack.c.h.b16 %v2698
    %v2807 = vunpack.c.l.b16 %v2699
    %v2808 = vunpack.c.h.b16 %v2699
    %v2809 = vunpack.c.l.b16 %v2700
    %v2810 = vunpack.c.h.b16 %v2700
    %v2811 = vunpack.c.l.b16 %v2701
    %v2812 = vunpack.c.h.b16 %v2701
    %v2813 = vunpack.c.l.b16 %v2702
    %v2814 = vunpack.c.h.b16 %v2702
    %v2815 = vunpack.c.l.b16 %v2703
    %v2816 = vunpack.c.h.b16 %v2703
    %v2817 = vunpack.c.l.b16 %v2704
    %v2818 = vunpack.c.h.b16 %v2704
    %v2819 = vunpack.c.l.b16 %v2705
    %v2820 = vunpack.c.h.b16 %v2705
    %v2821 = vunpack.c.l.b16 %v2706
    %v2822 = vunpack.c.h.b16 %v2706
    %v2823 = vunpack.c.l.b16 %v2707
    %v2824 = vunpack.c.h.b16 %v2707
    %v2825 = vunpack.c.l.b16 %v2708
    %v2826 = vunpack.c.h.b16 %v2708
    %v2827 = vunpack.c.l.b16 %v2709
    %v2828 = vunpack.c.h.b16 %v2709
    %v2829 = vpack.c.b16 %v2767, %v2765
    %v2830 = vpack.c.b16 %v2768, %v2766
    %v2831 = vpack.c.b16 %v2771, %v2769
    %v2832 = vpack.c.b16 %v2772, %v2770
    %v2833 = vpack.c.b16 %v2775, %v2773
    %v2834 = vpack.c.b16 %v2776, %v2774
    %v2835 = vpack.c.b16 %v2779, %v2777
    %v2836 = vpack.c.b16 %v2780, %v2778
    %v2837 = vpack.c.b16 %v2783, %v2781
    %v2838 = vpack.c.b16 %v2784, %v2782
    %v2839 = vpack.c.b16 %v2787, %v2785
    %v2840 = vpack.c.b16 %v2788, %v2786
    %v2841 = vpack.c.b16 %v2791, %v2789
    %v2842 = vpack.c.b16 %v2792, %v2790
    %v2843 = vpack.c.b16 %v2795, %v2793
    %v2844 = vpack.c.b16 %v2796, %v2794
    %v2845 = vpack.c.b16 %v2799, %v2797
    %v2846 = vpack.c.b16 %v2800, %v2798
    %v2847 = vpack.c.b16 %v2803, %v2801
    %v2848 = vpack.c.b16 %v2804, %v2802
    %v2849 = vpack.c.b16 %v2807, %v2805
    %v2850 = vpack.c.b16 %v2808, %v2806
    %v2851 = vpack.c.b16 %v2811, %v2809
    %v2852 = vpack.c.b16 %v2812, %v2810
    %v2853 = vpack.c.b16 %v2815, %v2813
    %v2854 = vpack.c.b16 %v2816, %v2814
    %v2855 = vpack.c.b16 %v2819, %v2817
    %v2856 = vpack.c.b16 %v2820, %v2818
    %v2857 = vpack.c.b16 %v2823, %v2821
    %v2858 = vpack.c.b16 %v2824, %v2822
    %v2859 = vpack.c.b16 %v2827, %v2825
    %v2860 = vpack.c.b16 %v2828, %v2826
    %2893 = vmatprep.subr.bf16.mxu0 %v2830
    %2894 = vmatpush1.bf16.msra.mxu0 %v2829
    %2895 = vmatprep.subr.bf16.mxu0 %v2832
    %2896 = vmatpush1.bf16.msra.mxu0 %v2831
    %2897 = vmatprep.subr.bf16.mxu0 %v2834
    %2898 = vmatpush1.bf16.msra.mxu0 %v2833
    %2899 = vmatprep.subr.bf16.mxu0 %v2836
    %2900 = vmatpush1.bf16.msra.mxu0 %v2835
    %2901 = vmatprep.subr.bf16.mxu0 %v2838
    %2902 = vmatpush1.bf16.msra.mxu0 %v2837
    %2903 = vmatprep.subr.bf16.mxu0 %v2840
    %2904 = vmatpush1.bf16.msra.mxu0 %v2839
    %2905 = vmatprep.subr.bf16.mxu0 %v2842
    %2906 = vmatpush1.bf16.msra.mxu0 %v2841
    %2907 = vmatprep.subr.bf16.mxu0 %v2844
    %2908 = vmatpush1.bf16.msra.mxu0 %v2843
    %2909 = vmatprep.subr.bf16.mxu0 %v2846
    %2910 = vmatpush1.bf16.msra.mxu0 %v2845
    %2911 = vmatprep.subr.bf16.mxu0 %v2848
    %2912 = vmatpush1.bf16.msra.mxu0 %v2847
    %2913 = vmatprep.subr.bf16.mxu0 %v2850
    %2914 = vmatpush1.bf16.msra.mxu0 %v2849
    %2915 = vmatprep.subr.bf16.mxu0 %v2852
    %2916 = vmatpush1.bf16.msra.mxu0 %v2851
    %2917 = vmatprep.subr.bf16.mxu0 %v2854
    %2918 = vmatpush1.bf16.msra.mxu0 %v2853
    %2919 = vmatprep.subr.bf16.mxu0 %v2856
    %2920 = vmatpush1.bf16.msra.mxu0 %v2855
    %2921 = vmatprep.subr.bf16.mxu0 %v2858
    %2922 = vmatpush1.bf16.msra.mxu0 %v2857
    %2923 = vmatprep.subr.bf16.mxu0 %v2860
    %2924 = vmatpush1.bf16.msra.mxu0 %v2859
    %2925 = vmatprep.mubr.bf16.mxu0 %v2713
    %2926 = vmatmul.mubr.bf16.gmra.mrb[0].mxu0 %v2712
    %v2927 = vpop.f32.mrb[0].mxu0
    %v2928 = vadd.f32 %v2728, %v2927
    %v2929 = vpop.f32.mrb[0].mxu0
    %v2930 = vadd.f32 %v2732, %v2929
    %v2931 = vpop.f32.mrb[0].mxu0
    %v2932 = vpop.f32.mrb[0].mxu0
    %2933 = vdwg.mxu0
    %v2934 = vmax.f32 %v2928, 0.0
    %v2935 = vmax.f32 %v2930, 0.0
    %v2936 = vrot.slane %v2934, 4
    %v2937 = vadd.f32 %v2934, %v2936
    %v2938 = vrot.slane %v2937, 2
    %v2939 = vadd.f32 %v2937, %v2938
    %v2940 = vrot.slane %v2939, 1
    %v2941 = vadd.f32 %v2939, %v2940
    %v2942 = vrot.slane %v2935, 4
    %v2943 = vadd.f32 %v2935, %v2942
    %v2944 = vrot.slane %v2943, 2
    %v2945 = vadd.f32 %v2943, %v2944
    %v2946 = vrot.slane %v2945, 1
    %v2947 = vadd.f32 %v2945, %v2946
    %v2948 = vmul.f32 %v2941, %v319
    %v2949 = vmul.f32 %v2947, %v319
    %v2950 = vmul.f32 %v2934, %v2934
    %v2951 = vmul.f32 %v2935, %v2935
    %v2952 = vrot.slane %v2950, 4
    %v2953 = vadd.f32 %v2950, %v2952
    %v2954 = vrot.slane %v2953, 2
    %v2955 = vadd.f32 %v2953, %v2954
    %v2956 = vrot.slane %v2955, 1
    %v2957 = vadd.f32 %v2955, %v2956
    %v2958 = vrot.slane %v2951, 4
    %v2959 = vadd.f32 %v2951, %v2958
    %v2960 = vrot.slane %v2959, 2
    %v2961 = vadd.f32 %v2959, %v2960
    %v2962 = vrot.slane %v2961, 1
    %v2963 = vadd.f32 %v2961, %v2962
    %v2964 = vmul.f32 %v2957, %v319
    %v2965 = vmul.f32 %v2963, %v319
    %v2966 = vmul.f32 %v2948, %v2948
    %v2967 = vmul.f32 %v2949, %v2949
    %v2968 = vsub.f32 %v2964, %v2966
    %v2969 = vsub.f32 %v2965, %v2967
    %v2970 = vmax.f32 %v2968, 0.0
    %v2971 = vmax.f32 %v2969, 0.0
    %v2972 = vadd.f32 %v2970, 1e-05
    %v2973 = vadd.f32 %v2971, 1e-05
    %v2974 = vrsqrt.pop %v2972
    %v2975 = vrsqrt.pop %v2973
    %v2978 = vcombine.low %v2974, %v2975
    %v2979 = vrot.slane %v2978, 7
    %v2981 = vmul.f32 %v2711, %v2979
    %v2983 = vlaneseq
    %v2984 = vshrl.u32 %v2983, 7
    %v2985 = vsub.s32 1, %v2984
    %v2986 = vrot.slane %v2981, %v2985
    %v2987 = vlaneseq
    %v2988 = vshrl.u32 %v2987, 7
    %v2989 = vsub.s32 5, %v2988
    %v2990 = vrot.slane %v2981, %v2989
    %v2993 = vmul.f32 %v2948, %v2986
    %v2994 = vmul.f32 %v2949, %v2990
    %v2997 = vcombine.low %v2993, %v2994
    %v2998 = vrot.slane %v2997, 6
    %v3000 = vsub.f32 %v2711, %v2998
    %v3001 = vlaneseq
    %v3002 = vshrl.u32 %v3001, 7
    %v3003 = vsub.s32 1, %v3002
    %v3004 = vrot.slane %v2986, %v3003
    %v3005 = vlaneseq
    %v3006 = vshrl.u32 %v3005, 7
    %v3007 = vsub.s32 1, %v3006
    %v3008 = vrot.slane %v2990, %v3007
    %v3009 = vmul.f32 %v2934, %v3004
    %v3010 = vmul.f32 %v2935, %v3008
    %v3012 = vlaneseq
    %v3013 = vshrl.u32 %v3012, 7
    %v3014 = vsub.s32 2, %v3013
    %v3015 = vrot.slane %v3000, %v3014
    %v3016 = vlaneseq
    %v3017 = vshrl.u32 %v3016, 7
    %v3018 = vsub.s32 6, %v3017
    %v3019 = vrot.slane %v3000, %v3018
    %v3022 = vlaneseq
    %v3023 = vshrl.u32 %v3022, 7
    %v3024 = vsub.s32 2, %v3023
    %v3025 = vrot.slane %v3015, %v3024
    %v3026 = vlaneseq
    %v3027 = vshrl.u32 %v3026, 7
    %v3028 = vsub.s32 2, %v3027
    %v3029 = vrot.slane %v3019, %v3028
    %v3030 = vadd.f32 %v3009, %v3025
    %v3031 = vadd.f32 %v3010, %v3029
    %s3032 = scalar_lea.vmem [#allocation2], 1792
    %v3033 = vld [vmem:[%s3032] sm:$0xff]
    %v3034 = vld [vmem:[%s3032 + $0x8] sm:$0xff]
    %v3035 = vld [vmem:[%s3032 + $0x10] sm:$0xff]
    %v3036 = vld [vmem:[%s3032 + $0x18] sm:$0xff]
    %v3037 = vld [vmem:[%s3032 + $0x20] sm:$0xff]
    %v3038 = vld [vmem:[%s3032 + $0x28] sm:$0xff]
    %v3039 = vld [vmem:[%s3032 + $0x30] sm:$0xff]
    %v3040 = vld [vmem:[%s3032 + $0x38] sm:$0xff]
    %v3041 = vld [vmem:[%s3032 + $0x40] sm:$0xff]
    %v3042 = vld [vmem:[%s3032 + $0x48] sm:$0xff]
    %v3043 = vld [vmem:[%s3032 + $0x50] sm:$0xff]
    %v3044 = vld [vmem:[%s3032 + $0x58] sm:$0xff]
    %v3045 = vld [vmem:[%s3032 + $0x60] sm:$0xff]
    %v3046 = vld [vmem:[%s3032 + $0x68] sm:$0xff]
    %v3047 = vld [vmem:[%s3032 + $0x70] sm:$0xff]
    %v3048 = vld [vmem:[%s3032 + $0x78] sm:$0xff]
    %v3049 = vld [vmem:[%s3032 + $0x80] sm:$0xff]
    %v3050 = vld [vmem:[%s3032 + $0x88] sm:$0xff]
    %v3051 = vld [vmem:[%s3032 + $0x90] sm:$0xff]
    %v3052 = vld [vmem:[%s3032 + $0x98] sm:$0xff]
    %v3053 = vld [vmem:[%s3032 + $0xa0] sm:$0xff]
    %v3054 = vld [vmem:[%s3032 + $0xa8] sm:$0xff]
    %v3055 = vld [vmem:[%s3032 + $0xb0] sm:$0xff]
    %v3056 = vld [vmem:[%s3032 + $0xb8] sm:$0xff]
    %v3057 = vld [vmem:[%s3032 + $0xc0] sm:$0xff]
    %v3058 = vld [vmem:[%s3032 + $0xc8] sm:$0xff]
    %v3059 = vld [vmem:[%s3032 + $0xd0] sm:$0xff]
    %v3060 = vld [vmem:[%s3032 + $0xd8] sm:$0xff]
    %v3061 = vld [vmem:[%s3032 + $0xe0] sm:$0xff]
    %v3062 = vld [vmem:[%s3032 + $0xe8] sm:$0xff]
    %v3063 = vld [vmem:[%s3032 + $0xf0] sm:$0xff]
    %v3064 = vld [vmem:[%s3032 + $0xf8] sm:$0xff]
    %s3065 = scalar_lea.vmem [#allocation4], 56
    %v3066 = vld [vmem:[%s3065] sm:$0x77]
    %v3067 = vpack.c.bf16 %v3030, %v3030
    %v3068 = vpack.c.bf16 %v3031, %v3031
    %v3070 = vlaneseq
    %v3071 = vshrl.u32 %v3070, 7
    %v3072 = vsub.s32 0, %v3071
    %v3073 = vrot.slane %v3066, %v3072
    %v3074 = vlaneseq
    %v3075 = vshrl.u32 %v3074, 7
    %v3076 = vsub.s32 4, %v3075
    %v3077 = vrot.slane %v3066, %v3076
    %v3080 = vlaneseq
    %v3081 = vshrl.u32 %v3080, 7
    %v3082 = vsub.s32 0, %v3081
    %v3083 = vrot.slane %v3073, %v3082
    %v3084 = vlaneseq
    %v3085 = vshrl.u32 %v3084, 7
    %v3086 = vsub.s32 0, %v3085
    %v3087 = vrot.slane %v3077, %v3086
    %v3120 = vunpack.c.l.b16 %v3033
    %v3121 = vunpack.c.h.b16 %v3033
    %v3122 = vunpack.c.l.b16 %v3034
    %v3123 = vunpack.c.h.b16 %v3034
    %v3124 = vunpack.c.l.b16 %v3035
    %v3125 = vunpack.c.h.b16 %v3035
    %v3126 = vunpack.c.l.b16 %v3036
    %v3127 = vunpack.c.h.b16 %v3036
    %v3128 = vunpack.c.l.b16 %v3037
    %v3129 = vunpack.c.h.b16 %v3037
    %v3130 = vunpack.c.l.b16 %v3038
    %v3131 = vunpack.c.h.b16 %v3038
    %v3132 = vunpack.c.l.b16 %v3039
    %v3133 = vunpack.c.h.b16 %v3039
    %v3134 = vunpack.c.l.b16 %v3040
    %v3135 = vunpack.c.h.b16 %v3040
    %v3136 = vunpack.c.l.b16 %v3041
    %v3137 = vunpack.c.h.b16 %v3041
    %v3138 = vunpack.c.l.b16 %v3042
    %v3139 = vunpack.c.h.b16 %v3042
    %v3140 = vunpack.c.l.b16 %v3043
    %v3141 = vunpack.c.h.b16 %v3043
    %v3142 = vunpack.c.l.b16 %v3044
    %v3143 = vunpack.c.h.b16 %v3044
    %v3144 = vunpack.c.l.b16 %v3045
    %v3145 = vunpack.c.h.b16 %v3045
    %v3146 = vunpack.c.l.b16 %v3046
    %v3147 = vunpack.c.h.b16 %v3046
    %v3148 = vunpack.c.l.b16 %v3047
    %v3149 = vunpack.c.h.b16 %v3047
    %v3150 = vunpack.c.l.b16 %v3048
    %v3151 = vunpack.c.h.b16 %v3048
    %v3152 = vunpack.c.l.b16 %v3049
    %v3153 = vunpack.c.h.b16 %v3049
    %v3154 = vunpack.c.l.b16 %v3050
    %v3155 = vunpack.c.h.b16 %v3050
    %v3156 = vunpack.c.l.b16 %v3051
    %v3157 = vunpack.c.h.b16 %v3051
    %v3158 = vunpack.c.l.b16 %v3052
    %v3159 = vunpack.c.h.b16 %v3052
    %v3160 = vunpack.c.l.b16 %v3053
    %v3161 = vunpack.c.h.b16 %v3053
    %v3162 = vunpack.c.l.b16 %v3054
    %v3163 = vunpack.c.h.b16 %v3054
    %v3164 = vunpack.c.l.b16 %v3055
    %v3165 = vunpack.c.h.b16 %v3055
    %v3166 = vunpack.c.l.b16 %v3056
    %v3167 = vunpack.c.h.b16 %v3056
    %v3168 = vunpack.c.l.b16 %v3057
    %v3169 = vunpack.c.h.b16 %v3057
    %v3170 = vunpack.c.l.b16 %v3058
    %v3171 = vunpack.c.h.b16 %v3058
    %v3172 = vunpack.c.l.b16 %v3059
    %v3173 = vunpack.c.h.b16 %v3059
    %v3174 = vunpack.c.l.b16 %v3060
    %v3175 = vunpack.c.h.b16 %v3060
    %v3176 = vunpack.c.l.b16 %v3061
    %v3177 = vunpack.c.h.b16 %v3061
    %v3178 = vunpack.c.l.b16 %v3062
    %v3179 = vunpack.c.h.b16 %v3062
    %v3180 = vunpack.c.l.b16 %v3063
    %v3181 = vunpack.c.h.b16 %v3063
    %v3182 = vunpack.c.l.b16 %v3064
    %v3183 = vunpack.c.h.b16 %v3064
    %v3184 = vpack.c.b16 %v3122, %v3120
    %v3185 = vpack.c.b16 %v3123, %v3121
    %v3186 = vpack.c.b16 %v3126, %v3124
    %v3187 = vpack.c.b16 %v3127, %v3125
    %v3188 = vpack.c.b16 %v3130, %v3128
    %v3189 = vpack.c.b16 %v3131, %v3129
    %v3190 = vpack.c.b16 %v3134, %v3132
    %v3191 = vpack.c.b16 %v3135, %v3133
    %v3192 = vpack.c.b16 %v3138, %v3136
    %v3193 = vpack.c.b16 %v3139, %v3137
    %v3194 = vpack.c.b16 %v3142, %v3140
    %v3195 = vpack.c.b16 %v3143, %v3141
    %v3196 = vpack.c.b16 %v3146, %v3144
    %v3197 = vpack.c.b16 %v3147, %v3145
    %v3198 = vpack.c.b16 %v3150, %v3148
    %v3199 = vpack.c.b16 %v3151, %v3149
    %v3200 = vpack.c.b16 %v3154, %v3152
    %v3201 = vpack.c.b16 %v3155, %v3153
    %v3202 = vpack.c.b16 %v3158, %v3156
    %v3203 = vpack.c.b16 %v3159, %v3157
    %v3204 = vpack.c.b16 %v3162, %v3160
    %v3205 = vpack.c.b16 %v3163, %v3161
    %v3206 = vpack.c.b16 %v3166, %v3164
    %v3207 = vpack.c.b16 %v3167, %v3165
    %v3208 = vpack.c.b16 %v3170, %v3168
    %v3209 = vpack.c.b16 %v3171, %v3169
    %v3210 = vpack.c.b16 %v3174, %v3172
    %v3211 = vpack.c.b16 %v3175, %v3173
    %v3212 = vpack.c.b16 %v3178, %v3176
    %v3213 = vpack.c.b16 %v3179, %v3177
    %v3214 = vpack.c.b16 %v3182, %v3180
    %v3215 = vpack.c.b16 %v3183, %v3181
    %3248 = vmatprep.subr.bf16.mxu0 %v3185
    %3249 = vmatpush1.bf16.msra.mxu0 %v3184
    %3250 = vmatprep.subr.bf16.mxu0 %v3187
    %3251 = vmatpush1.bf16.msra.mxu0 %v3186
    %3252 = vmatprep.subr.bf16.mxu0 %v3189
    %3253 = vmatpush1.bf16.msra.mxu0 %v3188
    %3254 = vmatprep.subr.bf16.mxu0 %v3191
    %3255 = vmatpush1.bf16.msra.mxu0 %v3190
    %3256 = vmatprep.subr.bf16.mxu0 %v3193
    %3257 = vmatpush1.bf16.msra.mxu0 %v3192
    %3258 = vmatprep.subr.bf16.mxu0 %v3195
    %3259 = vmatpush1.bf16.msra.mxu0 %v3194
    %3260 = vmatprep.subr.bf16.mxu0 %v3197
    %3261 = vmatpush1.bf16.msra.mxu0 %v3196
    %3262 = vmatprep.subr.bf16.mxu0 %v3199
    %3263 = vmatpush1.bf16.msra.mxu0 %v3198
    %3264 = vmatprep.subr.bf16.mxu0 %v3201
    %3265 = vmatpush1.bf16.msra.mxu0 %v3200
    %3266 = vmatprep.subr.bf16.mxu0 %v3203
    %3267 = vmatpush1.bf16.msra.mxu0 %v3202
    %3268 = vmatprep.subr.bf16.mxu0 %v3205
    %3269 = vmatpush1.bf16.msra.mxu0 %v3204
    %3270 = vmatprep.subr.bf16.mxu0 %v3207
    %3271 = vmatpush1.bf16.msra.mxu0 %v3206
    %3272 = vmatprep.subr.bf16.mxu0 %v3209
    %3273 = vmatpush1.bf16.msra.mxu0 %v3208
    %3274 = vmatprep.subr.bf16.mxu0 %v3211
    %3275 = vmatpush1.bf16.msra.mxu0 %v3210
    %3276 = vmatprep.subr.bf16.mxu0 %v3213
    %3277 = vmatpush1.bf16.msra.mxu0 %v3212
    %3278 = vmatprep.subr.bf16.mxu0 %v3215
    %3279 = vmatpush1.bf16.msra.mxu0 %v3214
    %3280 = vmatprep.mubr.bf16.mxu0 %v3068
    %3281 = vmatmul.mubr.bf16.gmra.mrb[0].mxu0 %v3067
    %v3282 = vpop.f32.mrb[0].mxu0
    %v3283 = vadd.f32 %v3083, %v3282
    %v3284 = vpop.f32.mrb[0].mxu0
    %v3285 = vadd.f32 %v3087, %v3284
    %v3286 = vpop.f32.mrb[0].mxu0
    %v3287 = vpop.f32.mrb[0].mxu0
    %3288 = vdwg.mxu0
    %v3289 = vmax.f32 %v3283, 0.0
    %v3290 = vmax.f32 %v3285, 0.0
    %v3291 = vrot.slane %v3289, 4
    %v3292 = vadd.f32 %v3289, %v3291
    %v3293 = vrot.slane %v3292, 2
    %v3294 = vadd.f32 %v3292, %v3293
    %v3295 = vrot.slane %v3294, 1
    %v3296 = vadd.f32 %v3294, %v3295
    %v3297 = vrot.slane %v3290, 4
    %v3298 = vadd.f32 %v3290, %v3297
    %v3299 = vrot.slane %v3298, 2
    %v3300 = vadd.f32 %v3298, %v3299
    %v3301 = vrot.slane %v3300, 1
    %v3302 = vadd.f32 %v3300, %v3301
    %v3303 = vmul.f32 %v3296, %v319
    %v3304 = vmul.f32 %v3302, %v319
    %v3305 = vmul.f32 %v3289, %v3289
    %v3306 = vmul.f32 %v3290, %v3290
    %v3307 = vrot.slane %v3305, 4
    %v3308 = vadd.f32 %v3305, %v3307
    %v3309 = vrot.slane %v3308, 2
    %v3310 = vadd.f32 %v3308, %v3309
    %v3311 = vrot.slane %v3310, 1
    %v3312 = vadd.f32 %v3310, %v3311
    %v3313 = vrot.slane %v3306, 4
    %v3314 = vadd.f32 %v3306, %v3313
    %v3315 = vrot.slane %v3314, 2
    %v3316 = vadd.f32 %v3314, %v3315
    %v3317 = vrot.slane %v3316, 1
    %v3318 = vadd.f32 %v3316, %v3317
    %v3319 = vmul.f32 %v3312, %v319
    %v3320 = vmul.f32 %v3318, %v319
    %v3321 = vmul.f32 %v3303, %v3303
    %v3322 = vmul.f32 %v3304, %v3304
    %v3323 = vsub.f32 %v3319, %v3321
    %v3324 = vsub.f32 %v3320, %v3322
    %v3325 = vmax.f32 %v3323, 0.0
    %v3326 = vmax.f32 %v3324, 0.0
    %v3327 = vadd.f32 %v3325, 1e-05
    %v3328 = vadd.f32 %v3326, 1e-05
    %v3329 = vrsqrt.pop %v3327
    %v3330 = vrsqrt.pop %v3328
    %v3333 = vcombine.low %v3329, %v3330
    %v3334 = vrot.slane %v3333, 7
    %v3336 = vmul.f32 %v3066, %v3334
    %v3338 = vlaneseq
    %v3339 = vshrl.u32 %v3338, 7
    %v3340 = vsub.s32 1, %v3339
    %v3341 = vrot.slane %v3336, %v3340
    %v3342 = vlaneseq
    %v3343 = vshrl.u32 %v3342, 7
    %v3344 = vsub.s32 5, %v3343
    %v3345 = vrot.slane %v3336, %v3344
    %v3348 = vmul.f32 %v3303, %v3341
    %v3349 = vmul.f32 %v3304, %v3345
    %v3352 = vcombine.low %v3348, %v3349
    %v3353 = vrot.slane %v3352, 6
    %v3355 = vsub.f32 %v3066, %v3353
    %v3356 = vlaneseq
    %v3357 = vshrl.u32 %v3356, 7
    %v3358 = vsub.s32 1, %v3357
    %v3359 = vrot.slane %v3341, %v3358
    %v3360 = vlaneseq
    %v3361 = vshrl.u32 %v3360, 7
    %v3362 = vsub.s32 1, %v3361
    %v3363 = vrot.slane %v3345, %v3362
    %v3364 = vmul.f32 %v3289, %v3359
    %v3365 = vmul.f32 %v3290, %v3363
    %v3367 = vlaneseq
    %v3368 = vshrl.u32 %v3367, 7
    %v3369 = vsub.s32 2, %v3368
    %v3370 = vrot.slane %v3355, %v3369
    %v3371 = vlaneseq
    %v3372 = vshrl.u32 %v3371, 7
    %v3373 = vsub.s32 6, %v3372
    %v3374 = vrot.slane %v3355, %v3373
    %v3377 = vlaneseq
    %v3378 = vshrl.u32 %v3377, 7
    %v3379 = vsub.s32 2, %v3378
    %v3380 = vrot.slane %v3370, %v3379
    %v3381 = vlaneseq
    %v3382 = vshrl.u32 %v3381, 7
    %v3383 = vsub.s32 2, %v3382
    %v3384 = vrot.slane %v3374, %v3383
    %v3385 = vadd.f32 %v3364, %v3380
    %v3386 = vadd.f32 %v3365, %v3384
    %s3387 = scalar_lea.vmem [#allocation2], 2048
    %v3388 = vld [vmem:[%s3387] sm:$0xff]
    %v3389 = vld [vmem:[%s3387 + $0x8] sm:$0xff]
    %v3390 = vld [vmem:[%s3387 + $0x10] sm:$0xff]
    %v3391 = vld [vmem:[%s3387 + $0x18] sm:$0xff]
    %v3392 = vld [vmem:[%s3387 + $0x20] sm:$0xff]
    %v3393 = vld [vmem:[%s3387 + $0x28] sm:$0xff]
    %v3394 = vld [vmem:[%s3387 + $0x30] sm:$0xff]
    %v3395 = vld [vmem:[%s3387 + $0x38] sm:$0xff]
    %v3396 = vld [vmem:[%s3387 + $0x40] sm:$0xff]
    %v3397 = vld [vmem:[%s3387 + $0x48] sm:$0xff]
    %v3398 = vld [vmem:[%s3387 + $0x50] sm:$0xff]
    %v3399 = vld [vmem:[%s3387 + $0x58] sm:$0xff]
    %v3400 = vld [vmem:[%s3387 + $0x60] sm:$0xff]
    %v3401 = vld [vmem:[%s3387 + $0x68] sm:$0xff]
    %v3402 = vld [vmem:[%s3387 + $0x70] sm:$0xff]
    %v3403 = vld [vmem:[%s3387 + $0x78] sm:$0xff]
    %v3404 = vld [vmem:[%s3387 + $0x80] sm:$0xff]
    %v3405 = vld [vmem:[%s3387 + $0x88] sm:$0xff]
    %v3406 = vld [vmem:[%s3387 + $0x90] sm:$0xff]
    %v3407 = vld [vmem:[%s3387 + $0x98] sm:$0xff]
    %v3408 = vld [vmem:[%s3387 + $0xa0] sm:$0xff]
    %v3409 = vld [vmem:[%s3387 + $0xa8] sm:$0xff]
    %v3410 = vld [vmem:[%s3387 + $0xb0] sm:$0xff]
    %v3411 = vld [vmem:[%s3387 + $0xb8] sm:$0xff]
    %v3412 = vld [vmem:[%s3387 + $0xc0] sm:$0xff]
    %v3413 = vld [vmem:[%s3387 + $0xc8] sm:$0xff]
    %v3414 = vld [vmem:[%s3387 + $0xd0] sm:$0xff]
    %v3415 = vld [vmem:[%s3387 + $0xd8] sm:$0xff]
    %v3416 = vld [vmem:[%s3387 + $0xe0] sm:$0xff]
    %v3417 = vld [vmem:[%s3387 + $0xe8] sm:$0xff]
    %v3418 = vld [vmem:[%s3387 + $0xf0] sm:$0xff]
    %v3419 = vld [vmem:[%s3387 + $0xf8] sm:$0xff]
    %s3420 = scalar_lea.vmem [#allocation4], 64
    %v3421 = vld [vmem:[%s3420] sm:$0x77]
    %v3422 = vpack.c.bf16 %v3385, %v3385
    %v3423 = vpack.c.bf16 %v3386, %v3386
    %v3425 = vlaneseq
    %v3426 = vshrl.u32 %v3425, 7
    %v3427 = vsub.s32 0, %v3426
    %v3428 = vrot.slane %v3421, %v3427
    %v3429 = vlaneseq
    %v3430 = vshrl.u32 %v3429, 7
    %v3431 = vsub.s32 4, %v3430
    %v3432 = vrot.slane %v3421, %v3431
    %v3435 = vlaneseq
    %v3436 = vshrl.u32 %v3435, 7
    %v3437 = vsub.s32 0, %v3436
    %v3438 = vrot.slane %v3428, %v3437
    %v3439 = vlaneseq
    %v3440 = vshrl.u32 %v3439, 7
    %v3441 = vsub.s32 0, %v3440
    %v3442 = vrot.slane %v3432, %v3441
    %v3475 = vunpack.c.l.b16 %v3388
    %v3476 = vunpack.c.h.b16 %v3388
    %v3477 = vunpack.c.l.b16 %v3389
    %v3478 = vunpack.c.h.b16 %v3389
    %v3479 = vunpack.c.l.b16 %v3390
    %v3480 = vunpack.c.h.b16 %v3390
    %v3481 = vunpack.c.l.b16 %v3391
    %v3482 = vunpack.c.h.b16 %v3391
    %v3483 = vunpack.c.l.b16 %v3392
    %v3484 = vunpack.c.h.b16 %v3392
    %v3485 = vunpack.c.l.b16 %v3393
    %v3486 = vunpack.c.h.b16 %v3393
    %v3487 = vunpack.c.l.b16 %v3394
    %v3488 = vunpack.c.h.b16 %v3394
    %v3489 = vunpack.c.l.b16 %v3395
    %v3490 = vunpack.c.h.b16 %v3395
    %v3491 = vunpack.c.l.b16 %v3396
    %v3492 = vunpack.c.h.b16 %v3396
    %v3493 = vunpack.c.l.b16 %v3397
    %v3494 = vunpack.c.h.b16 %v3397
    %v3495 = vunpack.c.l.b16 %v3398
    %v3496 = vunpack.c.h.b16 %v3398
    %v3497 = vunpack.c.l.b16 %v3399
    %v3498 = vunpack.c.h.b16 %v3399
    %v3499 = vunpack.c.l.b16 %v3400
    %v3500 = vunpack.c.h.b16 %v3400
    %v3501 = vunpack.c.l.b16 %v3401
    %v3502 = vunpack.c.h.b16 %v3401
    %v3503 = vunpack.c.l.b16 %v3402
    %v3504 = vunpack.c.h.b16 %v3402
    %v3505 = vunpack.c.l.b16 %v3403
    %v3506 = vunpack.c.h.b16 %v3403
    %v3507 = vunpack.c.l.b16 %v3404
    %v3508 = vunpack.c.h.b16 %v3404
    %v3509 = vunpack.c.l.b16 %v3405
    %v3510 = vunpack.c.h.b16 %v3405
    %v3511 = vunpack.c.l.b16 %v3406
    %v3512 = vunpack.c.h.b16 %v3406
    %v3513 = vunpack.c.l.b16 %v3407
    %v3514 = vunpack.c.h.b16 %v3407
    %v3515 = vunpack.c.l.b16 %v3408
    %v3516 = vunpack.c.h.b16 %v3408
    %v3517 = vunpack.c.l.b16 %v3409
    %v3518 = vunpack.c.h.b16 %v3409
    %v3519 = vunpack.c.l.b16 %v3410
    %v3520 = vunpack.c.h.b16 %v3410
    %v3521 = vunpack.c.l.b16 %v3411
    %v3522 = vunpack.c.h.b16 %v3411
    %v3523 = vunpack.c.l.b16 %v3412
    %v3524 = vunpack.c.h.b16 %v3412
    %v3525 = vunpack.c.l.b16 %v3413
    %v3526 = vunpack.c.h.b16 %v3413
    %v3527 = vunpack.c.l.b16 %v3414
    %v3528 = vunpack.c.h.b16 %v3414
    %v3529 = vunpack.c.l.b16 %v3415
    %v3530 = vunpack.c.h.b16 %v3415
    %v3531 = vunpack.c.l.b16 %v3416
    %v3532 = vunpack.c.h.b16 %v3416
    %v3533 = vunpack.c.l.b16 %v3417
    %v3534 = vunpack.c.h.b16 %v3417
    %v3535 = vunpack.c.l.b16 %v3418
    %v3536 = vunpack.c.h.b16 %v3418
    %v3537 = vunpack.c.l.b16 %v3419
    %v3538 = vunpack.c.h.b16 %v3419
    %v3539 = vpack.c.b16 %v3477, %v3475
    %v3540 = vpack.c.b16 %v3478, %v3476
    %v3541 = vpack.c.b16 %v3481, %v3479
    %v3542 = vpack.c.b16 %v3482, %v3480
    %v3543 = vpack.c.b16 %v3485, %v3483
    %v3544 = vpack.c.b16 %v3486, %v3484
    %v3545 = vpack.c.b16 %v3489, %v3487
    %v3546 = vpack.c.b16 %v3490, %v3488
    %v3547 = vpack.c.b16 %v3493, %v3491
    %v3548 = vpack.c.b16 %v3494, %v3492
    %v3549 = vpack.c.b16 %v3497, %v3495
    %v3550 = vpack.c.b16 %v3498, %v3496
    %v3551 = vpack.c.b16 %v3501, %v3499
    %v3552 = vpack.c.b16 %v3502, %v3500
    %v3553 = vpack.c.b16 %v3505, %v3503
    %v3554 = vpack.c.b16 %v3506, %v3504
    %v3555 = vpack.c.b16 %v3509, %v3507
    %v3556 = vpack.c.b16 %v3510, %v3508
    %v3557 = vpack.c.b16 %v3513, %v3511
    %v3558 = vpack.c.b16 %v3514, %v3512
    %v3559 = vpack.c.b16 %v3517, %v3515
    %v3560 = vpack.c.b16 %v3518, %v3516
    %v3561 = vpack.c.b16 %v3521, %v3519
    %v3562 = vpack.c.b16 %v3522, %v3520
    %v3563 = vpack.c.b16 %v3525, %v3523
    %v3564 = vpack.c.b16 %v3526, %v3524
    %v3565 = vpack.c.b16 %v3529, %v3527
    %v3566 = vpack.c.b16 %v3530, %v3528
    %v3567 = vpack.c.b16 %v3533, %v3531
    %v3568 = vpack.c.b16 %v3534, %v3532
    %v3569 = vpack.c.b16 %v3537, %v3535
    %v3570 = vpack.c.b16 %v3538, %v3536
    %3603 = vmatprep.subr.bf16.mxu0 %v3540
    %3604 = vmatpush1.bf16.msra.mxu0 %v3539
    %3605 = vmatprep.subr.bf16.mxu0 %v3542
    %3606 = vmatpush1.bf16.msra.mxu0 %v3541
    %3607 = vmatprep.subr.bf16.mxu0 %v3544
    %3608 = vmatpush1.bf16.msra.mxu0 %v3543
    %3609 = vmatprep.subr.bf16.mxu0 %v3546
    %3610 = vmatpush1.bf16.msra.mxu0 %v3545
    %3611 = vmatprep.subr.bf16.mxu0 %v3548
    %3612 = vmatpush1.bf16.msra.mxu0 %v3547
    %3613 = vmatprep.subr.bf16.mxu0 %v3550
    %3614 = vmatpush1.bf16.msra.mxu0 %v3549
    %3615 = vmatprep.subr.bf16.mxu0 %v3552
    %3616 = vmatpush1.bf16.msra.mxu0 %v3551
    %3617 = vmatprep.subr.bf16.mxu0 %v3554
    %3618 = vmatpush1.bf16.msra.mxu0 %v3553
    %3619 = vmatprep.subr.bf16.mxu0 %v3556
    %3620 = vmatpush1.bf16.msra.mxu0 %v3555
    %3621 = vmatprep.subr.bf16.mxu0 %v3558
    %3622 = vmatpush1.bf16.msra.mxu0 %v3557
    %3623 = vmatprep.subr.bf16.mxu0 %v3560
    %3624 = vmatpush1.bf16.msra.mxu0 %v3559
    %3625 = vmatprep.subr.bf16.mxu0 %v3562
    %3626 = vmatpush1.bf16.msra.mxu0 %v3561
    %3627 = vmatprep.subr.bf16.mxu0 %v3564
    %3628 = vmatpush1.bf16.msra.mxu0 %v3563
    %3629 = vmatprep.subr.bf16.mxu0 %v3566
    %3630 = vmatpush1.bf16.msra.mxu0 %v3565
    %3631 = vmatprep.subr.bf16.mxu0 %v3568
    %3632 = vmatpush1.bf16.msra.mxu0 %v3567
    %3633 = vmatprep.subr.bf16.mxu0 %v3570
    %3634 = vmatpush1.bf16.msra.mxu0 %v3569
    %3635 = vmatprep.mubr.bf16.mxu0 %v3423
    %3636 = vmatmul.mubr.bf16.gmra.mrb[0].mxu0 %v3422
    %v3637 = vpop.f32.mrb[0].mxu0
    %v3638 = vadd.f32 %v3438, %v3637
    %v3639 = vpop.f32.mrb[0].mxu0
    %v3640 = vadd.f32 %v3442, %v3639
    %v3641 = vpop.f32.mrb[0].mxu0
    %v3642 = vpop.f32.mrb[0].mxu0
    %3643 = vdwg.mxu0
    %v3644 = vmax.f32 %v3638, 0.0
    %v3645 = vmax.f32 %v3640, 0.0
    %v3646 = vrot.slane %v3644, 4
    %v3647 = vadd.f32 %v3644, %v3646
    %v3648 = vrot.slane %v3647, 2
    %v3649 = vadd.f32 %v3647, %v3648
    %v3650 = vrot.slane %v3649, 1
    %v3651 = vadd.f32 %v3649, %v3650
    %v3652 = vrot.slane %v3645, 4
    %v3653 = vadd.f32 %v3645, %v3652
    %v3654 = vrot.slane %v3653, 2
    %v3655 = vadd.f32 %v3653, %v3654
    %v3656 = vrot.slane %v3655, 1
    %v3657 = vadd.f32 %v3655, %v3656
    %v3658 = vmul.f32 %v3651, %v319
    %v3659 = vmul.f32 %v3657, %v319
    %v3660 = vmul.f32 %v3644, %v3644
    %v3661 = vmul.f32 %v3645, %v3645
    %v3662 = vrot.slane %v3660, 4
    %v3663 = vadd.f32 %v3660, %v3662
    %v3664 = vrot.slane %v3663, 2
    %v3665 = vadd.f32 %v3663, %v3664
    %v3666 = vrot.slane %v3665, 1
    %v3667 = vadd.f32 %v3665, %v3666
    %v3668 = vrot.slane %v3661, 4
    %v3669 = vadd.f32 %v3661, %v3668
    %v3670 = vrot.slane %v3669, 2
    %v3671 = vadd.f32 %v3669, %v3670
    %v3672 = vrot.slane %v3671, 1
    %v3673 = vadd.f32 %v3671, %v3672
    %v3674 = vmul.f32 %v3667, %v319
    %v3675 = vmul.f32 %v3673, %v319
    %v3676 = vmul.f32 %v3658, %v3658
    %v3677 = vmul.f32 %v3659, %v3659
    %v3678 = vsub.f32 %v3674, %v3676
    %v3679 = vsub.f32 %v3675, %v3677
    %v3680 = vmax.f32 %v3678, 0.0
    %v3681 = vmax.f32 %v3679, 0.0
    %v3682 = vadd.f32 %v3680, 1e-05
    %v3683 = vadd.f32 %v3681, 1e-05
    %v3684 = vrsqrt.pop %v3682
    %v3685 = vrsqrt.pop %v3683
    %v3688 = vcombine.low %v3684, %v3685
    %v3689 = vrot.slane %v3688, 7
    %v3691 = vmul.f32 %v3421, %v3689
    %v3693 = vlaneseq
    %v3694 = vshrl.u32 %v3693, 7
    %v3695 = vsub.s32 1, %v3694
    %v3696 = vrot.slane %v3691, %v3695
    %v3697 = vlaneseq
    %v3698 = vshrl.u32 %v3697, 7
    %v3699 = vsub.s32 5, %v3698
    %v3700 = vrot.slane %v3691, %v3699
    %v3703 = vmul.f32 %v3658, %v3696
    %v3704 = vmul.f32 %v3659, %v3700
    %v3707 = vcombine.low %v3703, %v3704
    %v3708 = vrot.slane %v3707, 6
    %v3710 = vsub.f32 %v3421, %v3708
    %v3711 = vlaneseq
    %v3712 = vshrl.u32 %v3711, 7
    %v3713 = vsub.s32 1, %v3712
    %v3714 = vrot.slane %v3696, %v3713
    %v3715 = vlaneseq
    %v3716 = vshrl.u32 %v3715, 7
    %v3717 = vsub.s32 1, %v3716
    %v3718 = vrot.slane %v3700, %v3717
    %v3719 = vmul.f32 %v3644, %v3714
    %v3720 = vmul.f32 %v3645, %v3718
    %v3722 = vlaneseq
    %v3723 = vshrl.u32 %v3722, 7
    %v3724 = vsub.s32 2, %v3723
    %v3725 = vrot.slane %v3710, %v3724
    %v3726 = vlaneseq
    %v3727 = vshrl.u32 %v3726, 7
    %v3728 = vsub.s32 6, %v3727
    %v3729 = vrot.slane %v3710, %v3728
    %v3732 = vlaneseq
    %v3733 = vshrl.u32 %v3732, 7
    %v3734 = vsub.s32 2, %v3733
    %v3735 = vrot.slane %v3725, %v3734
    %v3736 = vlaneseq
    %v3737 = vshrl.u32 %v3736, 7
    %v3738 = vsub.s32 2, %v3737
    %v3739 = vrot.slane %v3729, %v3738
    %v3740 = vadd.f32 %v3719, %v3735
    %v3741 = vadd.f32 %v3720, %v3739
    %3742 = vst [vmem:[%s3] sm:$0xff] %v3740
    %3743 = vst [vmem:[%s3 + $0x8] sm:$0xff] %v3741
    // Predicated region
    $region22: #{siamese_forward.1} parent=1 // pred_check
      _
    $region23: #{siamese_forward.1} parent=1 // pred_check_branch
      %3745 = sbr.rel (0) target = $region25
    $region24: #{siamese_forward.1} parent=1 // pred_region
      _
    $region25: #{siamese_forward.1} parent=1 // pred_fallthru
      _
    // Predicated region
    $region26: #{siamese_forward.1} parent=1 // pred_check
      _
    $region27: #{siamese_forward.1} parent=1 // pred_check_branch
      %3747 = sbr.rel (0) target = $region29
    $region28: #{siamese_forward.1} parent=1 // pred_region
      _
    $region29: #{siamese_forward.1} parent=1 // pred_fallthru
      _
    %3748 = vsyncpa [#allocation3], 1
    %3749 = vsyncpa [#allocation5], 1

</llo_original>
